<compile_context>
chip_gen: v7x
topology: tpu7x:2x2x1
jax: 0.10.0
libtpu: 0.0.40
codegen_flags: <defaults>
</compile_context>

<pallas_src>
import jax
import jax.numpy as jnp
from jax.experimental import pallas as pl
from jax.experimental.pallas import tpu as pltpu

_LANES = 128


def _critic_kernel(sa_ref,
                   w1_ref, b1_ref, w2_ref, b2_ref, w3p_ref,
                   w4_ref, b4_ref, w5_ref, b5_ref, w6p_ref, bq_ref,
                   o_ref):
    """One (TB, SA_pad) batch tile -> one (TB, 128) packed Q tile."""
    sa = sa_ref[...]

    # Q1 branch: relu(l1) -> relu(l2)
    h1 = jnp.dot(sa, w1_ref[...], preferred_element_type=jnp.float32) + b1_ref[...]
    h1 = jnp.maximum(h1, 0.0)
    h1 = jnp.dot(h1, w2_ref[...], preferred_element_type=jnp.float32) + b2_ref[...]
    h1 = jnp.maximum(h1, 0.0)

    # Q2 branch: relu(l4) -> relu(l5)
    h2 = jnp.dot(sa, w4_ref[...], preferred_element_type=jnp.float32) + b4_ref[...]
    h2 = jnp.maximum(h2, 0.0)
    h2 = jnp.dot(h2, w5_ref[...], preferred_element_type=jnp.float32) + b5_ref[...]
    h2 = jnp.maximum(h2, 0.0)

    # Packed lane-dense heads: w3p has l3's weight in column 0, w6p has l6's
    # weight in column 1 (all other columns zero), bq carries both biases.
    q = (jnp.dot(h1, w3p_ref[...], preferred_element_type=jnp.float32)
         + jnp.dot(h2, w6p_ref[...], preferred_element_type=jnp.float32)
         + bq_ref[...])
    o_ref[...] = q.astype(o_ref.dtype)


def _round_up(x, m):
    return (x + m - 1) // m * m


def mlp_critic_forward(state, action, params, block_b=512):
    """Fused Pallas forward for MLPCritic.

    state:  (B, state_dim) float32
    action: (B, action_dim) float32
    params: dict with w1 (SA,H), b1 (1,H), w2 (H,H), b2 (1,H), w3 (H,1), b3 (1,1),
            and the mirrored w4/b4/w5/b5/w6/b6 for the second Q head.
    Returns (q1, q2), each (B, 1) float32.
    """
    B = state.shape[0]
    sa = jnp.concatenate([state, action], axis=1).astype(jnp.float32)
    SA = sa.shape[1]
    H = params["w1"].shape[1]

    # Batch tile: >=512 rows when possible, multiple of 8, pad batch to fit.
    TB = min(block_b, _round_up(B, 8))
    B_pad = _round_up(B, TB)
    # Pad the tiny concat dim to a lane-aligned multiple of 128.
    SA_pad = _round_up(SA, _LANES)

    sa_p = jnp.zeros((B_pad, SA_pad), jnp.float32).at[:B, :SA].set(sa)

    # Zero-padded first-layer weights (extra rows multiply padded zeros -> exact).
    w1 = jnp.zeros((SA_pad, H), jnp.float32).at[:SA, :].set(params["w1"])
    w4 = jnp.zeros((SA_pad, H), jnp.float32).at[:SA, :].set(params["w4"])
    w2, b2 = params["w2"], params["b2"]
    w5, b5 = params["w5"], params["b5"]
    b1, b4 = params["b1"], params["b4"]

    # Pack the two scalar heads into lane-dense (H, 128) weights + (1, 128) bias.
    w3p = jnp.zeros((H, _LANES), jnp.float32).at[:, 0:1].set(params["w3"])
    w6p = jnp.zeros((H, _LANES), jnp.float32).at[:, 1:2].set(params["w6"])
    bq = (jnp.zeros((1, _LANES), jnp.float32)
          .at[0, 0].set(params["b3"][0, 0])
          .at[0, 1].set(params["b6"][0, 0]))

    def resident(arr):
        # Full-array block, same block index on every grid step -> stays in VMEM.
        return pl.BlockSpec(arr.shape, lambda i: (0,) * arr.ndim)

    out = pl.pallas_call(
        _critic_kernel,
        out_shape=jax.ShapeDtypeStruct((B_pad, _LANES), jnp.float32),
        grid=(B_pad // TB,),
        in_specs=[pl.BlockSpec((TB, SA_pad), lambda i: (i, 0)),
                  resident(w1), resident(b1), resident(w2), resident(b2),
                  resident(w3p),
                  resident(w4), resident(b4), resident(w5), resident(b5),
                  resident(w6p), resident(bq)],
        out_specs=pl.BlockSpec((TB, _LANES), lambda i: (i, 0)),
        compiler_params=pltpu.CompilerParams(
            dimension_semantics=("parallel",)),
    )(sa_p, w1, b1, w2, b2, w3p, w4, b4, w5, b5, w6p, bq)

    q1 = out[:B, 0:1]
    q2 = out[:B, 1:2]
    return q1, q2


def init_params(key, state_dim, action_dim, hidden_dim):
    """PyTorch-like nn.Linear init (uniform +-1/sqrt(fan_in)); weights stored
    as (in_features, out_features)."""
    sa_dim = state_dim + action_dim
    ks = jax.random.split(key, 12)

    def linear(kw, kb, fan_in, fan_out):
        bound = 1.0 / jnp.sqrt(float(fan_in))
        w = jax.random.uniform(kw, (fan_in, fan_out), jnp.float32, -bound, bound)
        b = jax.random.uniform(kb, (1, fan_out), jnp.float32, -bound, bound)
        return w, b

    w1, b1 = linear(ks[0], ks[1], sa_dim, hidden_dim)
    w2, b2 = linear(ks[2], ks[3], hidden_dim, hidden_dim)
    w3, b3 = linear(ks[4], ks[5], hidden_dim, 1)
    w4, b4 = linear(ks[6], ks[7], sa_dim, hidden_dim)
    w5, b5 = linear(ks[8], ks[9], hidden_dim, hidden_dim)
    w6, b6 = linear(ks[10], ks[11], hidden_dim, 1)
    return {"w1": w1, "b1": b1, "w2": w2, "b2": b2, "w3": w3, "b3": b3,
            "w4": w4, "b4": b4, "w5": w5, "b5": b5, "w6": w6, "b6": b6}


def reference_forward(state, action, params):
    sa = jnp.concatenate([state, action], axis=1)
    h1 = jnp.maximum(sa @ params["w1"] + params["b1"], 0.0)
    h1 = jnp.maximum(h1 @ params["w2"] + params["b2"], 0.0)
    q1 = h1 @ params["w3"] + params["b3"]
    h2 = jnp.maximum(sa @ params["w4"] + params["b4"], 0.0)
    h2 = jnp.maximum(h2 @ params["w5"] + params["b5"], 0.0)
    q2 = h2 @ params["w6"] + params["b6"]
    return q1, q2


# TODO(synk): auxiliary methods Q1 / forward_with_FAU / score_drop are host-side
# diagnostics built from the same linear layers; only forward() is kernelized.

if __name__ == "__main__":
    # Small-but-gridded shapes: batch=1024 (2 grid steps of 512 rows),
    # state_dim=24, action_dim=6, hidden_dim=256 (module default).
    B, S, A, H = 1024, 24, 6, 256

    key = jax.random.PRNGKey(0)
    k_params, k_state, k_action = jax.random.split(key, 3)
    params = init_params(k_params, S, A, H)
    state = jax.random.normal(k_state, (B, S), jnp.float32)
    action = jax.random.normal(k_action, (B, A), jnp.float32)

    q1, q2 = mlp_critic_forward(state, action, params)
    q1 = jax.block_until_ready(q1)
    q2 = jax.block_until_ready(q2)

    r1, r2 = reference_forward(state, action, params)
    assert q1.shape == (B, 1), q1.shape
    assert q2.shape == (B, 1), q2.shape
    assert jnp.allclose(q1, r1, atol=1e-4, rtol=1e-4), "q1 mismatch vs reference"
    assert jnp.allclose(q2, r2, atol=1e-4, rtol=1e-4), "q2 mismatch vs reference"

    print("KERNEL_OK")
</pallas_src>

<mosaic_0001>
module attributes {stable_mosaic.version = 11 : i64} {
  func.func @_critic_kernel(%arg0: i32, %arg1: memref<512x128xf32, #tpu.memory_space<vmem>>, %arg2: memref<128x256xf32, #tpu.memory_space<vmem>>, %arg3: memref<1x256xf32, #tpu.memory_space<vmem>>, %arg4: memref<256x256xf32, #tpu.memory_space<vmem>>, %arg5: memref<1x256xf32, #tpu.memory_space<vmem>>, %arg6: memref<256x128xf32, #tpu.memory_space<vmem>>, %arg7: memref<128x256xf32, #tpu.memory_space<vmem>>, %arg8: memref<1x256xf32, #tpu.memory_space<vmem>>, %arg9: memref<256x256xf32, #tpu.memory_space<vmem>>, %arg10: memref<1x256xf32, #tpu.memory_space<vmem>>, %arg11: memref<256x128xf32, #tpu.memory_space<vmem>>, %arg12: memref<1x128xf32, #tpu.memory_space<vmem>>, %arg13: memref<512x128xf32, #tpu.memory_space<vmem>>) attributes {dimension_semantics = [#tpu.dimension_semantics<parallel>], iteration_bounds = array<i64: 2>, scalar_prefetch = 0 : i64, scratch_operands = 0 : i64, tpu.core_type = #tpu.core_type<tc>, window_params = [{transform_indices = @transform_0, window_bounds = array<i64: 512, 128>}, {pipeline_mode = #tpu.pipeline_mode<synchronous>, transform_indices = @transform_1, window_bounds = array<i64: 128, 256>}, {pipeline_mode = #tpu.pipeline_mode<synchronous>, transform_indices = @transform_2, window_bounds = array<i64: 1, 256>}, {pipeline_mode = #tpu.pipeline_mode<synchronous>, transform_indices = @transform_3, window_bounds = array<i64: 256, 256>}, {pipeline_mode = #tpu.pipeline_mode<synchronous>, transform_indices = @transform_4, window_bounds = array<i64: 1, 256>}, {pipeline_mode = #tpu.pipeline_mode<synchronous>, transform_indices = @transform_5, window_bounds = array<i64: 256, 128>}, {pipeline_mode = #tpu.pipeline_mode<synchronous>, transform_indices = @transform_6, window_bounds = array<i64: 128, 256>}, {pipeline_mode = #tpu.pipeline_mode<synchronous>, transform_indices = @transform_7, window_bounds = array<i64: 1, 256>}, {pipeline_mode = #tpu.pipeline_mode<synchronous>, transform_indices = @transform_8, window_bounds = array<i64: 256, 256>}, {pipeline_mode = #tpu.pipeline_mode<synchronous>, transform_indices = @transform_9, window_bounds = array<i64: 1, 256>}, {pipeline_mode = #tpu.pipeline_mode<synchronous>, transform_indices = @transform_10, window_bounds = array<i64: 256, 128>}, {pipeline_mode = #tpu.pipeline_mode<synchronous>, transform_indices = @transform_11, window_bounds = array<i64: 1, 128>}, {transform_indices = @transform_12, window_bounds = array<i64: 512, 128>}]} {
    %c0 = arith.constant 0 : index
    %c0_0 = arith.constant 0 : index
    %0 = vector.load %arg1[%c0, %c0_0] : memref<512x128xf32, #tpu.memory_space<vmem>>, vector<512x128xf32>
    %c0_1 = arith.constant 0 : index
    %c0_2 = arith.constant 0 : index
    %1 = vector.load %arg2[%c0_1, %c0_2] : memref<128x256xf32, #tpu.memory_space<vmem>>, vector<128x256xf32>
    %cst = arith.constant dense<0.000000e+00> : vector<512x256xf32>
    %2 = tpu.matmul %0, %1, %cst {dimension_numbers = #tpu.dot_dimension_numbers<[1], [0], [0], [1], [0, 0, 1, 1], [], []>} : vector<512x128xf32>, vector<128x256xf32>, vector<512x256xf32> -> vector<512x256xf32>
    %c0_3 = arith.constant 0 : index
    %c0_4 = arith.constant 0 : index
    %3 = vector.load %arg3[%c0_3, %c0_4] : memref<1x256xf32, #tpu.memory_space<vmem>>, vector<1x256xf32>
    %4 = vector.broadcast %3 : vector<1x256xf32> to vector<512x256xf32>
    %5 = arith.addf %2, %4 : vector<512x256xf32>
    %cst_5 = arith.constant 0.000000e+00 : f32
    %6 = vector.broadcast %cst_5 : f32 to vector<512x256xf32>
    %7 = arith.maximumf %5, %6 : vector<512x256xf32>
    %c0_6 = arith.constant 0 : index
    %c0_7 = arith.constant 0 : index
    %8 = vector.load %arg4[%c0_6, %c0_7] : memref<256x256xf32, #tpu.memory_space<vmem>>, vector<256x256xf32>
    %cst_8 = arith.constant dense<0.000000e+00> : vector<512x256xf32>
    %9 = tpu.matmul %7, %8, %cst_8 {dimension_numbers = #tpu.dot_dimension_numbers<[1], [0], [0], [1], [0, 0, 1, 1], [], []>} : vector<512x256xf32>, vector<256x256xf32>, vector<512x256xf32> -> vector<512x256xf32>
    %c0_9 = arith.constant 0 : index
    %c0_10 = arith.constant 0 : index
    %10 = vector.load %arg5[%c0_9, %c0_10] : memref<1x256xf32, #tpu.memory_space<vmem>>, vector<1x256xf32>
    %11 = vector.broadcast %10 : vector<1x256xf32> to vector<512x256xf32>
    %12 = arith.addf %9, %11 : vector<512x256xf32>
    %cst_11 = arith.constant 0.000000e+00 : f32
    %13 = vector.broadcast %cst_11 : f32 to vector<512x256xf32>
    %14 = arith.maximumf %12, %13 : vector<512x256xf32>
    %c0_12 = arith.constant 0 : index
    %c0_13 = arith.constant 0 : index
    %15 = vector.load %arg7[%c0_12, %c0_13] : memref<128x256xf32, #tpu.memory_space<vmem>>, vector<128x256xf32>
    %cst_14 = arith.constant dense<0.000000e+00> : vector<512x256xf32>
    %16 = tpu.matmul %0, %15, %cst_14 {dimension_numbers = #tpu.dot_dimension_numbers<[1], [0], [0], [1], [0, 0, 1, 1], [], []>} : vector<512x128xf32>, vector<128x256xf32>, vector<512x256xf32> -> vector<512x256xf32>
    %c0_15 = arith.constant 0 : index
    %c0_16 = arith.constant 0 : index
    %17 = vector.load %arg8[%c0_15, %c0_16] : memref<1x256xf32, #tpu.memory_space<vmem>>, vector<1x256xf32>
    %18 = vector.broadcast %17 : vector<1x256xf32> to vector<512x256xf32>
    %19 = arith.addf %16, %18 : vector<512x256xf32>
    %cst_17 = arith.constant 0.000000e+00 : f32
    %20 = vector.broadcast %cst_17 : f32 to vector<512x256xf32>
    %21 = arith.maximumf %19, %20 : vector<512x256xf32>
    %c0_18 = arith.constant 0 : index
    %c0_19 = arith.constant 0 : index
    %22 = vector.load %arg9[%c0_18, %c0_19] : memref<256x256xf32, #tpu.memory_space<vmem>>, vector<256x256xf32>
    %cst_20 = arith.constant dense<0.000000e+00> : vector<512x256xf32>
    %23 = tpu.matmul %21, %22, %cst_20 {dimension_numbers = #tpu.dot_dimension_numbers<[1], [0], [0], [1], [0, 0, 1, 1], [], []>} : vector<512x256xf32>, vector<256x256xf32>, vector<512x256xf32> -> vector<512x256xf32>
    %c0_21 = arith.constant 0 : index
    %c0_22 = arith.constant 0 : index
    %24 = vector.load %arg10[%c0_21, %c0_22] : memref<1x256xf32, #tpu.memory_space<vmem>>, vector<1x256xf32>
    %25 = vector.broadcast %24 : vector<1x256xf32> to vector<512x256xf32>
    %26 = arith.addf %23, %25 : vector<512x256xf32>
    %cst_23 = arith.constant 0.000000e+00 : f32
    %27 = vector.broadcast %cst_23 : f32 to vector<512x256xf32>
    %28 = arith.maximumf %26, %27 : vector<512x256xf32>
    %c0_24 = arith.constant 0 : index
    %c0_25 = arith.constant 0 : index
    %29 = vector.load %arg6[%c0_24, %c0_25] : memref<256x128xf32, #tpu.memory_space<vmem>>, vector<256x128xf32>
    %cst_26 = arith.constant dense<0.000000e+00> : vector<512x128xf32>
    %30 = tpu.matmul %14, %29, %cst_26 {dimension_numbers = #tpu.dot_dimension_numbers<[1], [0], [0], [1], [0, 0, 1, 1], [], []>} : vector<512x256xf32>, vector<256x128xf32>, vector<512x128xf32> -> vector<512x128xf32>
    %c0_27 = arith.constant 0 : index
    %c0_28 = arith.constant 0 : index
    %31 = vector.load %arg11[%c0_27, %c0_28] : memref<256x128xf32, #tpu.memory_space<vmem>>, vector<256x128xf32>
    %cst_29 = arith.constant dense<0.000000e+00> : vector<512x128xf32>
    %32 = tpu.matmul %28, %31, %cst_29 {dimension_numbers = #tpu.dot_dimension_numbers<[1], [0], [0], [1], [0, 0, 1, 1], [], []>} : vector<512x256xf32>, vector<256x128xf32>, vector<512x128xf32> -> vector<512x128xf32>
    %33 = arith.addf %30, %32 : vector<512x128xf32>
    %c0_30 = arith.constant 0 : index
    %c0_31 = arith.constant 0 : index
    %34 = vector.load %arg12[%c0_30, %c0_31] : memref<1x128xf32, #tpu.memory_space<vmem>>, vector<1x128xf32>
    %35 = vector.broadcast %34 : vector<1x128xf32> to vector<512x128xf32>
    %36 = arith.addf %33, %35 : vector<512x128xf32>
    %c0_32 = arith.constant 0 : index
    %c0_33 = arith.constant 0 : index
    %37 = vector.load %arg13[%c0_32, %c0_33] : memref<512x128xf32, #tpu.memory_space<vmem>>, vector<512x128xf32>
    tpu.vector_store %arg13[%c0_32, %c0_33], %36 {strides = array<i32>} : memref<512x128xf32, #tpu.memory_space<vmem>>, vector<512x128xf32>,
    return
  }
  func.func @transform_0(%arg0: i32) -> (i32, i32) {
    %c0_i32 = arith.constant 0 : i32
    %c0_i32_0 = arith.constant 0 : i32
    return %arg0, %c0_i32 : i32, i32
  }
  func.func @transform_1(%arg0: i32) -> (i32, i32) {
    %c0_i32 = arith.constant 0 : i32
    %c0_i32_0 = arith.constant 0 : i32
    %c0_i32_1 = arith.constant 0 : i32
    return %c0_i32, %c0_i32_0 : i32, i32
  }
  func.func @transform_2(%arg0: i32) -> (i32, i32) {
    %c0_i32 = arith.constant 0 : i32
    %c0_i32_0 = arith.constant 0 : i32
    %c0_i32_1 = arith.constant 0 : i32
    return %c0_i32, %c0_i32_0 : i32, i32
  }
  func.func @transform_3(%arg0: i32) -> (i32, i32) {
    %c0_i32 = arith.constant 0 : i32
    %c0_i32_0 = arith.constant 0 : i32
    %c0_i32_1 = arith.constant 0 : i32
    return %c0_i32, %c0_i32_0 : i32, i32
  }
  func.func @transform_4(%arg0: i32) -> (i32, i32) {
    %c0_i32 = arith.constant 0 : i32
    %c0_i32_0 = arith.constant 0 : i32
    %c0_i32_1 = arith.constant 0 : i32
    return %c0_i32, %c0_i32_0 : i32, i32
  }
  func.func @transform_5(%arg0: i32) -> (i32, i32) {
    %c0_i32 = arith.constant 0 : i32
    %c0_i32_0 = arith.constant 0 : i32
    %c0_i32_1 = arith.constant 0 : i32
    return %c0_i32, %c0_i32_0 : i32, i32
  }
  func.func @transform_6(%arg0: i32) -> (i32, i32) {
    %c0_i32 = arith.constant 0 : i32
    %c0_i32_0 = arith.constant 0 : i32
    %c0_i32_1 = arith.constant 0 : i32
    return %c0_i32, %c0_i32_0 : i32, i32
  }
  func.func @transform_7(%arg0: i32) -> (i32, i32) {
    %c0_i32 = arith.constant 0 : i32
    %c0_i32_0 = arith.constant 0 : i32
    %c0_i32_1 = arith.constant 0 : i32
    return %c0_i32, %c0_i32_0 : i32, i32
  }
  func.func @transform_8(%arg0: i32) -> (i32, i32) {
    %c0_i32 = arith.constant 0 : i32
    %c0_i32_0 = arith.constant 0 : i32
    %c0_i32_1 = arith.constant 0 : i32
    return %c0_i32, %c0_i32_0 : i32, i32
  }
  func.func @transform_9(%arg0: i32) -> (i32, i32) {
    %c0_i32 = arith.constant 0 : i32
    %c0_i32_0 = arith.constant 0 : i32
    %c0_i32_1 = arith.constant 0 : i32
    return %c0_i32, %c0_i32_0 : i32, i32
  }
  func.func @transform_10(%arg0: i32) -> (i32, i32) {
    %c0_i32 = arith.constant 0 : i32
    %c0_i32_0 = arith.constant 0 : i32
    %c0_i32_1 = arith.constant 0 : i32
    return %c0_i32, %c0_i32_0 : i32, i32
  }
  func.func @transform_11(%arg0: i32) -> (i32, i32) {
    %c0_i32 = arith.constant 0 : i32
    %c0_i32_0 = arith.constant 0 : i32
    %c0_i32_1 = arith.constant 0 : i32
    return %c0_i32, %c0_i32_0 : i32, i32
  }
  func.func @transform_12(%arg0: i32) -> (i32, i32) {
    %c0_i32 = arith.constant 0 : i32
    %c0_i32_0 = arith.constant 0 : i32
    return %arg0, %c0_i32 : i32, i32
  }
}

</mosaic_0001>

<llo_original>
// kernel: tpu_custom_call.1
$region0: #{tpu_custom_call.1}
  #allocation0 [shape = 'u32[]', space=smem, size = 0x4, offset = 0x4, fixed_abs, tag = 'smem constant byte address 0x4 - core index']
  #allocation1 [shape = 'u32[144,128]{1,0:T(1,128)}', space=vmem, size = 0x12000, scoped, tag = 'internal scratch']
  %s0 = inlined_call_operand.hbm [shape: f32[1024,128], index: 0, kind: input, shape index: {}]
  %s1 = inlined_call_operand.hbm [shape: f32[128,256], index: 1, kind: input, shape index: {}]
  %s2 = inlined_call_operand.vmem [shape: f32[1,256], index: 2, kind: input, shape index: {}]
  %s3 = inlined_call_operand.hbm [shape: f32[256,256], index: 3, kind: input, shape index: {}]
  %s4 = inlined_call_operand.vmem [shape: f32[1,256], index: 4, kind: input, shape index: {}]
  %s5 = inlined_call_operand.hbm [shape: f32[256,128], index: 5, kind: input, shape index: {}]
  %s6 = inlined_call_operand.hbm [shape: f32[128,256], index: 6, kind: input, shape index: {}]
  %s7 = inlined_call_operand.vmem [shape: f32[1,256], index: 7, kind: input, shape index: {}]
  %s8 = inlined_call_operand.hbm [shape: f32[256,256], index: 8, kind: input, shape index: {}]
  %s9 = inlined_call_operand.vmem [shape: f32[1,256], index: 9, kind: input, shape index: {}]
  %s10 = inlined_call_operand.hbm [shape: f32[256,128], index: 10, kind: input, shape index: {}]
  %s11 = inlined_call_operand.vmem [shape: f32[1,128], index: 11, kind: input, shape index: {}]
  %s12 = inlined_call_operand.hbm [shape: f32[1024,128], index: 12, kind: output, shape index: {}]
  %s13 = sld [smem:[#allocation0]]
  $region109: #{tpu_custom_call.1} parent=0
    _
  %s15 = ssub.s32 1, %s13
  %s16 = scalar_select 0, %s15, %s13
  $region1: #{tpu_custom_call.1} parent=0
    #allocation2 [shape = 'u8[524288]{0}', space=vmem, size = 0x80000, scoped, tag = 'input window, operand 0']
    #allocation3 [shape = 's32[2]{0}', space=sflag, size = 0x8, scoped, tag = 'scoped memory for tpu_custom_call.1']
    #allocation4 [shape = 's32[2]{0}', space=sflag, size = 0x8, scoped, tag = 'scoped memory for tpu_custom_call.1']
    #allocation5 [shape = 'u8[131072]{0}', space=vmem, size = 0x20000, scoped, tag = 'input window, operand 1, single buffered']
    #allocation6 [shape = 's32[1]{0}', space=sflag, size = 0x4, scoped, tag = 'scoped memory for tpu_custom_call.1']
    #allocation7 [shape = 'u8[262144]{0}', space=vmem, size = 0x40000, scoped, tag = 'input window, operand 3, single buffered']
    #allocation8 [shape = 'u8[131072]{0}', space=vmem, size = 0x20000, scoped, tag = 'input window, operand 5, single buffered']
    #allocation9 [shape = 's32[1]{0}', space=sflag, size = 0x4, scoped, tag = 'scoped memory for tpu_custom_call.1']
    #allocation10 [shape = 'u8[131072]{0}', space=vmem, size = 0x20000, scoped, tag = 'input window, operand 6, single buffered']
    #allocation11 [shape = 'u8[262144]{0}', space=vmem, size = 0x40000, scoped, tag = 'input window, operand 8, single buffered']
    #allocation12 [shape = 's32[1]{0}', space=sflag, size = 0x4, scoped, tag = 'scoped memory for tpu_custom_call.1']
    #allocation13 [shape = 'u8[131072]{0}', space=vmem, size = 0x20000, scoped, tag = 'input window, operand 10, single buffered']
    #allocation14 [shape = 'u8[524288]{0}', space=vmem, size = 0x80000, scoped, tag = 'output window, operand 0']
    %17 = vsyncpa [#allocation3], 0
    %s18 = scalar_lea.sflag [#allocation3], 1
    %19 = vsyncpa %s18, 0
    %20 = vsyncpa [#allocation6], 0
    %21 = vsyncpa [#allocation9], 0
    %22 = vsyncpa [#allocation12], 0
    %23 = vsyncpa [#allocation4], 0
    %s24 = scalar_lea.sflag [#allocation4], 1
    %25 = vsyncpa %s24, 0
    loop: start=0, step=1, limit=4
    $region2: #{tpu_custom_call.1} parent=1 // loop_pre_header
      _
    $region3: #{tpu_custom_call.1} parent=1 // loop_header
      %s27 = sphi 0, %s31
      %p28 = scmp.ge.s32.totalorder %s27, 4
      %s37 = sphi 0, %s39
      %s40 = sphi 0, %s37
      %s41 = sphi 0, %s40
      %s57 = sphi 0, %s41
      %s61 = sphi 0, %s61
      %s63 = sphi 0, %s61
      %s64 = sphi 0, %s63
      %s78 = sphi 0, %s64
      %s82 = sphi 0, %s82
      %s84 = sphi 0, %s82
      %s85 = sphi 0, %s84
      %s99 = sphi 0, %s85
      %s103 = sphi 0, %s103
      %s105 = sphi 0, %s103
      %s106 = sphi 0, %s105
      %s120 = sphi 0, %s106
      %s124 = sphi 0, %s124
      %s126 = sphi 0, %s124
      %s127 = sphi 0, %s126
      %s141 = sphi 0, %s127
      %s145 = sphi 0, %s145
      %s147 = sphi 0, %s145
      %s148 = sphi 0, %s147
      %s162 = sphi 0, %s148
      %s166 = sphi 0, %s166
      %s168 = sphi 0, %s166
      %s169 = sphi 0, %s168
      %s183 = sphi 0, %s169
      %s187 = sphi 0, %s187
      %s189 = sphi 0, %s187
      %s190 = sphi 0, %s189
      %s204 = sphi 0, %s190
      %s208 = sphi 0, %s208
      %s210 = sphi 0, %s208
      %s211 = sphi 0, %s210
      %s225 = sphi 0, %s211
      %s229 = sphi 0, %s229
      %s231 = sphi 0, %s229
      %s232 = sphi 0, %s231
      %s246 = sphi 0, %s232
      %s250 = sphi 0, %s250
      %s252 = sphi 0, %s250
      %s253 = sphi 0, %s252
      %s267 = sphi 0, %s253
      %s271 = sphi 0, %s271
      %s273 = sphi 0, %s271
      %s274 = sphi 0, %s273
      %s288 = sphi 0, %s274
      %s294 = sphi 0, %s296
      %s297 = sphi 0, %s294
      %s298 = sphi 0, %s297
      %s314 = sphi 0, %s298
    $region4: #{tpu_custom_call.1} parent=1 // loop_header_branch
      %30 = sbr.rel (%p28) target = $region8
    $region5: #{tpu_custom_call.1} parent=1 // loop_body
      %s32 = ssub.s32 %s27, 1
      %s33 = ssub.s32 %s27, 2
      %s34 = sadd.s32 %s27, 1
      %s35 = ssub.s32 %s27, %s34
      %p36 = scmp.eq.s32.totalorder %s35, 0
      %s38 = sadd.s32 %s37, 1
      %s39 = scalar_select %p36, %s37, %s38
      %p42 = pneg %p36
      %p43 = scmp.eq.s32.totalorder %s27, 1
      %p44 = por %p42, %p43
      %p45 = scmp.ne.s32.totalorder %s37, %s40
      %p46 = scmp.eq.s32.totalorder %s27, 0
      %p47 = por %p45, %p46
      %p48 = scmp.ne.s32.totalorder %s37, %s40
      %p49 = scmp.eq.s32.totalorder %s32, 1
      %p50 = por %p48, %p49
      %p51 = scmp.ne.s32.totalorder %s40, %s41
      %p52 = scmp.eq.s32.totalorder %s32, 0
      %p53 = por %p51, %p52
      %p54 = scmp.ne.s32.totalorder %s40, %s41
      %p55 = scmp.eq.s32.totalorder %s33, 1
      %p56 = por %p54, %p55
      %p58 = scmp.ne.s32.totalorder %s41, %s57
      %p59 = scmp.eq.s32.totalorder %s33, 0
      %p60 = por %p58, %p59
      %s62 = sadd.s32 %s61, 1
      %p65 = scmp.eq.s32.totalorder %s27, 1
      %p66 = scmp.ne.s32.totalorder %s61, %s63
      %p67 = scmp.eq.s32.totalorder %s27, 0
      %p68 = por %p66, %p67
      %p69 = scmp.ne.s32.totalorder %s61, %s63
      %p70 = scmp.eq.s32.totalorder %s32, 1
      %p71 = por %p69, %p70
      %p72 = scmp.ne.s32.totalorder %s63, %s64
      %p73 = scmp.eq.s32.totalorder %s32, 0
      %p74 = por %p72, %p73
      %p75 = scmp.ne.s32.totalorder %s63, %s64
      %p76 = scmp.eq.s32.totalorder %s33, 1
      %p77 = por %p75, %p76
      %p79 = scmp.ne.s32.totalorder %s64, %s78
      %p80 = scmp.eq.s32.totalorder %s33, 0
      %p81 = por %p79, %p80
      %s83 = sadd.s32 %s82, 1
      %p86 = scmp.eq.s32.totalorder %s27, 1
      %p87 = scmp.ne.s32.totalorder %s82, %s84
      %p88 = scmp.eq.s32.totalorder %s27, 0
      %p89 = por %p87, %p88
      %p90 = scmp.ne.s32.totalorder %s82, %s84
      %p91 = scmp.eq.s32.totalorder %s32, 1
      %p92 = por %p90, %p91
      %p93 = scmp.ne.s32.totalorder %s84, %s85
      %p94 = scmp.eq.s32.totalorder %s32, 0
      %p95 = por %p93, %p94
      %p96 = scmp.ne.s32.totalorder %s84, %s85
      %p97 = scmp.eq.s32.totalorder %s33, 1
      %p98 = por %p96, %p97
      %p100 = scmp.ne.s32.totalorder %s85, %s99
      %p101 = scmp.eq.s32.totalorder %s33, 0
      %p102 = por %p100, %p101
      %s104 = sadd.s32 %s103, 1
      %p107 = scmp.eq.s32.totalorder %s27, 1
      %p108 = scmp.ne.s32.totalorder %s103, %s105
      %p109 = scmp.eq.s32.totalorder %s27, 0
      %p110 = por %p108, %p109
      %p111 = scmp.ne.s32.totalorder %s103, %s105
      %p112 = scmp.eq.s32.totalorder %s32, 1
      %p113 = por %p111, %p112
      %p114 = scmp.ne.s32.totalorder %s105, %s106
      %p115 = scmp.eq.s32.totalorder %s32, 0
      %p116 = por %p114, %p115
      %p117 = scmp.ne.s32.totalorder %s105, %s106
      %p118 = scmp.eq.s32.totalorder %s33, 1
      %p119 = por %p117, %p118
      %p121 = scmp.ne.s32.totalorder %s106, %s120
      %p122 = scmp.eq.s32.totalorder %s33, 0
      %p123 = por %p121, %p122
      %s125 = sadd.s32 %s124, 1
      %p128 = scmp.eq.s32.totalorder %s27, 1
      %p129 = scmp.ne.s32.totalorder %s124, %s126
      %p130 = scmp.eq.s32.totalorder %s27, 0
      %p131 = por %p129, %p130
      %p132 = scmp.ne.s32.totalorder %s124, %s126
      %p133 = scmp.eq.s32.totalorder %s32, 1
      %p134 = por %p132, %p133
      %p135 = scmp.ne.s32.totalorder %s126, %s127
      %p136 = scmp.eq.s32.totalorder %s32, 0
      %p137 = por %p135, %p136
      %p138 = scmp.ne.s32.totalorder %s126, %s127
      %p139 = scmp.eq.s32.totalorder %s33, 1
      %p140 = por %p138, %p139
      %p142 = scmp.ne.s32.totalorder %s127, %s141
      %p143 = scmp.eq.s32.totalorder %s33, 0
      %p144 = por %p142, %p143
      %s146 = sadd.s32 %s145, 1
      %p149 = scmp.eq.s32.totalorder %s27, 1
      %p150 = scmp.ne.s32.totalorder %s145, %s147
      %p151 = scmp.eq.s32.totalorder %s27, 0
      %p152 = por %p150, %p151
      %p153 = scmp.ne.s32.totalorder %s145, %s147
      %p154 = scmp.eq.s32.totalorder %s32, 1
      %p155 = por %p153, %p154
      %p156 = scmp.ne.s32.totalorder %s147, %s148
      %p157 = scmp.eq.s32.totalorder %s32, 0
      %p158 = por %p156, %p157
      %p159 = scmp.ne.s32.totalorder %s147, %s148
      %p160 = scmp.eq.s32.totalorder %s33, 1
      %p161 = por %p159, %p160
      %p163 = scmp.ne.s32.totalorder %s148, %s162
      %p164 = scmp.eq.s32.totalorder %s33, 0
      %p165 = por %p163, %p164
      %s167 = sadd.s32 %s166, 1
      %p170 = scmp.eq.s32.totalorder %s27, 1
      %p171 = scmp.ne.s32.totalorder %s166, %s168
      %p172 = scmp.eq.s32.totalorder %s27, 0
      %p173 = por %p171, %p172
      %p174 = scmp.ne.s32.totalorder %s166, %s168
      %p175 = scmp.eq.s32.totalorder %s32, 1
      %p176 = por %p174, %p175
      %p177 = scmp.ne.s32.totalorder %s168, %s169
      %p178 = scmp.eq.s32.totalorder %s32, 0
      %p179 = por %p177, %p178
      %p180 = scmp.ne.s32.totalorder %s168, %s169
      %p181 = scmp.eq.s32.totalorder %s33, 1
      %p182 = por %p180, %p181
      %p184 = scmp.ne.s32.totalorder %s169, %s183
      %p185 = scmp.eq.s32.totalorder %s33, 0
      %p186 = por %p184, %p185
      %s188 = sadd.s32 %s187, 1
      %p191 = scmp.eq.s32.totalorder %s27, 1
      %p192 = scmp.ne.s32.totalorder %s187, %s189
      %p193 = scmp.eq.s32.totalorder %s27, 0
      %p194 = por %p192, %p193
      %p195 = scmp.ne.s32.totalorder %s187, %s189
      %p196 = scmp.eq.s32.totalorder %s32, 1
      %p197 = por %p195, %p196
      %p198 = scmp.ne.s32.totalorder %s189, %s190
      %p199 = scmp.eq.s32.totalorder %s32, 0
      %p200 = por %p198, %p199
      %p201 = scmp.ne.s32.totalorder %s189, %s190
      %p202 = scmp.eq.s32.totalorder %s33, 1
      %p203 = por %p201, %p202
      %p205 = scmp.ne.s32.totalorder %s190, %s204
      %p206 = scmp.eq.s32.totalorder %s33, 0
      %p207 = por %p205, %p206
      %s209 = sadd.s32 %s208, 1
      %p212 = scmp.eq.s32.totalorder %s27, 1
      %p213 = scmp.ne.s32.totalorder %s208, %s210
      %p214 = scmp.eq.s32.totalorder %s27, 0
      %p215 = por %p213, %p214
      %p216 = scmp.ne.s32.totalorder %s208, %s210
      %p217 = scmp.eq.s32.totalorder %s32, 1
      %p218 = por %p216, %p217
      %p219 = scmp.ne.s32.totalorder %s210, %s211
      %p220 = scmp.eq.s32.totalorder %s32, 0
      %p221 = por %p219, %p220
      %p222 = scmp.ne.s32.totalorder %s210, %s211
      %p223 = scmp.eq.s32.totalorder %s33, 1
      %p224 = por %p222, %p223
      %p226 = scmp.ne.s32.totalorder %s211, %s225
      %p227 = scmp.eq.s32.totalorder %s33, 0
      %p228 = por %p226, %p227
      %s230 = sadd.s32 %s229, 1
      %p233 = scmp.eq.s32.totalorder %s27, 1
      %p234 = scmp.ne.s32.totalorder %s229, %s231
      %p235 = scmp.eq.s32.totalorder %s27, 0
      %p236 = por %p234, %p235
      %p237 = scmp.ne.s32.totalorder %s229, %s231
      %p238 = scmp.eq.s32.totalorder %s32, 1
      %p239 = por %p237, %p238
      %p240 = scmp.ne.s32.totalorder %s231, %s232
      %p241 = scmp.eq.s32.totalorder %s32, 0
      %p242 = por %p240, %p241
      %p243 = scmp.ne.s32.totalorder %s231, %s232
      %p244 = scmp.eq.s32.totalorder %s33, 1
      %p245 = por %p243, %p244
      %p247 = scmp.ne.s32.totalorder %s232, %s246
      %p248 = scmp.eq.s32.totalorder %s33, 0
      %p249 = por %p247, %p248
      %s251 = sadd.s32 %s250, 1
      %p254 = scmp.eq.s32.totalorder %s27, 1
      %p255 = scmp.ne.s32.totalorder %s250, %s252
      %p256 = scmp.eq.s32.totalorder %s27, 0
      %p257 = por %p255, %p256
      %p258 = scmp.ne.s32.totalorder %s250, %s252
      %p259 = scmp.eq.s32.totalorder %s32, 1
      %p260 = por %p258, %p259
      %p261 = scmp.ne.s32.totalorder %s252, %s253
      %p262 = scmp.eq.s32.totalorder %s32, 0
      %p263 = por %p261, %p262
      %p264 = scmp.ne.s32.totalorder %s252, %s253
      %p265 = scmp.eq.s32.totalorder %s33, 1
      %p266 = por %p264, %p265
      %p268 = scmp.ne.s32.totalorder %s253, %s267
      %p269 = scmp.eq.s32.totalorder %s33, 0
      %p270 = por %p268, %p269
      %s272 = sadd.s32 %s271, 1
      %p275 = scmp.eq.s32.totalorder %s27, 1
      %p276 = scmp.ne.s32.totalorder %s271, %s273
      %p277 = scmp.eq.s32.totalorder %s27, 0
      %p278 = por %p276, %p277
      %p279 = scmp.ne.s32.totalorder %s271, %s273
      %p280 = scmp.eq.s32.totalorder %s32, 1
      %p281 = por %p279, %p280
      %p282 = scmp.ne.s32.totalorder %s273, %s274
      %p283 = scmp.eq.s32.totalorder %s32, 0
      %p284 = por %p282, %p283
      %p285 = scmp.ne.s32.totalorder %s273, %s274
      %p286 = scmp.eq.s32.totalorder %s33, 1
      %p287 = por %p285, %p286
      %p289 = scmp.ne.s32.totalorder %s274, %s288
      %p290 = scmp.eq.s32.totalorder %s33, 0
      %p291 = por %p289, %p290
      %s292 = ssub.s32 %s27, %s34
      %p293 = scmp.eq.s32.totalorder %s292, 0
      %s295 = sadd.s32 %s294, 1
      %s296 = scalar_select %p293, %s294, %s295
      %p299 = pneg %p293
      %p300 = scmp.eq.s32.totalorder %s27, 1
      %p301 = por %p299, %p300
      %p302 = scmp.ne.s32.totalorder %s294, %s297
      %p303 = scmp.eq.s32.totalorder %s27, 0
      %p304 = por %p302, %p303
      %p305 = scmp.ne.s32.totalorder %s294, %s297
      %p306 = scmp.eq.s32.totalorder %s32, 1
      %p307 = por %p305, %p306
      %p308 = scmp.ne.s32.totalorder %s297, %s298
      %p309 = scmp.eq.s32.totalorder %s32, 0
      %p310 = por %p308, %p309
      %p311 = scmp.ne.s32.totalorder %s297, %s298
      %p312 = scmp.eq.s32.totalorder %s33, 1
      %p313 = por %p311, %p312
      %p315 = scmp.ne.s32.totalorder %s298, %s314
      %p316 = scmp.eq.s32.totalorder %s33, 0
      %p317 = por %p315, %p316
      %p318 = scmp.le.s32.totalorder 1, %s27
      %p319 = scmp.lt.s32.totalorder %s27, 3
      %p320 = pnand %p318, %p319
      %p321 = pneg %p320
      // Predicated region
      $region9: #{tpu_custom_call.1} parent=5 // pred_check
        _
      $region10: #{tpu_custom_call.1} parent=5 // pred_check_branch
        %323 = sbr.rel (%p320) target = $region12
      $region11: #{tpu_custom_call.1} parent=5 // pred_region
        %s324 = ssub.s32 %s27, 1
        // Predicated region
        $region13: #{tpu_custom_call.1} parent=11 // pred_check
          %p325 = pneg %p74
        $region14: #{tpu_custom_call.1} parent=11 // pred_check_branch
          %327 = sbr.rel (%p325) target = $region16
        $region15: #{tpu_custom_call.1} parent=11 // pred_region
          %s329 = ssub.s32 4096, 4096
          %330 = vsyncadd [#allocation6], %s329
          %s331 = sshll.u32 [#allocation5], 4
          %s332 = int_to_ptr.vmem [resolvable:$true] %s331
          %337 = dma.hbm_to_vmem [thread:$0]  %s1, 4096, %s332, [#allocation6], 256, 256, 16
        $region16: #{tpu_custom_call.1} parent=11 // pred_fallthru
          _
        // Predicated region
        $region17: #{tpu_custom_call.1} parent=11 // pred_check
          %p338 = pneg %p95
        $region18: #{tpu_custom_call.1} parent=11 // pred_check_branch
          %340 = sbr.rel (%p338) target = $region20
        $region19: #{tpu_custom_call.1} parent=11 // pred_region
          _
        $region20: #{tpu_custom_call.1} parent=11 // pred_fallthru
          _
        // Predicated region
        $region21: #{tpu_custom_call.1} parent=11 // pred_check
          %p341 = pneg %p116
        $region22: #{tpu_custom_call.1} parent=11 // pred_check_branch
          %343 = sbr.rel (%p341) target = $region24
        $region23: #{tpu_custom_call.1} parent=11 // pred_region
          %s345 = ssub.s32 8192, 8192
          %346 = vsyncadd [#allocation6], %s345
          %s347 = sshll.u32 [#allocation7], 4
          %s348 = int_to_ptr.vmem [resolvable:$true] %s347
          %353 = dma.hbm_to_vmem [thread:$0]  %s3, 8192, %s348, [#allocation6], 256, 256, 16
        $region24: #{tpu_custom_call.1} parent=11 // pred_fallthru
          _
        // Predicated region
        $region25: #{tpu_custom_call.1} parent=11 // pred_check
          %p354 = pneg %p137
        $region26: #{tpu_custom_call.1} parent=11 // pred_check_branch
          %356 = sbr.rel (%p354) target = $region28
        $region27: #{tpu_custom_call.1} parent=11 // pred_region
          _
        $region28: #{tpu_custom_call.1} parent=11 // pred_fallthru
          _
        // Predicated region
        $region29: #{tpu_custom_call.1} parent=11 // pred_check
          %p357 = pneg %p158
        $region30: #{tpu_custom_call.1} parent=11 // pred_check_branch
          %359 = sbr.rel (%p357) target = $region32
        $region31: #{tpu_custom_call.1} parent=11 // pred_region
          %s361 = ssub.s32 4096, 4096
          %362 = vsyncadd [#allocation9], %s361
          %s363 = sshll.u32 [#allocation8], 4
          %s364 = int_to_ptr.vmem [resolvable:$true] %s363
          %369 = dma.hbm_to_vmem [thread:$0]  %s5, 4096, %s364, [#allocation9], 128, 128, 8
        $region32: #{tpu_custom_call.1} parent=11 // pred_fallthru
          _
        // Predicated region
        $region33: #{tpu_custom_call.1} parent=11 // pred_check
          %p370 = pneg %p179
        $region34: #{tpu_custom_call.1} parent=11 // pred_check_branch
          %372 = sbr.rel (%p370) target = $region36
        $region35: #{tpu_custom_call.1} parent=11 // pred_region
          %s374 = ssub.s32 4096, 4096
          %375 = vsyncadd [#allocation9], %s374
          %s376 = sshll.u32 [#allocation10], 4
          %s377 = int_to_ptr.vmem [resolvable:$true] %s376
          %382 = dma.hbm_to_vmem [thread:$0]  %s6, 4096, %s377, [#allocation9], 256, 256, 16
        $region36: #{tpu_custom_call.1} parent=11 // pred_fallthru
          _
        // Predicated region
        $region37: #{tpu_custom_call.1} parent=11 // pred_check
          %p383 = pneg %p200
        $region38: #{tpu_custom_call.1} parent=11 // pred_check_branch
          %385 = sbr.rel (%p383) target = $region40
        $region39: #{tpu_custom_call.1} parent=11 // pred_region
          _
        $region40: #{tpu_custom_call.1} parent=11 // pred_fallthru
          _
        // Predicated region
        $region41: #{tpu_custom_call.1} parent=11 // pred_check
          %p386 = pneg %p221
        $region42: #{tpu_custom_call.1} parent=11 // pred_check_branch
          %388 = sbr.rel (%p386) target = $region44
        $region43: #{tpu_custom_call.1} parent=11 // pred_region
          %s390 = ssub.s32 8192, 8192
          %391 = vsyncadd [#allocation12], %s390
          %s392 = sshll.u32 [#allocation11], 4
          %s393 = int_to_ptr.vmem [resolvable:$true] %s392
          %398 = dma.hbm_to_vmem [thread:$0]  %s8, 8192, %s393, [#allocation12], 256, 256, 16
        $region44: #{tpu_custom_call.1} parent=11 // pred_fallthru
          _
        // Predicated region
        $region45: #{tpu_custom_call.1} parent=11 // pred_check
          %p399 = pneg %p242
        $region46: #{tpu_custom_call.1} parent=11 // pred_check_branch
          %401 = sbr.rel (%p399) target = $region48
        $region47: #{tpu_custom_call.1} parent=11 // pred_region
          _
        $region48: #{tpu_custom_call.1} parent=11 // pred_fallthru
          _
        // Predicated region
        $region49: #{tpu_custom_call.1} parent=11 // pred_check
          %p402 = pneg %p263
        $region50: #{tpu_custom_call.1} parent=11 // pred_check_branch
          %404 = sbr.rel (%p402) target = $region52
        $region51: #{tpu_custom_call.1} parent=11 // pred_region
          %s406 = ssub.s32 4096, 4096
          %407 = vsyncadd [#allocation12], %s406
          %s408 = sshll.u32 [#allocation13], 4
          %s409 = int_to_ptr.vmem [resolvable:$true] %s408
          %414 = dma.hbm_to_vmem [thread:$0]  %s10, 4096, %s409, [#allocation12], 128, 128, 8
        $region52: #{tpu_custom_call.1} parent=11 // pred_fallthru
          _
        // Predicated region
        $region53: #{tpu_custom_call.1} parent=11 // pred_check
          %p415 = pneg %p284
        $region54: #{tpu_custom_call.1} parent=11 // pred_check_branch
          %417 = sbr.rel (%p415) target = $region56
        $region55: #{tpu_custom_call.1} parent=11 // pred_region
          _
        $region56: #{tpu_custom_call.1} parent=11 // pred_fallthru
          _
      $region12: #{tpu_custom_call.1} parent=5 // pred_fallthru
        _
      %p418 = scmp.lt.s32.totalorder %s27, 2
      // Predicated region
      $region57: #{tpu_custom_call.1} parent=5 // pred_check
        %p419 = pneg %p418
      $region58: #{tpu_custom_call.1} parent=5 // pred_check_branch
        %421 = sbr.rel (%p419) target = $region60
      $region59: #{tpu_custom_call.1} parent=5 // pred_region
        // Predicated region
        $region61: #{tpu_custom_call.1} parent=59 // pred_check
          %p422 = pneg %p47
        $region62: #{tpu_custom_call.1} parent=59 // pred_check_branch
          %424 = sbr.rel (%p422) target = $region64
        $region63: #{tpu_custom_call.1} parent=59 // pred_region
          %s425 = sand.u32 %s37, 1
          %s426 = scalar_lea.sflag [#allocation3], %s425
          %s427 = sand.u32 %s37, 1
          %s428 = smul.addr %s427, 512
          %s429 = scalar_lea.vmem [#allocation2], %s428
          %s430 = smul.u32 64, %s27
          %s432 = ssub.s32 8192, 8192
          %433 = vsyncadd %s426, %s432
          %s434 = smul.addr %s430, 128
          %s435 = scalar_lea.hbm %s0, %s434
          %s436 = sshll.u32 %s429, 4
          %s437 = int_to_ptr.vmem [resolvable:$true] %s436
          %442 = dma.hbm_to_vmem [thread:$0]  %s435, 8192, %s437, %s426, 128, 128, 8
        $region64: #{tpu_custom_call.1} parent=59 // pred_fallthru
          _
      $region60: #{tpu_custom_call.1} parent=5 // pred_fallthru
        _
      %p443 = scmp.le.s32.totalorder 1, %s27
      %p444 = scmp.lt.s32.totalorder %s27, 3
      %p445 = pnand %p443, %p444
      %p446 = pneg %p445
      // Predicated region
      $region65: #{tpu_custom_call.1} parent=5 // pred_check
        _
      $region66: #{tpu_custom_call.1} parent=5 // pred_check_branch
        %448 = sbr.rel (%p445) target = $region68
      $region67: #{tpu_custom_call.1} parent=5 // pred_region
        %s449 = ssub.s32 %s27, 1
        %s450 = sand.u32 %s40, 1
        %s451 = scalar_lea.sflag [#allocation3], %s450
        %s452 = sand.u32 %s40, 1
        %s453 = smul.addr %s452, 512
        %s454 = scalar_lea.vmem [#allocation2], %s453
        // Predicated region
        $region69: #{tpu_custom_call.1} parent=67 // pred_check
          %p455 = pneg %p53
        $region70: #{tpu_custom_call.1} parent=67 // pred_check_branch
          %457 = sbr.rel (%p455) target = $region72
        $region71: #{tpu_custom_call.1} parent=67 // pred_region
          %458 = dma.done %s451, 8192
        $region72: #{tpu_custom_call.1} parent=67 // pred_fallthru
          _
        // Predicated region
        $region73: #{tpu_custom_call.1} parent=67 // pred_check
          %p459 = pneg %p74
        $region74: #{tpu_custom_call.1} parent=67 // pred_check_branch
          %461 = sbr.rel (%p459) target = $region76
        $region75: #{tpu_custom_call.1} parent=67 // pred_region
          %462 = dma.done [#allocation6], 4096
        $region76: #{tpu_custom_call.1} parent=67 // pred_fallthru
          _
        // Predicated region
        $region77: #{tpu_custom_call.1} parent=67 // pred_check
          %p463 = pneg %p116
        $region78: #{tpu_custom_call.1} parent=67 // pred_check_branch
          %465 = sbr.rel (%p463) target = $region80
        $region79: #{tpu_custom_call.1} parent=67 // pred_region
          %466 = dma.done [#allocation6], 8192
        $region80: #{tpu_custom_call.1} parent=67 // pred_fallthru
          _
        // Predicated region
        $region81: #{tpu_custom_call.1} parent=67 // pred_check
          %p467 = pneg %p158
        $region82: #{tpu_custom_call.1} parent=67 // pred_check_branch
          %469 = sbr.rel (%p467) target = $region84
        $region83: #{tpu_custom_call.1} parent=67 // pred_region
          %470 = dma.done [#allocation9], 4096
        $region84: #{tpu_custom_call.1} parent=67 // pred_fallthru
          _
        // Predicated region
        $region85: #{tpu_custom_call.1} parent=67 // pred_check
          %p471 = pneg %p179
        $region86: #{tpu_custom_call.1} parent=67 // pred_check_branch
          %473 = sbr.rel (%p471) target = $region88
        $region87: #{tpu_custom_call.1} parent=67 // pred_region
          %474 = dma.done [#allocation9], 4096
        $region88: #{tpu_custom_call.1} parent=67 // pred_fallthru
          _
        // Predicated region
        $region89: #{tpu_custom_call.1} parent=67 // pred_check
          %p475 = pneg %p221
        $region90: #{tpu_custom_call.1} parent=67 // pred_check_branch
          %477 = sbr.rel (%p475) target = $region92
        $region91: #{tpu_custom_call.1} parent=67 // pred_region
          %478 = dma.done [#allocation12], 8192
        $region92: #{tpu_custom_call.1} parent=67 // pred_fallthru
          _
        // Predicated region
        $region93: #{tpu_custom_call.1} parent=67 // pred_check
          %p479 = pneg %p263
        $region94: #{tpu_custom_call.1} parent=67 // pred_check_branch
          %481 = sbr.rel (%p479) target = $region96
        $region95: #{tpu_custom_call.1} parent=67 // pred_region
          %482 = dma.done [#allocation12], 4096
        $region96: #{tpu_custom_call.1} parent=67 // pred_fallthru
          _
        %s483 = sand.u32 %s40, 1
        %s484 = scalar_lea.sflag [#allocation3], %s483
        %s485 = sand.u32 %s40, 1
        %s486 = smul.addr %s485, 512
        %s487 = scalar_lea.vmem [#allocation2], %s486
        %p488 = pneg %p53
        %p489 = pneg %p50
        %p490 = pneg %p74
        %p491 = pneg %p71
        %p492 = pneg %p95
        %p493 = pneg %p92
        %p494 = pneg %p116
        %p495 = pneg %p113
        %p496 = pneg %p137
        %p497 = pneg %p134
        %p498 = pneg %p158
        %p499 = pneg %p155
        %p500 = pneg %p179
        %p501 = pneg %p176
        %p502 = pneg %p200
        %p503 = pneg %p197
        %p504 = pneg %p221
        %p505 = pneg %p218
        %p506 = pneg %p242
        %p507 = pneg %p239
        %p508 = pneg %p263
        %p509 = pneg %p260
        %p510 = pneg %p284
        %p511 = pneg %p281
        %p512 = pneg %p310
        %p513 = pneg %p307
        %s514 = sand.u32 %s297, 1
        %s515 = scalar_lea.sflag [#allocation4], %s514
        %s516 = sand.u32 %s297, 1
        %s517 = smul.addr %s516, 512
        %s518 = scalar_lea.vmem [#allocation14], %s517
        %s519 = smul.u32 64, %s32
        %s520 = smul.u32 64, %s32
        %v521 = vld [vmem:[%s454] sm:$0xff]
        %v522 = vld [vmem:[%s454 + $0x8] sm:$0xff]
        %v523 = vld [vmem:[%s454 + $0x10] sm:$0xff]
        %v524 = vld [vmem:[%s454 + $0x18] sm:$0xff]
        %v525 = vld [vmem:[%s454 + $0x20] sm:$0xff]
        %v526 = vld [vmem:[%s454 + $0x28] sm:$0xff]
        %v527 = vld [vmem:[%s454 + $0x30] sm:$0xff]
        %v528 = vld [vmem:[%s454 + $0x38] sm:$0xff]
        %v529 = vld [vmem:[%s454 + $0x40] sm:$0xff]
        %v530 = vld [vmem:[%s454 + $0x48] sm:$0xff]
        %v531 = vld [vmem:[%s454 + $0x50] sm:$0xff]
        %v532 = vld [vmem:[%s454 + $0x58] sm:$0xff]
        %v533 = vld [vmem:[%s454 + $0x60] sm:$0xff]
        %v534 = vld [vmem:[%s454 + $0x68] sm:$0xff]
        %v535 = vld [vmem:[%s454 + $0x70] sm:$0xff]
        %v536 = vld [vmem:[%s454 + $0x78] sm:$0xff]
        %v537 = vld [vmem:[%s454 + $0x80] sm:$0xff]
        %v538 = vld [vmem:[%s454 + $0x88] sm:$0xff]
        %v539 = vld [vmem:[%s454 + $0x90] sm:$0xff]
        %v540 = vld [vmem:[%s454 + $0x98] sm:$0xff]
        %v541 = vld [vmem:[%s454 + $0xa0] sm:$0xff]
        %v542 = vld [vmem:[%s454 + $0xa8] sm:$0xff]
        %v543 = vld [vmem:[%s454 + $0xb0] sm:$0xff]
        %v544 = vld [vmem:[%s454 + $0xb8] sm:$0xff]
        %v545 = vld [vmem:[%s454 + $0xc0] sm:$0xff]
        %v546 = vld [vmem:[%s454 + $0xc8] sm:$0xff]
        %v547 = vld [vmem:[%s454 + $0xd0] sm:$0xff]
        %v548 = vld [vmem:[%s454 + $0xd8] sm:$0xff]
        %v549 = vld [vmem:[%s454 + $0xe0] sm:$0xff]
        %v550 = vld [vmem:[%s454 + $0xe8] sm:$0xff]
        %v551 = vld [vmem:[%s454 + $0xf0] sm:$0xff]
        %v552 = vld [vmem:[%s454 + $0xf8] sm:$0xff]
        %v553 = vld [vmem:[%s454 + $0x100] sm:$0xff]
        %v554 = vld [vmem:[%s454 + $0x108] sm:$0xff]
        %v555 = vld [vmem:[%s454 + $0x110] sm:$0xff]
        %v556 = vld [vmem:[%s454 + $0x118] sm:$0xff]
        %v557 = vld [vmem:[%s454 + $0x120] sm:$0xff]
        %v558 = vld [vmem:[%s454 + $0x128] sm:$0xff]
        %v559 = vld [vmem:[%s454 + $0x130] sm:$0xff]
        %v560 = vld [vmem:[%s454 + $0x138] sm:$0xff]
        %v561 = vld [vmem:[%s454 + $0x140] sm:$0xff]
        %v562 = vld [vmem:[%s454 + $0x148] sm:$0xff]
        %v563 = vld [vmem:[%s454 + $0x150] sm:$0xff]
        %v564 = vld [vmem:[%s454 + $0x158] sm:$0xff]
        %v565 = vld [vmem:[%s454 + $0x160] sm:$0xff]
        %v566 = vld [vmem:[%s454 + $0x168] sm:$0xff]
        %v567 = vld [vmem:[%s454 + $0x170] sm:$0xff]
        %v568 = vld [vmem:[%s454 + $0x178] sm:$0xff]
        %v569 = vld [vmem:[%s454 + $0x180] sm:$0xff]
        %v570 = vld [vmem:[%s454 + $0x188] sm:$0xff]
        %v571 = vld [vmem:[%s454 + $0x190] sm:$0xff]
        %v572 = vld [vmem:[%s454 + $0x198] sm:$0xff]
        %v573 = vld [vmem:[%s454 + $0x1a0] sm:$0xff]
        %v574 = vld [vmem:[%s454 + $0x1a8] sm:$0xff]
        %v575 = vld [vmem:[%s454 + $0x1b0] sm:$0xff]
        %v576 = vld [vmem:[%s454 + $0x1b8] sm:$0xff]
        %v577 = vld [vmem:[%s454 + $0x1c0] sm:$0xff]
        %v578 = vld [vmem:[%s454 + $0x1c8] sm:$0xff]
        %v579 = vld [vmem:[%s454 + $0x1d0] sm:$0xff]
        %v580 = vld [vmem:[%s454 + $0x1d8] sm:$0xff]
        %v581 = vld [vmem:[%s454 + $0x1e0] sm:$0xff]
        %v582 = vld [vmem:[%s454 + $0x1e8] sm:$0xff]
        %v583 = vld [vmem:[%s454 + $0x1f0] sm:$0xff]
        %v584 = vld [vmem:[%s454 + $0x1f8] sm:$0xff]
        %v585 = vld [vmem:[#allocation5] sm:$0xff]
        %v586 = vld [vmem:[#allocation5 + $0x8] sm:$0xff]
        %v587 = vld [vmem:[#allocation5 + $0x10] sm:$0xff]
        %v588 = vld [vmem:[#allocation5 + $0x18] sm:$0xff]
        %v589 = vld [vmem:[#allocation5 + $0x20] sm:$0xff]
        %v590 = vld [vmem:[#allocation5 + $0x28] sm:$0xff]
        %v591 = vld [vmem:[#allocation5 + $0x30] sm:$0xff]
        %v592 = vld [vmem:[#allocation5 + $0x38] sm:$0xff]
        %v593 = vld [vmem:[#allocation5 + $0x40] sm:$0xff]
        %v594 = vld [vmem:[#allocation5 + $0x48] sm:$0xff]
        %v595 = vld [vmem:[#allocation5 + $0x50] sm:$0xff]
        %v596 = vld [vmem:[#allocation5 + $0x58] sm:$0xff]
        %v597 = vld [vmem:[#allocation5 + $0x60] sm:$0xff]
        %v598 = vld [vmem:[#allocation5 + $0x68] sm:$0xff]
        %v599 = vld [vmem:[#allocation5 + $0x70] sm:$0xff]
        %v600 = vld [vmem:[#allocation5 + $0x78] sm:$0xff]
        %v601 = vld [vmem:[#allocation5 + $0x80] sm:$0xff]
        %v602 = vld [vmem:[#allocation5 + $0x88] sm:$0xff]
        %v603 = vld [vmem:[#allocation5 + $0x90] sm:$0xff]
        %v604 = vld [vmem:[#allocation5 + $0x98] sm:$0xff]
        %v605 = vld [vmem:[#allocation5 + $0xa0] sm:$0xff]
        %v606 = vld [vmem:[#allocation5 + $0xa8] sm:$0xff]
        %v607 = vld [vmem:[#allocation5 + $0xb0] sm:$0xff]
        %v608 = vld [vmem:[#allocation5 + $0xb8] sm:$0xff]
        %v609 = vld [vmem:[#allocation5 + $0xc0] sm:$0xff]
        %v610 = vld [vmem:[#allocation5 + $0xc8] sm:$0xff]
        %v611 = vld [vmem:[#allocation5 + $0xd0] sm:$0xff]
        %v612 = vld [vmem:[#allocation5 + $0xd8] sm:$0xff]
        %v613 = vld [vmem:[#allocation5 + $0xe0] sm:$0xff]
        %v614 = vld [vmem:[#allocation5 + $0xe8] sm:$0xff]
        %v615 = vld [vmem:[#allocation5 + $0xf0] sm:$0xff]
        %v616 = vld [vmem:[#allocation5 + $0xf8] sm:$0xff]
        %v617 = vld [vmem:[%s2] sm:$0x3]
        %v619 = vlaneseq
        %v620 = vshrl.u32 %v619, 7
        %v621 = vsub.s32 0, %v620
        %v622 = vrot.slane %v617, %v621
        %v623 = vlaneseq
        %v624 = vshrl.u32 %v623, 7
        %v625 = vsub.s32 1, %v624
        %v626 = vrot.slane %v617, %v625
        %629 = vmatprep.subr.mxu0 %v586
        %630 = vmatpush1.msra.mxu0 %v585
        %631 = vmatprep.subr.mxu0 %v588
        %632 = vmatpush1.msra.mxu0 %v587
        %633 = vmatprep.subr.mxu0 %v590
        %634 = vmatpush1.msra.mxu0 %v589
        %635 = vmatprep.subr.mxu0 %v592
        %636 = vmatpush1.msra.mxu0 %v591
        %637 = vmatprep.subr.mxu0 %v594
        %638 = vmatpush1.msra.mxu0 %v593
        %639 = vmatprep.subr.mxu0 %v596
        %640 = vmatpush1.msra.mxu0 %v595
        %641 = vmatprep.subr.mxu0 %v598
        %642 = vmatpush1.msra.mxu0 %v597
        %643 = vmatprep.subr.mxu0 %v600
        %644 = vmatpush1.msra.mxu0 %v599
        %645 = vmatprep.subr.mxu0 %v602
        %646 = vmatpush1.msra.mxu0 %v601
        %647 = vmatprep.subr.mxu0 %v604
        %648 = vmatpush1.msra.mxu0 %v603
        %649 = vmatprep.subr.mxu0 %v606
        %650 = vmatpush1.msra.mxu0 %v605
        %651 = vmatprep.subr.mxu0 %v608
        %652 = vmatpush1.msra.mxu0 %v607
        %653 = vmatprep.subr.mxu0 %v610
        %654 = vmatpush1.msra.mxu0 %v609
        %655 = vmatprep.subr.mxu0 %v612
        %656 = vmatpush1.msra.mxu0 %v611
        %657 = vmatprep.subr.mxu0 %v614
        %658 = vmatpush1.msra.mxu0 %v613
        %659 = vmatprep.subr.mxu0 %v616
        %660 = vmatpush1.msra.mxu0 %v615
        %661 = vmatprep.subr.mxu0 0.0
        %662 = vmatpush1.msra.mxu0 0.0
        %663 = vmatprep.subr.mxu0 0.0
        %664 = vmatpush1.msra.mxu0 0.0
        %665 = vmatprep.subr.mxu0 0.0
        %666 = vmatpush1.msra.mxu0 0.0
        %667 = vmatprep.subr.mxu0 0.0
        %668 = vmatpush1.msra.mxu0 0.0
        %669 = vmatprep.subr.mxu0 0.0
        %670 = vmatpush1.msra.mxu0 0.0
        %671 = vmatprep.subr.mxu0 0.0
        %672 = vmatpush1.msra.mxu0 0.0
        %673 = vmatprep.subr.mxu0 0.0
        %674 = vmatpush1.msra.mxu0 0.0
        %675 = vmatprep.subr.mxu0 0.0
        %676 = vmatpush1.msra.mxu0 0.0
        %677 = vmatprep.subr.mxu0 0.0
        %678 = vmatpush1.msra.mxu0 0.0
        %679 = vmatprep.subr.mxu0 0.0
        %680 = vmatpush1.msra.mxu0 0.0
        %681 = vmatprep.subr.mxu0 0.0
        %682 = vmatpush1.msra.mxu0 0.0
        %683 = vmatprep.subr.mxu0 0.0
        %684 = vmatpush1.msra.mxu0 0.0
        %685 = vmatprep.subr.mxu0 0.0
        %686 = vmatpush1.msra.mxu0 0.0
        %687 = vmatprep.subr.mxu0 0.0
        %688 = vmatpush1.msra.mxu0 0.0
        %689 = vmatprep.subr.mxu0 0.0
        %690 = vmatpush1.msra.mxu0 0.0
        %691 = vmatprep.subr.mxu0 0.0
        %692 = vmatpush1.msra.mxu0 0.0
        %693 = vmatprep.mubr.f32.mxu0 0.0
        %694 = vmatmul.mubr.f32.gmra.mrb[0].mxu0 %v521
        %v695 = vpop.f32.mrb[0].mxu0
        %v696 = vadd.f32 %v622, %v695
        %v697 = vpop.f32.mrb[0].mxu0
        %v698 = vadd.f32 %v626, %v697
        %699 = vmatprep.mubr.f32.mxu0 0.0
        %700 = vmatmul.mubr.f32.gmra.mrb[0].mxu0 %v522
        %v701 = vpop.f32.mrb[0].mxu0
        %v702 = vadd.f32 %v622, %v701
        %v703 = vpop.f32.mrb[0].mxu0
        %v704 = vadd.f32 %v626, %v703
        %705 = vmatprep.mubr.f32.mxu0 0.0
        %706 = vmatmul.mubr.f32.gmra.mrb[0].mxu0 %v523
        %v707 = vpop.f32.mrb[0].mxu0
        %v708 = vadd.f32 %v622, %v707
        %v709 = vpop.f32.mrb[0].mxu0
        %v710 = vadd.f32 %v626, %v709
        %711 = vmatprep.mubr.f32.mxu0 0.0
        %712 = vmatmul.mubr.f32.gmra.mrb[0].mxu0 %v524
        %v713 = vpop.f32.mrb[0].mxu0
        %v714 = vadd.f32 %v622, %v713
        %v715 = vpop.f32.mrb[0].mxu0
        %v716 = vadd.f32 %v626, %v715
        %717 = vmatprep.mubr.f32.mxu0 0.0
        %718 = vmatmul.mubr.f32.gmra.mrb[0].mxu0 %v525
        %v719 = vpop.f32.mrb[0].mxu0
        %v720 = vadd.f32 %v622, %v719
        %v721 = vpop.f32.mrb[0].mxu0
        %v722 = vadd.f32 %v626, %v721
        %723 = vmatprep.mubr.f32.mxu0 0.0
        %724 = vmatmul.mubr.f32.gmra.mrb[0].mxu0 %v526
        %v725 = vpop.f32.mrb[0].mxu0
        %v726 = vadd.f32 %v622, %v725
        %v727 = vpop.f32.mrb[0].mxu0
        %v728 = vadd.f32 %v626, %v727
        %729 = vmatprep.mubr.f32.mxu0 0.0
        %730 = vmatmul.mubr.f32.gmra.mrb[0].mxu0 %v527
        %v731 = vpop.f32.mrb[0].mxu0
        %v732 = vadd.f32 %v622, %v731
        %v733 = vpop.f32.mrb[0].mxu0
        %v734 = vadd.f32 %v626, %v733
        %735 = vmatprep.mubr.f32.mxu0 0.0
        %736 = vmatmul.mubr.f32.gmra.mrb[0].mxu0 %v528
        %v737 = vpop.f32.mrb[0].mxu0
        %v738 = vadd.f32 %v622, %v737
        %v739 = vpop.f32.mrb[0].mxu0
        %v740 = vadd.f32 %v626, %v739
        %741 = vmatprep.mubr.f32.mxu0 0.0
        %742 = vmatmul.mubr.f32.gmra.mrb[0].mxu0 %v529
        %v743 = vpop.f32.mrb[0].mxu0
        %v744 = vadd.f32 %v622, %v743
        %v745 = vpop.f32.mrb[0].mxu0
        %v746 = vadd.f32 %v626, %v745
        %747 = vmatprep.mubr.f32.mxu0 0.0
        %748 = vmatmul.mubr.f32.gmra.mrb[0].mxu0 %v530
        %v749 = vpop.f32.mrb[0].mxu0
        %v750 = vadd.f32 %v622, %v749
        %v751 = vpop.f32.mrb[0].mxu0
        %v752 = vadd.f32 %v626, %v751
        %753 = vmatprep.mubr.f32.mxu0 0.0
        %754 = vmatmul.mubr.f32.gmra.mrb[0].mxu0 %v531
        %v755 = vpop.f32.mrb[0].mxu0
        %v756 = vadd.f32 %v622, %v755
        %v757 = vpop.f32.mrb[0].mxu0
        %v758 = vadd.f32 %v626, %v757
        %759 = vmatprep.mubr.f32.mxu0 0.0
        %760 = vmatmul.mubr.f32.gmra.mrb[0].mxu0 %v532
        %v761 = vpop.f32.mrb[0].mxu0
        %v762 = vadd.f32 %v622, %v761
        %v763 = vpop.f32.mrb[0].mxu0
        %v764 = vadd.f32 %v626, %v763
        %765 = vmatprep.mubr.f32.mxu0 0.0
        %766 = vmatmul.mubr.f32.gmra.mrb[0].mxu0 %v533
        %v767 = vpop.f32.mrb[0].mxu0
        %v768 = vadd.f32 %v622, %v767
        %v769 = vpop.f32.mrb[0].mxu0
        %v770 = vadd.f32 %v626, %v769
        %771 = vmatprep.mubr.f32.mxu0 0.0
        %772 = vmatmul.mubr.f32.gmra.mrb[0].mxu0 %v534
        %v773 = vpop.f32.mrb[0].mxu0
        %v774 = vadd.f32 %v622, %v773
        %v775 = vpop.f32.mrb[0].mxu0
        %v776 = vadd.f32 %v626, %v775
        %777 = vmatprep.mubr.f32.mxu0 0.0
        %778 = vmatmul.mubr.f32.gmra.mrb[0].mxu0 %v535
        %v779 = vpop.f32.mrb[0].mxu0
        %v780 = vadd.f32 %v622, %v779
        %v781 = vpop.f32.mrb[0].mxu0
        %v782 = vadd.f32 %v626, %v781
        %783 = vmatprep.mubr.f32.mxu0 0.0
        %784 = vmatmul.mubr.f32.gmra.mrb[0].mxu0 %v536
        %v785 = vpop.f32.mrb[0].mxu0
        %v786 = vadd.f32 %v622, %v785
        %v787 = vpop.f32.mrb[0].mxu0
        %v788 = vadd.f32 %v626, %v787
        %789 = vmatprep.mubr.f32.mxu0 0.0
        %790 = vmatmul.mubr.f32.gmra.mrb[0].mxu0 %v537
        %v791 = vpop.f32.mrb[0].mxu0
        %v792 = vadd.f32 %v622, %v791
        %v793 = vpop.f32.mrb[0].mxu0
        %v794 = vadd.f32 %v626, %v793
        %795 = vmatprep.mubr.f32.mxu0 0.0
        %796 = vmatmul.mubr.f32.gmra.mrb[0].mxu0 %v538
        %v797 = vpop.f32.mrb[0].mxu0
        %v798 = vadd.f32 %v622, %v797
        %v799 = vpop.f32.mrb[0].mxu0
        %v800 = vadd.f32 %v626, %v799
        %801 = vmatprep.mubr.f32.mxu0 0.0
        %802 = vmatmul.mubr.f32.gmra.mrb[0].mxu0 %v539
        %v803 = vpop.f32.mrb[0].mxu0
        %v804 = vadd.f32 %v622, %v803
        %v805 = vpop.f32.mrb[0].mxu0
        %v806 = vadd.f32 %v626, %v805
        %807 = vmatprep.mubr.f32.mxu0 0.0
        %808 = vmatmul.mubr.f32.gmra.mrb[0].mxu0 %v540
        %v809 = vpop.f32.mrb[0].mxu0
        %v810 = vadd.f32 %v622, %v809
        %v811 = vpop.f32.mrb[0].mxu0
        %v812 = vadd.f32 %v626, %v811
        %813 = vmatprep.mubr.f32.mxu0 0.0
        %814 = vmatmul.mubr.f32.gmra.mrb[0].mxu0 %v541
        %v815 = vpop.f32.mrb[0].mxu0
        %v816 = vadd.f32 %v622, %v815
        %v817 = vpop.f32.mrb[0].mxu0
        %v818 = vadd.f32 %v626, %v817
        %819 = vmatprep.mubr.f32.mxu0 0.0
        %820 = vmatmul.mubr.f32.gmra.mrb[0].mxu0 %v542
        %v821 = vpop.f32.mrb[0].mxu0
        %v822 = vadd.f32 %v622, %v821
        %v823 = vpop.f32.mrb[0].mxu0
        %v824 = vadd.f32 %v626, %v823
        %825 = vmatprep.mubr.f32.mxu0 0.0
        %826 = vmatmul.mubr.f32.gmra.mrb[0].mxu0 %v543
        %v827 = vpop.f32.mrb[0].mxu0
        %v828 = vadd.f32 %v622, %v827
        %v829 = vpop.f32.mrb[0].mxu0
        %v830 = vadd.f32 %v626, %v829
        %831 = vmatprep.mubr.f32.mxu0 0.0
        %832 = vmatmul.mubr.f32.gmra.mrb[0].mxu0 %v544
        %v833 = vpop.f32.mrb[0].mxu0
        %v834 = vadd.f32 %v622, %v833
        %v835 = vpop.f32.mrb[0].mxu0
        %v836 = vadd.f32 %v626, %v835
        %837 = vmatprep.mubr.f32.mxu0 0.0
        %838 = vmatmul.mubr.f32.gmra.mrb[0].mxu0 %v545
        %v839 = vpop.f32.mrb[0].mxu0
        %v840 = vadd.f32 %v622, %v839
        %v841 = vpop.f32.mrb[0].mxu0
        %v842 = vadd.f32 %v626, %v841
        %843 = vmatprep.mubr.f32.mxu0 0.0
        %844 = vmatmul.mubr.f32.gmra.mrb[0].mxu0 %v546
        %v845 = vpop.f32.mrb[0].mxu0
        %v846 = vadd.f32 %v622, %v845
        %v847 = vpop.f32.mrb[0].mxu0
        %v848 = vadd.f32 %v626, %v847
        %849 = vmatprep.mubr.f32.mxu0 0.0
        %850 = vmatmul.mubr.f32.gmra.mrb[0].mxu0 %v547
        %v851 = vpop.f32.mrb[0].mxu0
        %v852 = vadd.f32 %v622, %v851
        %v853 = vpop.f32.mrb[0].mxu0
        %v854 = vadd.f32 %v626, %v853
        %855 = vmatprep.mubr.f32.mxu0 0.0
        %856 = vmatmul.mubr.f32.gmra.mrb[0].mxu0 %v548
        %v857 = vpop.f32.mrb[0].mxu0
        %v858 = vadd.f32 %v622, %v857
        %v859 = vpop.f32.mrb[0].mxu0
        %v860 = vadd.f32 %v626, %v859
        %861 = vmatprep.mubr.f32.mxu0 0.0
        %862 = vmatmul.mubr.f32.gmra.mrb[0].mxu0 %v549
        %v863 = vpop.f32.mrb[0].mxu0
        %v864 = vadd.f32 %v622, %v863
        %v865 = vpop.f32.mrb[0].mxu0
        %v866 = vadd.f32 %v626, %v865
        %867 = vmatprep.mubr.f32.mxu0 0.0
        %868 = vmatmul.mubr.f32.gmra.mrb[0].mxu0 %v550
        %v869 = vpop.f32.mrb[0].mxu0
        %v870 = vadd.f32 %v622, %v869
        %v871 = vpop.f32.mrb[0].mxu0
        %v872 = vadd.f32 %v626, %v871
        %873 = vmatprep.mubr.f32.mxu0 0.0
        %874 = vmatmul.mubr.f32.gmra.mrb[0].mxu0 %v551
        %v875 = vpop.f32.mrb[0].mxu0
        %v876 = vadd.f32 %v622, %v875
        %v877 = vpop.f32.mrb[0].mxu0
        %v878 = vadd.f32 %v626, %v877
        %879 = vmatprep.mubr.f32.mxu0 0.0
        %880 = vmatmul.mubr.f32.gmra.mrb[0].mxu0 %v552
        %v881 = vpop.f32.mrb[0].mxu0
        %v882 = vadd.f32 %v622, %v881
        %v883 = vpop.f32.mrb[0].mxu0
        %v884 = vadd.f32 %v626, %v883
        %885 = vmatprep.mubr.f32.mxu0 0.0
        %886 = vmatmul.mubr.f32.gmra.mrb[0].mxu0 %v553
        %v887 = vpop.f32.mrb[0].mxu0
        %v888 = vadd.f32 %v622, %v887
        %v889 = vpop.f32.mrb[0].mxu0
        %v890 = vadd.f32 %v626, %v889
        %891 = vmatprep.mubr.f32.mxu0 0.0
        %892 = vmatmul.mubr.f32.gmra.mrb[0].mxu0 %v554
        %v893 = vpop.f32.mrb[0].mxu0
        %v894 = vadd.f32 %v622, %v893
        %v895 = vpop.f32.mrb[0].mxu0
        %v896 = vadd.f32 %v626, %v895
        %897 = vmatprep.mubr.f32.mxu0 0.0
        %898 = vmatmul.mubr.f32.gmra.mrb[0].mxu0 %v555
        %v899 = vpop.f32.mrb[0].mxu0
        %v900 = vadd.f32 %v622, %v899
        %v901 = vpop.f32.mrb[0].mxu0
        %v902 = vadd.f32 %v626, %v901
        %903 = vmatprep.mubr.f32.mxu0 0.0
        %904 = vmatmul.mubr.f32.gmra.mrb[0].mxu0 %v556
        %v905 = vpop.f32.mrb[0].mxu0
        %v906 = vadd.f32 %v622, %v905
        %v907 = vpop.f32.mrb[0].mxu0
        %v908 = vadd.f32 %v626, %v907
        %909 = vmatprep.mubr.f32.mxu0 0.0
        %910 = vmatmul.mubr.f32.gmra.mrb[0].mxu0 %v557
        %v911 = vpop.f32.mrb[0].mxu0
        %v912 = vadd.f32 %v622, %v911
        %v913 = vpop.f32.mrb[0].mxu0
        %v914 = vadd.f32 %v626, %v913
        %915 = vmatprep.mubr.f32.mxu0 0.0
        %916 = vmatmul.mubr.f32.gmra.mrb[0].mxu0 %v558
        %v917 = vpop.f32.mrb[0].mxu0
        %v918 = vadd.f32 %v622, %v917
        %v919 = vpop.f32.mrb[0].mxu0
        %v920 = vadd.f32 %v626, %v919
        %921 = vmatprep.mubr.f32.mxu0 0.0
        %922 = vmatmul.mubr.f32.gmra.mrb[0].mxu0 %v559
        %v923 = vpop.f32.mrb[0].mxu0
        %v924 = vadd.f32 %v622, %v923
        %v925 = vpop.f32.mrb[0].mxu0
        %v926 = vadd.f32 %v626, %v925
        %927 = vmatprep.mubr.f32.mxu0 0.0
        %928 = vmatmul.mubr.f32.gmra.mrb[0].mxu0 %v560
        %v929 = vpop.f32.mrb[0].mxu0
        %v930 = vadd.f32 %v622, %v929
        %v931 = vpop.f32.mrb[0].mxu0
        %v932 = vadd.f32 %v626, %v931
        %933 = vmatprep.mubr.f32.mxu0 0.0
        %934 = vmatmul.mubr.f32.gmra.mrb[0].mxu0 %v561
        %v935 = vpop.f32.mrb[0].mxu0
        %v936 = vadd.f32 %v622, %v935
        %v937 = vpop.f32.mrb[0].mxu0
        %v938 = vadd.f32 %v626, %v937
        %939 = vmatprep.mubr.f32.mxu0 0.0
        %940 = vmatmul.mubr.f32.gmra.mrb[0].mxu0 %v562
        %v941 = vpop.f32.mrb[0].mxu0
        %v942 = vadd.f32 %v622, %v941
        %v943 = vpop.f32.mrb[0].mxu0
        %v944 = vadd.f32 %v626, %v943
        %945 = vmatprep.mubr.f32.mxu0 0.0
        %946 = vmatmul.mubr.f32.gmra.mrb[0].mxu0 %v563
        %v947 = vpop.f32.mrb[0].mxu0
        %v948 = vadd.f32 %v622, %v947
        %v949 = vpop.f32.mrb[0].mxu0
        %v950 = vadd.f32 %v626, %v949
        %951 = vmatprep.mubr.f32.mxu0 0.0
        %952 = vmatmul.mubr.f32.gmra.mrb[0].mxu0 %v564
        %v953 = vpop.f32.mrb[0].mxu0
        %v954 = vadd.f32 %v622, %v953
        %v955 = vpop.f32.mrb[0].mxu0
        %v956 = vadd.f32 %v626, %v955
        %957 = vmatprep.mubr.f32.mxu0 0.0
        %958 = vmatmul.mubr.f32.gmra.mrb[0].mxu0 %v565
        %v959 = vpop.f32.mrb[0].mxu0
        %v960 = vadd.f32 %v622, %v959
        %v961 = vpop.f32.mrb[0].mxu0
        %v962 = vadd.f32 %v626, %v961
        %963 = vmatprep.mubr.f32.mxu0 0.0
        %964 = vmatmul.mubr.f32.gmra.mrb[0].mxu0 %v566
        %v965 = vpop.f32.mrb[0].mxu0
        %v966 = vadd.f32 %v622, %v965
        %v967 = vpop.f32.mrb[0].mxu0
        %v968 = vadd.f32 %v626, %v967
        %969 = vmatprep.mubr.f32.mxu0 0.0
        %970 = vmatmul.mubr.f32.gmra.mrb[0].mxu0 %v567
        %v971 = vpop.f32.mrb[0].mxu0
        %v972 = vadd.f32 %v622, %v971
        %v973 = vpop.f32.mrb[0].mxu0
        %v974 = vadd.f32 %v626, %v973
        %975 = vmatprep.mubr.f32.mxu0 0.0
        %976 = vmatmul.mubr.f32.gmra.mrb[0].mxu0 %v568
        %v977 = vpop.f32.mrb[0].mxu0
        %v978 = vadd.f32 %v622, %v977
        %v979 = vpop.f32.mrb[0].mxu0
        %v980 = vadd.f32 %v626, %v979
        %981 = vmatprep.mubr.f32.mxu0 0.0
        %982 = vmatmul.mubr.f32.gmra.mrb[0].mxu0 %v569
        %v983 = vpop.f32.mrb[0].mxu0
        %v984 = vadd.f32 %v622, %v983
        %v985 = vpop.f32.mrb[0].mxu0
        %v986 = vadd.f32 %v626, %v985
        %987 = vmatprep.mubr.f32.mxu0 0.0
        %988 = vmatmul.mubr.f32.gmra.mrb[0].mxu0 %v570
        %v989 = vpop.f32.mrb[0].mxu0
        %v990 = vadd.f32 %v622, %v989
        %v991 = vpop.f32.mrb[0].mxu0
        %v992 = vadd.f32 %v626, %v991
        %993 = vmatprep.mubr.f32.mxu0 0.0
        %994 = vmatmul.mubr.f32.gmra.mrb[0].mxu0 %v571
        %v995 = vpop.f32.mrb[0].mxu0
        %v996 = vadd.f32 %v622, %v995
        %v997 = vpop.f32.mrb[0].mxu0
        %v998 = vadd.f32 %v626, %v997
        %999 = vmatprep.mubr.f32.mxu0 0.0
        %1000 = vmatmul.mubr.f32.gmra.mrb[0].mxu0 %v572
        %v1001 = vpop.f32.mrb[0].mxu0
        %v1002 = vadd.f32 %v622, %v1001
        %v1003 = vpop.f32.mrb[0].mxu0
        %v1004 = vadd.f32 %v626, %v1003
        %1005 = vmatprep.mubr.f32.mxu0 0.0
        %1006 = vmatmul.mubr.f32.gmra.mrb[0].mxu0 %v573
        %v1007 = vpop.f32.mrb[0].mxu0
        %v1008 = vadd.f32 %v622, %v1007
        %v1009 = vpop.f32.mrb[0].mxu0
        %v1010 = vadd.f32 %v626, %v1009
        %1011 = vmatprep.mubr.f32.mxu0 0.0
        %1012 = vmatmul.mubr.f32.gmra.mrb[0].mxu0 %v574
        %v1013 = vpop.f32.mrb[0].mxu0
        %v1014 = vadd.f32 %v622, %v1013
        %v1015 = vpop.f32.mrb[0].mxu0
        %v1016 = vadd.f32 %v626, %v1015
        %1017 = vmatprep.mubr.f32.mxu0 0.0
        %1018 = vmatmul.mubr.f32.gmra.mrb[0].mxu0 %v575
        %v1019 = vpop.f32.mrb[0].mxu0
        %v1020 = vadd.f32 %v622, %v1019
        %v1021 = vpop.f32.mrb[0].mxu0
        %v1022 = vadd.f32 %v626, %v1021
        %1023 = vmatprep.mubr.f32.mxu0 0.0
        %1024 = vmatmul.mubr.f32.gmra.mrb[0].mxu0 %v576
        %v1025 = vpop.f32.mrb[0].mxu0
        %v1026 = vadd.f32 %v622, %v1025
        %v1027 = vpop.f32.mrb[0].mxu0
        %v1028 = vadd.f32 %v626, %v1027
        %1029 = vmatprep.mubr.f32.mxu0 0.0
        %1030 = vmatmul.mubr.f32.gmra.mrb[0].mxu0 %v577
        %v1031 = vpop.f32.mrb[0].mxu0
        %v1032 = vadd.f32 %v622, %v1031
        %v1033 = vpop.f32.mrb[0].mxu0
        %v1034 = vadd.f32 %v626, %v1033
        %1035 = vmatprep.mubr.f32.mxu0 0.0
        %1036 = vmatmul.mubr.f32.gmra.mrb[0].mxu0 %v578
        %v1037 = vpop.f32.mrb[0].mxu0
        %v1038 = vadd.f32 %v622, %v1037
        %v1039 = vpop.f32.mrb[0].mxu0
        %v1040 = vadd.f32 %v626, %v1039
        %1041 = vmatprep.mubr.f32.mxu0 0.0
        %1042 = vmatmul.mubr.f32.gmra.mrb[0].mxu0 %v579
        %v1043 = vpop.f32.mrb[0].mxu0
        %v1044 = vadd.f32 %v622, %v1043
        %v1045 = vpop.f32.mrb[0].mxu0
        %v1046 = vadd.f32 %v626, %v1045
        %1047 = vmatprep.mubr.f32.mxu0 0.0
        %1048 = vmatmul.mubr.f32.gmra.mrb[0].mxu0 %v580
        %v1049 = vpop.f32.mrb[0].mxu0
        %v1050 = vadd.f32 %v622, %v1049
        %v1051 = vpop.f32.mrb[0].mxu0
        %v1052 = vadd.f32 %v626, %v1051
        %1053 = vmatprep.mubr.f32.mxu0 0.0
        %1054 = vmatmul.mubr.f32.gmra.mrb[0].mxu0 %v581
        %v1055 = vpop.f32.mrb[0].mxu0
        %v1056 = vadd.f32 %v622, %v1055
        %v1057 = vpop.f32.mrb[0].mxu0
        %v1058 = vadd.f32 %v626, %v1057
        %1059 = vmatprep.mubr.f32.mxu0 0.0
        %1060 = vmatmul.mubr.f32.gmra.mrb[0].mxu0 %v582
        %v1061 = vpop.f32.mrb[0].mxu0
        %v1062 = vadd.f32 %v622, %v1061
        %v1063 = vpop.f32.mrb[0].mxu0
        %v1064 = vadd.f32 %v626, %v1063
        %1065 = vmatprep.mubr.f32.mxu0 0.0
        %1066 = vmatmul.mubr.f32.gmra.mrb[0].mxu0 %v583
        %v1067 = vpop.f32.mrb[0].mxu0
        %v1068 = vadd.f32 %v622, %v1067
        %v1069 = vpop.f32.mrb[0].mxu0
        %v1070 = vadd.f32 %v626, %v1069
        %1071 = vmatprep.mubr.f32.mxu0 0.0
        %1072 = vmatmul.mubr.f32.gmra.mrb[0].mxu0 %v584
        %v1073 = vpop.f32.mrb[0].mxu0
        %v1074 = vadd.f32 %v622, %v1073
        %v1075 = vpop.f32.mrb[0].mxu0
        %v1076 = vadd.f32 %v626, %v1075
        %1077 = vdwg.mxu0
        %v1078 = vmax.f32 %v696, 0.0
        %v1079 = vmax.f32 %v698, 0.0
        %v1080 = vmax.f32 %v702, 0.0
        %v1081 = vmax.f32 %v704, 0.0
        %v1082 = vmax.f32 %v708, 0.0
        %v1083 = vmax.f32 %v710, 0.0
        %v1084 = vmax.f32 %v714, 0.0
        %v1085 = vmax.f32 %v716, 0.0
        %v1086 = vmax.f32 %v720, 0.0
        %v1087 = vmax.f32 %v722, 0.0
        %v1088 = vmax.f32 %v726, 0.0
        %v1089 = vmax.f32 %v728, 0.0
        %v1090 = vmax.f32 %v732, 0.0
        %v1091 = vmax.f32 %v734, 0.0
        %v1092 = vmax.f32 %v738, 0.0
        %v1093 = vmax.f32 %v740, 0.0
        %v1094 = vmax.f32 %v744, 0.0
        %v1095 = vmax.f32 %v746, 0.0
        %v1096 = vmax.f32 %v750, 0.0
        %v1097 = vmax.f32 %v752, 0.0
        %v1098 = vmax.f32 %v756, 0.0
        %v1099 = vmax.f32 %v758, 0.0
        %v1100 = vmax.f32 %v762, 0.0
        %v1101 = vmax.f32 %v764, 0.0
        %v1102 = vmax.f32 %v768, 0.0
        %v1103 = vmax.f32 %v770, 0.0
        %v1104 = vmax.f32 %v774, 0.0
        %v1105 = vmax.f32 %v776, 0.0
        %v1106 = vmax.f32 %v780, 0.0
        %v1107 = vmax.f32 %v782, 0.0
        %v1108 = vmax.f32 %v786, 0.0
        %v1109 = vmax.f32 %v788, 0.0
        %v1110 = vmax.f32 %v792, 0.0
        %v1111 = vmax.f32 %v794, 0.0
        %v1112 = vmax.f32 %v798, 0.0
        %v1113 = vmax.f32 %v800, 0.0
        %v1114 = vmax.f32 %v804, 0.0
        %v1115 = vmax.f32 %v806, 0.0
        %v1116 = vmax.f32 %v810, 0.0
        %v1117 = vmax.f32 %v812, 0.0
        %v1118 = vmax.f32 %v816, 0.0
        %v1119 = vmax.f32 %v818, 0.0
        %v1120 = vmax.f32 %v822, 0.0
        %v1121 = vmax.f32 %v824, 0.0
        %v1122 = vmax.f32 %v828, 0.0
        %v1123 = vmax.f32 %v830, 0.0
        %v1124 = vmax.f32 %v834, 0.0
        %v1125 = vmax.f32 %v836, 0.0
        %v1126 = vmax.f32 %v840, 0.0
        %v1127 = vmax.f32 %v842, 0.0
        %v1128 = vmax.f32 %v846, 0.0
        %v1129 = vmax.f32 %v848, 0.0
        %v1130 = vmax.f32 %v852, 0.0
        %v1131 = vmax.f32 %v854, 0.0
        %v1132 = vmax.f32 %v858, 0.0
        %v1133 = vmax.f32 %v860, 0.0
        %v1134 = vmax.f32 %v864, 0.0
        %v1135 = vmax.f32 %v866, 0.0
        %v1136 = vmax.f32 %v870, 0.0
        %v1137 = vmax.f32 %v872, 0.0
        %v1138 = vmax.f32 %v876, 0.0
        %v1139 = vmax.f32 %v878, 0.0
        %v1140 = vmax.f32 %v882, 0.0
        %v1141 = vmax.f32 %v884, 0.0
        %v1142 = vmax.f32 %v888, 0.0
        %v1143 = vmax.f32 %v890, 0.0
        %v1144 = vmax.f32 %v894, 0.0
        %v1145 = vmax.f32 %v896, 0.0
        %v1146 = vmax.f32 %v900, 0.0
        %v1147 = vmax.f32 %v902, 0.0
        %v1148 = vmax.f32 %v906, 0.0
        %v1149 = vmax.f32 %v908, 0.0
        %v1150 = vmax.f32 %v912, 0.0
        %v1151 = vmax.f32 %v914, 0.0
        %v1152 = vmax.f32 %v918, 0.0
        %v1153 = vmax.f32 %v920, 0.0
        %v1154 = vmax.f32 %v924, 0.0
        %v1155 = vmax.f32 %v926, 0.0
        %v1156 = vmax.f32 %v930, 0.0
        %v1157 = vmax.f32 %v932, 0.0
        %v1158 = vmax.f32 %v936, 0.0
        %v1159 = vmax.f32 %v938, 0.0
        %v1160 = vmax.f32 %v942, 0.0
        %v1161 = vmax.f32 %v944, 0.0
        %v1162 = vmax.f32 %v948, 0.0
        %v1163 = vmax.f32 %v950, 0.0
        %v1164 = vmax.f32 %v954, 0.0
        %v1165 = vmax.f32 %v956, 0.0
        %v1166 = vmax.f32 %v960, 0.0
        %v1167 = vmax.f32 %v962, 0.0
        %v1168 = vmax.f32 %v966, 0.0
        %v1169 = vmax.f32 %v968, 0.0
        %v1170 = vmax.f32 %v972, 0.0
        %v1171 = vmax.f32 %v974, 0.0
        %v1172 = vmax.f32 %v978, 0.0
        %v1173 = vmax.f32 %v980, 0.0
        %v1174 = vmax.f32 %v984, 0.0
        %v1175 = vmax.f32 %v986, 0.0
        %v1176 = vmax.f32 %v990, 0.0
        %v1177 = vmax.f32 %v992, 0.0
        %v1178 = vmax.f32 %v996, 0.0
        %v1179 = vmax.f32 %v998, 0.0
        %v1180 = vmax.f32 %v1002, 0.0
        %v1181 = vmax.f32 %v1004, 0.0
        %v1182 = vmax.f32 %v1008, 0.0
        %v1183 = vmax.f32 %v1010, 0.0
        %v1184 = vmax.f32 %v1014, 0.0
        %v1185 = vmax.f32 %v1016, 0.0
        %v1186 = vmax.f32 %v1020, 0.0
        %v1187 = vmax.f32 %v1022, 0.0
        %v1188 = vmax.f32 %v1026, 0.0
        %v1189 = vmax.f32 %v1028, 0.0
        %v1190 = vmax.f32 %v1032, 0.0
        %v1191 = vmax.f32 %v1034, 0.0
        %v1192 = vmax.f32 %v1038, 0.0
        %v1193 = vmax.f32 %v1040, 0.0
        %v1194 = vmax.f32 %v1044, 0.0
        %v1195 = vmax.f32 %v1046, 0.0
        %v1196 = vmax.f32 %v1050, 0.0
        %v1197 = vmax.f32 %v1052, 0.0
        %v1198 = vmax.f32 %v1056, 0.0
        %v1199 = vmax.f32 %v1058, 0.0
        %v1200 = vmax.f32 %v1062, 0.0
        %v1201 = vmax.f32 %v1064, 0.0
        %v1202 = vmax.f32 %v1068, 0.0
        %v1203 = vmax.f32 %v1070, 0.0
        %v1204 = vmax.f32 %v1074, 0.0
        %v1205 = vmax.f32 %v1076, 0.0
        %v1206 = vld [vmem:[#allocation7] sm:$0xff]
        %v1207 = vld [vmem:[#allocation7 + $0x8] sm:$0xff]
        %v1208 = vld [vmem:[#allocation7 + $0x10] sm:$0xff]
        %v1209 = vld [vmem:[#allocation7 + $0x18] sm:$0xff]
        %v1210 = vld [vmem:[#allocation7 + $0x20] sm:$0xff]
        %v1211 = vld [vmem:[#allocation7 + $0x28] sm:$0xff]
        %v1212 = vld [vmem:[#allocation7 + $0x30] sm:$0xff]
        %v1213 = vld [vmem:[#allocation7 + $0x38] sm:$0xff]
        %v1214 = vld [vmem:[#allocation7 + $0x40] sm:$0xff]
        %v1215 = vld [vmem:[#allocation7 + $0x48] sm:$0xff]
        %v1216 = vld [vmem:[#allocation7 + $0x50] sm:$0xff]
        %v1217 = vld [vmem:[#allocation7 + $0x58] sm:$0xff]
        %v1218 = vld [vmem:[#allocation7 + $0x60] sm:$0xff]
        %v1219 = vld [vmem:[#allocation7 + $0x68] sm:$0xff]
        %v1220 = vld [vmem:[#allocation7 + $0x70] sm:$0xff]
        %v1221 = vld [vmem:[#allocation7 + $0x78] sm:$0xff]
        %v1222 = vld [vmem:[#allocation7 + $0x80] sm:$0xff]
        %v1223 = vld [vmem:[#allocation7 + $0x88] sm:$0xff]
        %v1224 = vld [vmem:[#allocation7 + $0x90] sm:$0xff]
        %v1225 = vld [vmem:[#allocation7 + $0x98] sm:$0xff]
        %v1226 = vld [vmem:[#allocation7 + $0xa0] sm:$0xff]
        %v1227 = vld [vmem:[#allocation7 + $0xa8] sm:$0xff]
        %v1228 = vld [vmem:[#allocation7 + $0xb0] sm:$0xff]
        %v1229 = vld [vmem:[#allocation7 + $0xb8] sm:$0xff]
        %v1230 = vld [vmem:[#allocation7 + $0xc0] sm:$0xff]
        %v1231 = vld [vmem:[#allocation7 + $0xc8] sm:$0xff]
        %v1232 = vld [vmem:[#allocation7 + $0xd0] sm:$0xff]
        %v1233 = vld [vmem:[#allocation7 + $0xd8] sm:$0xff]
        %v1234 = vld [vmem:[#allocation7 + $0xe0] sm:$0xff]
        %v1235 = vld [vmem:[#allocation7 + $0xe8] sm:$0xff]
        %v1236 = vld [vmem:[#allocation7 + $0xf0] sm:$0xff]
        %v1237 = vld [vmem:[#allocation7 + $0xf8] sm:$0xff]
        %v1238 = vld [vmem:[#allocation7 + $0x100] sm:$0xff]
        %v1239 = vld [vmem:[#allocation7 + $0x108] sm:$0xff]
        %v1240 = vld [vmem:[#allocation7 + $0x110] sm:$0xff]
        %v1241 = vld [vmem:[#allocation7 + $0x118] sm:$0xff]
        %v1242 = vld [vmem:[#allocation7 + $0x120] sm:$0xff]
        %v1243 = vld [vmem:[#allocation7 + $0x128] sm:$0xff]
        %v1244 = vld [vmem:[#allocation7 + $0x130] sm:$0xff]
        %v1245 = vld [vmem:[#allocation7 + $0x138] sm:$0xff]
        %v1246 = vld [vmem:[#allocation7 + $0x140] sm:$0xff]
        %v1247 = vld [vmem:[#allocation7 + $0x148] sm:$0xff]
        %v1248 = vld [vmem:[#allocation7 + $0x150] sm:$0xff]
        %v1249 = vld [vmem:[#allocation7 + $0x158] sm:$0xff]
        %v1250 = vld [vmem:[#allocation7 + $0x160] sm:$0xff]
        %v1251 = vld [vmem:[#allocation7 + $0x168] sm:$0xff]
        %v1252 = vld [vmem:[#allocation7 + $0x170] sm:$0xff]
        %v1253 = vld [vmem:[#allocation7 + $0x178] sm:$0xff]
        %v1254 = vld [vmem:[#allocation7 + $0x180] sm:$0xff]
        %v1255 = vld [vmem:[#allocation7 + $0x188] sm:$0xff]
        %v1256 = vld [vmem:[#allocation7 + $0x190] sm:$0xff]
        %v1257 = vld [vmem:[#allocation7 + $0x198] sm:$0xff]
        %v1258 = vld [vmem:[#allocation7 + $0x1a0] sm:$0xff]
        %v1259 = vld [vmem:[#allocation7 + $0x1a8] sm:$0xff]
        %v1260 = vld [vmem:[#allocation7 + $0x1b0] sm:$0xff]
        %v1261 = vld [vmem:[#allocation7 + $0x1b8] sm:$0xff]
        %v1262 = vld [vmem:[#allocation7 + $0x1c0] sm:$0xff]
        %v1263 = vld [vmem:[#allocation7 + $0x1c8] sm:$0xff]
        %v1264 = vld [vmem:[#allocation7 + $0x1d0] sm:$0xff]
        %v1265 = vld [vmem:[#allocation7 + $0x1d8] sm:$0xff]
        %v1266 = vld [vmem:[#allocation7 + $0x1e0] sm:$0xff]
        %v1267 = vld [vmem:[#allocation7 + $0x1e8] sm:$0xff]
        %v1268 = vld [vmem:[#allocation7 + $0x1f0] sm:$0xff]
        %v1269 = vld [vmem:[#allocation7 + $0x1f8] sm:$0xff]
        %v1270 = vld [vmem:[%s4] sm:$0x3]
        %v1272 = vlaneseq
        %v1273 = vshrl.u32 %v1272, 7
        %v1274 = vsub.s32 0, %v1273
        %v1275 = vrot.slane %v1270, %v1274
        %v1276 = vlaneseq
        %v1277 = vshrl.u32 %v1276, 7
        %v1278 = vsub.s32 1, %v1277
        %v1279 = vrot.slane %v1270, %v1278
        %1282 = vmatprep.subr.mxu0 %v1207
        %1283 = vmatpush1.msra.mxu0 %v1206
        %1284 = vmatprep.subr.mxu0 %v1209
        %1285 = vmatpush1.msra.mxu0 %v1208
        %1286 = vmatprep.subr.mxu0 %v1211
        %1287 = vmatpush1.msra.mxu0 %v1210
        %1288 = vmatprep.subr.mxu0 %v1213
        %1289 = vmatpush1.msra.mxu0 %v1212
        %1290 = vmatprep.subr.mxu0 %v1215
        %1291 = vmatpush1.msra.mxu0 %v1214
        %1292 = vmatprep.subr.mxu0 %v1217
        %1293 = vmatpush1.msra.mxu0 %v1216
        %1294 = vmatprep.subr.mxu0 %v1219
        %1295 = vmatpush1.msra.mxu0 %v1218
        %1296 = vmatprep.subr.mxu0 %v1221
        %1297 = vmatpush1.msra.mxu0 %v1220
        %1298 = vmatprep.subr.mxu0 %v1223
        %1299 = vmatpush1.msra.mxu0 %v1222
        %1300 = vmatprep.subr.mxu0 %v1225
        %1301 = vmatpush1.msra.mxu0 %v1224
        %1302 = vmatprep.subr.mxu0 %v1227
        %1303 = vmatpush1.msra.mxu0 %v1226
        %1304 = vmatprep.subr.mxu0 %v1229
        %1305 = vmatpush1.msra.mxu0 %v1228
        %1306 = vmatprep.subr.mxu0 %v1231
        %1307 = vmatpush1.msra.mxu0 %v1230
        %1308 = vmatprep.subr.mxu0 %v1233
        %1309 = vmatpush1.msra.mxu0 %v1232
        %1310 = vmatprep.subr.mxu0 %v1235
        %1311 = vmatpush1.msra.mxu0 %v1234
        %1312 = vmatprep.subr.mxu0 %v1237
        %1313 = vmatpush1.msra.mxu0 %v1236
        %1314 = vmatprep.subr.mxu0 %v1239
        %1315 = vmatpush1.msra.mxu0 %v1238
        %1316 = vmatprep.subr.mxu0 %v1241
        %1317 = vmatpush1.msra.mxu0 %v1240
        %1318 = vmatprep.subr.mxu0 %v1243
        %1319 = vmatpush1.msra.mxu0 %v1242
        %1320 = vmatprep.subr.mxu0 %v1245
        %1321 = vmatpush1.msra.mxu0 %v1244
        %1322 = vmatprep.subr.mxu0 %v1247
        %1323 = vmatpush1.msra.mxu0 %v1246
        %1324 = vmatprep.subr.mxu0 %v1249
        %1325 = vmatpush1.msra.mxu0 %v1248
        %1326 = vmatprep.subr.mxu0 %v1251
        %1327 = vmatpush1.msra.mxu0 %v1250
        %1328 = vmatprep.subr.mxu0 %v1253
        %1329 = vmatpush1.msra.mxu0 %v1252
        %1330 = vmatprep.subr.mxu0 %v1255
        %1331 = vmatpush1.msra.mxu0 %v1254
        %1332 = vmatprep.subr.mxu0 %v1257
        %1333 = vmatpush1.msra.mxu0 %v1256
        %1334 = vmatprep.subr.mxu0 %v1259
        %1335 = vmatpush1.msra.mxu0 %v1258
        %1336 = vmatprep.subr.mxu0 %v1261
        %1337 = vmatpush1.msra.mxu0 %v1260
        %1338 = vmatprep.subr.mxu0 %v1263
        %1339 = vmatpush1.msra.mxu0 %v1262
        %1340 = vmatprep.subr.mxu0 %v1265
        %1341 = vmatpush1.msra.mxu0 %v1264
        %1342 = vmatprep.subr.mxu0 %v1267
        %1343 = vmatpush1.msra.mxu0 %v1266
        %1344 = vmatprep.subr.mxu0 %v1269
        %1345 = vmatpush1.msra.mxu0 %v1268
        %1346 = vmatprep.mubr.f32.mxu0 %v1079
        %1347 = vmatmul.mubr.f32.gmra.mrb[0].mxu0 %v1078
        %v1348 = vpop.f32.mrb[0].mxu0
        %v1349 = vadd.f32 %v1275, %v1348
        %v1350 = vpop.f32.mrb[0].mxu0
        %v1351 = vadd.f32 %v1279, %v1350
        %1352 = vmatprep.mubr.f32.mxu0 %v1081
        %1353 = vmatmul.mubr.f32.gmra.mrb[0].mxu0 %v1080
        %v1354 = vpop.f32.mrb[0].mxu0
        %v1355 = vadd.f32 %v1275, %v1354
        %v1356 = vpop.f32.mrb[0].mxu0
        %v1357 = vadd.f32 %v1279, %v1356
        %1358 = vmatprep.mubr.f32.mxu0 %v1083
        %1359 = vmatmul.mubr.f32.gmra.mrb[0].mxu0 %v1082
        %v1360 = vpop.f32.mrb[0].mxu0
        %v1361 = vadd.f32 %v1275, %v1360
        %v1362 = vpop.f32.mrb[0].mxu0
        %v1363 = vadd.f32 %v1279, %v1362
        %1364 = vmatprep.mubr.f32.mxu0 %v1085
        %1365 = vmatmul.mubr.f32.gmra.mrb[0].mxu0 %v1084
        %v1366 = vpop.f32.mrb[0].mxu0
        %v1367 = vadd.f32 %v1275, %v1366
        %v1368 = vpop.f32.mrb[0].mxu0
        %v1369 = vadd.f32 %v1279, %v1368
        %1370 = vmatprep.mubr.f32.mxu0 %v1087
        %1371 = vmatmul.mubr.f32.gmra.mrb[0].mxu0 %v1086
        %v1372 = vpop.f32.mrb[0].mxu0
        %v1373 = vadd.f32 %v1275, %v1372
        %v1374 = vpop.f32.mrb[0].mxu0
        %v1375 = vadd.f32 %v1279, %v1374
        %1376 = vmatprep.mubr.f32.mxu0 %v1089
        %1377 = vmatmul.mubr.f32.gmra.mrb[0].mxu0 %v1088
        %v1378 = vpop.f32.mrb[0].mxu0
        %v1379 = vadd.f32 %v1275, %v1378
        %v1380 = vpop.f32.mrb[0].mxu0
        %v1381 = vadd.f32 %v1279, %v1380
        %1382 = vmatprep.mubr.f32.mxu0 %v1091
        %1383 = vmatmul.mubr.f32.gmra.mrb[0].mxu0 %v1090
        %v1384 = vpop.f32.mrb[0].mxu0
        %v1385 = vadd.f32 %v1275, %v1384
        %v1386 = vpop.f32.mrb[0].mxu0
        %v1387 = vadd.f32 %v1279, %v1386
        %1388 = vmatprep.mubr.f32.mxu0 %v1093
        %1389 = vmatmul.mubr.f32.gmra.mrb[0].mxu0 %v1092
        %v1390 = vpop.f32.mrb[0].mxu0
        %v1391 = vadd.f32 %v1275, %v1390
        %v1392 = vpop.f32.mrb[0].mxu0
        %v1393 = vadd.f32 %v1279, %v1392
        %1394 = vmatprep.mubr.f32.mxu0 %v1095
        %1395 = vmatmul.mubr.f32.gmra.mrb[0].mxu0 %v1094
        %v1396 = vpop.f32.mrb[0].mxu0
        %v1397 = vadd.f32 %v1275, %v1396
        %v1398 = vpop.f32.mrb[0].mxu0
        %v1399 = vadd.f32 %v1279, %v1398
        %1400 = vmatprep.mubr.f32.mxu0 %v1097
        %1401 = vmatmul.mubr.f32.gmra.mrb[0].mxu0 %v1096
        %v1402 = vpop.f32.mrb[0].mxu0
        %v1403 = vadd.f32 %v1275, %v1402
        %v1404 = vpop.f32.mrb[0].mxu0
        %v1405 = vadd.f32 %v1279, %v1404
        %1406 = vmatprep.mubr.f32.mxu0 %v1099
        %1407 = vmatmul.mubr.f32.gmra.mrb[0].mxu0 %v1098
        %v1408 = vpop.f32.mrb[0].mxu0
        %v1409 = vadd.f32 %v1275, %v1408
        %v1410 = vpop.f32.mrb[0].mxu0
        %v1411 = vadd.f32 %v1279, %v1410
        %1412 = vmatprep.mubr.f32.mxu0 %v1101
        %1413 = vmatmul.mubr.f32.gmra.mrb[0].mxu0 %v1100
        %v1414 = vpop.f32.mrb[0].mxu0
        %v1415 = vadd.f32 %v1275, %v1414
        %v1416 = vpop.f32.mrb[0].mxu0
        %v1417 = vadd.f32 %v1279, %v1416
        %1418 = vmatprep.mubr.f32.mxu0 %v1103
        %1419 = vmatmul.mubr.f32.gmra.mrb[0].mxu0 %v1102
        %v1420 = vpop.f32.mrb[0].mxu0
        %v1421 = vadd.f32 %v1275, %v1420
        %v1422 = vpop.f32.mrb[0].mxu0
        %v1423 = vadd.f32 %v1279, %v1422
        %1424 = vmatprep.mubr.f32.mxu0 %v1105
        %1425 = vmatmul.mubr.f32.gmra.mrb[0].mxu0 %v1104
        %v1426 = vpop.f32.mrb[0].mxu0
        %v1427 = vadd.f32 %v1275, %v1426
        %v1428 = vpop.f32.mrb[0].mxu0
        %v1429 = vadd.f32 %v1279, %v1428
        %1430 = vmatprep.mubr.f32.mxu0 %v1107
        %1431 = vmatmul.mubr.f32.gmra.mrb[0].mxu0 %v1106
        %v1432 = vpop.f32.mrb[0].mxu0
        %v1433 = vadd.f32 %v1275, %v1432
        %v1434 = vpop.f32.mrb[0].mxu0
        %v1435 = vadd.f32 %v1279, %v1434
        %1436 = vmatprep.mubr.f32.mxu0 %v1109
        %1437 = vmatmul.mubr.f32.gmra.mrb[0].mxu0 %v1108
        %v1438 = vpop.f32.mrb[0].mxu0
        %v1439 = vadd.f32 %v1275, %v1438
        %v1440 = vpop.f32.mrb[0].mxu0
        %v1441 = vadd.f32 %v1279, %v1440
        %1442 = vmatprep.mubr.f32.mxu0 %v1111
        %1443 = vmatmul.mubr.f32.gmra.mrb[0].mxu0 %v1110
        %v1444 = vpop.f32.mrb[0].mxu0
        %v1445 = vadd.f32 %v1275, %v1444
        %v1446 = vpop.f32.mrb[0].mxu0
        %v1447 = vadd.f32 %v1279, %v1446
        %1448 = vmatprep.mubr.f32.mxu0 %v1113
        %1449 = vmatmul.mubr.f32.gmra.mrb[0].mxu0 %v1112
        %v1450 = vpop.f32.mrb[0].mxu0
        %v1451 = vadd.f32 %v1275, %v1450
        %v1452 = vpop.f32.mrb[0].mxu0
        %v1453 = vadd.f32 %v1279, %v1452
        %1454 = vmatprep.mubr.f32.mxu0 %v1115
        %1455 = vmatmul.mubr.f32.gmra.mrb[0].mxu0 %v1114
        %v1456 = vpop.f32.mrb[0].mxu0
        %v1457 = vadd.f32 %v1275, %v1456
        %v1458 = vpop.f32.mrb[0].mxu0
        %v1459 = vadd.f32 %v1279, %v1458
        %1460 = vmatprep.mubr.f32.mxu0 %v1117
        %1461 = vmatmul.mubr.f32.gmra.mrb[0].mxu0 %v1116
        %v1462 = vpop.f32.mrb[0].mxu0
        %v1463 = vadd.f32 %v1275, %v1462
        %v1464 = vpop.f32.mrb[0].mxu0
        %v1465 = vadd.f32 %v1279, %v1464
        %1466 = vmatprep.mubr.f32.mxu0 %v1119
        %1467 = vmatmul.mubr.f32.gmra.mrb[0].mxu0 %v1118
        %v1468 = vpop.f32.mrb[0].mxu0
        %v1469 = vadd.f32 %v1275, %v1468
        %v1470 = vpop.f32.mrb[0].mxu0
        %v1471 = vadd.f32 %v1279, %v1470
        %1472 = vmatprep.mubr.f32.mxu0 %v1121
        %1473 = vmatmul.mubr.f32.gmra.mrb[0].mxu0 %v1120
        %v1474 = vpop.f32.mrb[0].mxu0
        %v1475 = vadd.f32 %v1275, %v1474
        %v1476 = vpop.f32.mrb[0].mxu0
        %v1477 = vadd.f32 %v1279, %v1476
        %1478 = vmatprep.mubr.f32.mxu0 %v1123
        %1479 = vmatmul.mubr.f32.gmra.mrb[0].mxu0 %v1122
        %v1480 = vpop.f32.mrb[0].mxu0
        %v1481 = vadd.f32 %v1275, %v1480
        %v1482 = vpop.f32.mrb[0].mxu0
        %v1483 = vadd.f32 %v1279, %v1482
        %1484 = vmatprep.mubr.f32.mxu0 %v1125
        %1485 = vmatmul.mubr.f32.gmra.mrb[0].mxu0 %v1124
        %v1486 = vpop.f32.mrb[0].mxu0
        %v1487 = vadd.f32 %v1275, %v1486
        %v1488 = vpop.f32.mrb[0].mxu0
        %v1489 = vadd.f32 %v1279, %v1488
        %1490 = vmatprep.mubr.f32.mxu0 %v1127
        %1491 = vmatmul.mubr.f32.gmra.mrb[0].mxu0 %v1126
        %v1492 = vpop.f32.mrb[0].mxu0
        %v1493 = vadd.f32 %v1275, %v1492
        %v1494 = vpop.f32.mrb[0].mxu0
        %v1495 = vadd.f32 %v1279, %v1494
        %1496 = vmatprep.mubr.f32.mxu0 %v1129
        %1497 = vmatmul.mubr.f32.gmra.mrb[0].mxu0 %v1128
        %v1498 = vpop.f32.mrb[0].mxu0
        %v1499 = vadd.f32 %v1275, %v1498
        %v1500 = vpop.f32.mrb[0].mxu0
        %v1501 = vadd.f32 %v1279, %v1500
        %1502 = vmatprep.mubr.f32.mxu0 %v1131
        %1503 = vmatmul.mubr.f32.gmra.mrb[0].mxu0 %v1130
        %v1504 = vpop.f32.mrb[0].mxu0
        %v1505 = vadd.f32 %v1275, %v1504
        %v1506 = vpop.f32.mrb[0].mxu0
        %v1507 = vadd.f32 %v1279, %v1506
        %1508 = vmatprep.mubr.f32.mxu0 %v1133
        %1509 = vmatmul.mubr.f32.gmra.mrb[0].mxu0 %v1132
        %v1510 = vpop.f32.mrb[0].mxu0
        %v1511 = vadd.f32 %v1275, %v1510
        %v1512 = vpop.f32.mrb[0].mxu0
        %v1513 = vadd.f32 %v1279, %v1512
        %1514 = vmatprep.mubr.f32.mxu0 %v1135
        %1515 = vmatmul.mubr.f32.gmra.mrb[0].mxu0 %v1134
        %v1516 = vpop.f32.mrb[0].mxu0
        %v1517 = vadd.f32 %v1275, %v1516
        %v1518 = vpop.f32.mrb[0].mxu0
        %v1519 = vadd.f32 %v1279, %v1518
        %1520 = vmatprep.mubr.f32.mxu0 %v1137
        %1521 = vmatmul.mubr.f32.gmra.mrb[0].mxu0 %v1136
        %v1522 = vpop.f32.mrb[0].mxu0
        %v1523 = vadd.f32 %v1275, %v1522
        %v1524 = vpop.f32.mrb[0].mxu0
        %v1525 = vadd.f32 %v1279, %v1524
        %1526 = vmatprep.mubr.f32.mxu0 %v1139
        %1527 = vmatmul.mubr.f32.gmra.mrb[0].mxu0 %v1138
        %v1528 = vpop.f32.mrb[0].mxu0
        %v1529 = vadd.f32 %v1275, %v1528
        %v1530 = vpop.f32.mrb[0].mxu0
        %v1531 = vadd.f32 %v1279, %v1530
        %1532 = vmatprep.mubr.f32.mxu0 %v1141
        %1533 = vmatmul.mubr.f32.gmra.mrb[0].mxu0 %v1140
        %v1534 = vpop.f32.mrb[0].mxu0
        %v1535 = vadd.f32 %v1275, %v1534
        %v1536 = vpop.f32.mrb[0].mxu0
        %v1537 = vadd.f32 %v1279, %v1536
        %1538 = vmatprep.mubr.f32.mxu0 %v1143
        %1539 = vmatmul.mubr.f32.gmra.mrb[0].mxu0 %v1142
        %v1540 = vpop.f32.mrb[0].mxu0
        %v1541 = vadd.f32 %v1275, %v1540
        %v1542 = vpop.f32.mrb[0].mxu0
        %v1543 = vadd.f32 %v1279, %v1542
        %1544 = vmatprep.mubr.f32.mxu0 %v1145
        %1545 = vmatmul.mubr.f32.gmra.mrb[0].mxu0 %v1144
        %v1546 = vpop.f32.mrb[0].mxu0
        %v1547 = vadd.f32 %v1275, %v1546
        %v1548 = vpop.f32.mrb[0].mxu0
        %v1549 = vadd.f32 %v1279, %v1548
        %1550 = vmatprep.mubr.f32.mxu0 %v1147
        %1551 = vmatmul.mubr.f32.gmra.mrb[0].mxu0 %v1146
        %v1552 = vpop.f32.mrb[0].mxu0
        %v1553 = vadd.f32 %v1275, %v1552
        %v1554 = vpop.f32.mrb[0].mxu0
        %v1555 = vadd.f32 %v1279, %v1554
        %1556 = vmatprep.mubr.f32.mxu0 %v1149
        %1557 = vmatmul.mubr.f32.gmra.mrb[0].mxu0 %v1148
        %v1558 = vpop.f32.mrb[0].mxu0
        %v1559 = vadd.f32 %v1275, %v1558
        %v1560 = vpop.f32.mrb[0].mxu0
        %v1561 = vadd.f32 %v1279, %v1560
        %1562 = vmatprep.mubr.f32.mxu0 %v1151
        %1563 = vmatmul.mubr.f32.gmra.mrb[0].mxu0 %v1150
        %v1564 = vpop.f32.mrb[0].mxu0
        %v1565 = vadd.f32 %v1275, %v1564
        %v1566 = vpop.f32.mrb[0].mxu0
        %v1567 = vadd.f32 %v1279, %v1566
        %1568 = vmatprep.mubr.f32.mxu0 %v1153
        %1569 = vmatmul.mubr.f32.gmra.mrb[0].mxu0 %v1152
        %v1570 = vpop.f32.mrb[0].mxu0
        %v1571 = vadd.f32 %v1275, %v1570
        %v1572 = vpop.f32.mrb[0].mxu0
        %v1573 = vadd.f32 %v1279, %v1572
        %1574 = vmatprep.mubr.f32.mxu0 %v1155
        %1575 = vmatmul.mubr.f32.gmra.mrb[0].mxu0 %v1154
        %v1576 = vpop.f32.mrb[0].mxu0
        %v1577 = vadd.f32 %v1275, %v1576
        %v1578 = vpop.f32.mrb[0].mxu0
        %v1579 = vadd.f32 %v1279, %v1578
        %1580 = vmatprep.mubr.f32.mxu0 %v1157
        %1581 = vmatmul.mubr.f32.gmra.mrb[0].mxu0 %v1156
        %v1582 = vpop.f32.mrb[0].mxu0
        %v1583 = vadd.f32 %v1275, %v1582
        %v1584 = vpop.f32.mrb[0].mxu0
        %v1585 = vadd.f32 %v1279, %v1584
        %1586 = vmatprep.mubr.f32.mxu0 %v1159
        %1587 = vmatmul.mubr.f32.gmra.mrb[0].mxu0 %v1158
        %v1588 = vpop.f32.mrb[0].mxu0
        %v1589 = vadd.f32 %v1275, %v1588
        %v1590 = vpop.f32.mrb[0].mxu0
        %v1591 = vadd.f32 %v1279, %v1590
        %1592 = vmatprep.mubr.f32.mxu0 %v1161
        %1593 = vmatmul.mubr.f32.gmra.mrb[0].mxu0 %v1160
        %v1594 = vpop.f32.mrb[0].mxu0
        %v1595 = vadd.f32 %v1275, %v1594
        %v1596 = vpop.f32.mrb[0].mxu0
        %v1597 = vadd.f32 %v1279, %v1596
        %1598 = vmatprep.mubr.f32.mxu0 %v1163
        %1599 = vmatmul.mubr.f32.gmra.mrb[0].mxu0 %v1162
        %v1600 = vpop.f32.mrb[0].mxu0
        %v1601 = vadd.f32 %v1275, %v1600
        %v1602 = vpop.f32.mrb[0].mxu0
        %v1603 = vadd.f32 %v1279, %v1602
        %1604 = vmatprep.mubr.f32.mxu0 %v1165
        %1605 = vmatmul.mubr.f32.gmra.mrb[0].mxu0 %v1164
        %v1606 = vpop.f32.mrb[0].mxu0
        %v1607 = vadd.f32 %v1275, %v1606
        %v1608 = vpop.f32.mrb[0].mxu0
        %v1609 = vadd.f32 %v1279, %v1608
        %1610 = vmatprep.mubr.f32.mxu0 %v1167
        %1611 = vmatmul.mubr.f32.gmra.mrb[0].mxu0 %v1166
        %v1612 = vpop.f32.mrb[0].mxu0
        %v1613 = vadd.f32 %v1275, %v1612
        %v1614 = vpop.f32.mrb[0].mxu0
        %v1615 = vadd.f32 %v1279, %v1614
        %1616 = vmatprep.mubr.f32.mxu0 %v1169
        %1617 = vmatmul.mubr.f32.gmra.mrb[0].mxu0 %v1168
        %v1618 = vpop.f32.mrb[0].mxu0
        %v1619 = vadd.f32 %v1275, %v1618
        %v1620 = vpop.f32.mrb[0].mxu0
        %v1621 = vadd.f32 %v1279, %v1620
        %1622 = vmatprep.mubr.f32.mxu0 %v1171
        %1623 = vmatmul.mubr.f32.gmra.mrb[0].mxu0 %v1170
        %v1624 = vpop.f32.mrb[0].mxu0
        %v1625 = vadd.f32 %v1275, %v1624
        %v1626 = vpop.f32.mrb[0].mxu0
        %v1627 = vadd.f32 %v1279, %v1626
        %1628 = vmatprep.mubr.f32.mxu0 %v1173
        %1629 = vmatmul.mubr.f32.gmra.mrb[0].mxu0 %v1172
        %v1630 = vpop.f32.mrb[0].mxu0
        %v1631 = vadd.f32 %v1275, %v1630
        %v1632 = vpop.f32.mrb[0].mxu0
        %v1633 = vadd.f32 %v1279, %v1632
        %1634 = vmatprep.mubr.f32.mxu0 %v1175
        %1635 = vmatmul.mubr.f32.gmra.mrb[0].mxu0 %v1174
        %v1636 = vpop.f32.mrb[0].mxu0
        %v1637 = vadd.f32 %v1275, %v1636
        %v1638 = vpop.f32.mrb[0].mxu0
        %v1639 = vadd.f32 %v1279, %v1638
        %1640 = vmatprep.mubr.f32.mxu0 %v1177
        %1641 = vmatmul.mubr.f32.gmra.mrb[0].mxu0 %v1176
        %v1642 = vpop.f32.mrb[0].mxu0
        %v1643 = vadd.f32 %v1275, %v1642
        %v1644 = vpop.f32.mrb[0].mxu0
        %v1645 = vadd.f32 %v1279, %v1644
        %1646 = vmatprep.mubr.f32.mxu0 %v1179
        %1647 = vmatmul.mubr.f32.gmra.mrb[0].mxu0 %v1178
        %v1648 = vpop.f32.mrb[0].mxu0
        %v1649 = vadd.f32 %v1275, %v1648
        %v1650 = vpop.f32.mrb[0].mxu0
        %v1651 = vadd.f32 %v1279, %v1650
        %1652 = vmatprep.mubr.f32.mxu0 %v1181
        %1653 = vmatmul.mubr.f32.gmra.mrb[0].mxu0 %v1180
        %v1654 = vpop.f32.mrb[0].mxu0
        %v1655 = vadd.f32 %v1275, %v1654
        %v1656 = vpop.f32.mrb[0].mxu0
        %v1657 = vadd.f32 %v1279, %v1656
        %1658 = vmatprep.mubr.f32.mxu0 %v1183
        %1659 = vmatmul.mubr.f32.gmra.mrb[0].mxu0 %v1182
        %v1660 = vpop.f32.mrb[0].mxu0
        %v1661 = vadd.f32 %v1275, %v1660
        %v1662 = vpop.f32.mrb[0].mxu0
        %v1663 = vadd.f32 %v1279, %v1662
        %1664 = vmatprep.mubr.f32.mxu0 %v1185
        %1665 = vmatmul.mubr.f32.gmra.mrb[0].mxu0 %v1184
        %v1666 = vpop.f32.mrb[0].mxu0
        %v1667 = vadd.f32 %v1275, %v1666
        %v1668 = vpop.f32.mrb[0].mxu0
        %v1669 = vadd.f32 %v1279, %v1668
        %1670 = vmatprep.mubr.f32.mxu0 %v1187
        %1671 = vmatmul.mubr.f32.gmra.mrb[0].mxu0 %v1186
        %v1672 = vpop.f32.mrb[0].mxu0
        %v1673 = vadd.f32 %v1275, %v1672
        %v1674 = vpop.f32.mrb[0].mxu0
        %v1675 = vadd.f32 %v1279, %v1674
        %1676 = vmatprep.mubr.f32.mxu0 %v1189
        %1677 = vmatmul.mubr.f32.gmra.mrb[0].mxu0 %v1188
        %v1678 = vpop.f32.mrb[0].mxu0
        %v1679 = vadd.f32 %v1275, %v1678
        %v1680 = vpop.f32.mrb[0].mxu0
        %v1681 = vadd.f32 %v1279, %v1680
        %1682 = vmatprep.mubr.f32.mxu0 %v1191
        %1683 = vmatmul.mubr.f32.gmra.mrb[0].mxu0 %v1190
        %v1684 = vpop.f32.mrb[0].mxu0
        %v1685 = vadd.f32 %v1275, %v1684
        %v1686 = vpop.f32.mrb[0].mxu0
        %v1687 = vadd.f32 %v1279, %v1686
        %1688 = vmatprep.mubr.f32.mxu0 %v1193
        %1689 = vmatmul.mubr.f32.gmra.mrb[0].mxu0 %v1192
        %v1690 = vpop.f32.mrb[0].mxu0
        %v1691 = vadd.f32 %v1275, %v1690
        %v1692 = vpop.f32.mrb[0].mxu0
        %v1693 = vadd.f32 %v1279, %v1692
        %1694 = vmatprep.mubr.f32.mxu0 %v1195
        %1695 = vmatmul.mubr.f32.gmra.mrb[0].mxu0 %v1194
        %v1696 = vpop.f32.mrb[0].mxu0
        %v1697 = vadd.f32 %v1275, %v1696
        %v1698 = vpop.f32.mrb[0].mxu0
        %v1699 = vadd.f32 %v1279, %v1698
        %1700 = vmatprep.mubr.f32.mxu0 %v1197
        %1701 = vmatmul.mubr.f32.gmra.mrb[0].mxu0 %v1196
        %v1702 = vpop.f32.mrb[0].mxu0
        %v1703 = vadd.f32 %v1275, %v1702
        %v1704 = vpop.f32.mrb[0].mxu0
        %v1705 = vadd.f32 %v1279, %v1704
        %1706 = vmatprep.mubr.f32.mxu0 %v1199
        %1707 = vmatmul.mubr.f32.gmra.mrb[0].mxu0 %v1198
        %v1708 = vpop.f32.mrb[0].mxu0
        %v1709 = vadd.f32 %v1275, %v1708
        %v1710 = vpop.f32.mrb[0].mxu0
        %v1711 = vadd.f32 %v1279, %v1710
        %1712 = vmatprep.mubr.f32.mxu0 %v1201
        %1713 = vmatmul.mubr.f32.gmra.mrb[0].mxu0 %v1200
        %v1714 = vpop.f32.mrb[0].mxu0
        %v1715 = vadd.f32 %v1275, %v1714
        %v1716 = vpop.f32.mrb[0].mxu0
        %v1717 = vadd.f32 %v1279, %v1716
        %1718 = vmatprep.mubr.f32.mxu0 %v1203
        %1719 = vmatmul.mubr.f32.gmra.mrb[0].mxu0 %v1202
        %v1720 = vpop.f32.mrb[0].mxu0
        %v1721 = vadd.f32 %v1275, %v1720
        %v1722 = vpop.f32.mrb[0].mxu0
        %v1723 = vadd.f32 %v1279, %v1722
        %1724 = vmatprep.mubr.f32.mxu0 %v1205
        %1725 = vmatmul.mubr.f32.gmra.mrb[0].mxu0 %v1204
        %v1726 = vpop.f32.mrb[0].mxu0
        %v1727 = vadd.f32 %v1275, %v1726
        %v1728 = vpop.f32.mrb[0].mxu0
        %v1729 = vadd.f32 %v1279, %v1728
        %1730 = vdwg.mxu0
        %v1731 = vmax.f32 %v1349, 0.0
        %v1732 = vmax.f32 %v1351, 0.0
        %v1733 = vmax.f32 %v1355, 0.0
        %v1734 = vmax.f32 %v1357, 0.0
        %v1735 = vmax.f32 %v1361, 0.0
        %v1736 = vmax.f32 %v1363, 0.0
        %v1737 = vmax.f32 %v1367, 0.0
        %v1738 = vmax.f32 %v1369, 0.0
        %v1739 = vmax.f32 %v1373, 0.0
        %v1740 = vmax.f32 %v1375, 0.0
        %v1741 = vmax.f32 %v1379, 0.0
        %v1742 = vmax.f32 %v1381, 0.0
        %v1743 = vmax.f32 %v1385, 0.0
        %v1744 = vmax.f32 %v1387, 0.0
        %v1745 = vmax.f32 %v1391, 0.0
        %v1746 = vmax.f32 %v1393, 0.0
        %v1747 = vmax.f32 %v1397, 0.0
        %v1748 = vmax.f32 %v1399, 0.0
        %v1749 = vmax.f32 %v1403, 0.0
        %v1750 = vmax.f32 %v1405, 0.0
        %v1751 = vmax.f32 %v1409, 0.0
        %v1752 = vmax.f32 %v1411, 0.0
        %v1753 = vmax.f32 %v1415, 0.0
        %v1754 = vmax.f32 %v1417, 0.0
        %v1755 = vmax.f32 %v1421, 0.0
        %v1756 = vmax.f32 %v1423, 0.0
        %v1757 = vmax.f32 %v1427, 0.0
        %v1758 = vmax.f32 %v1429, 0.0
        %v1759 = vmax.f32 %v1433, 0.0
        %v1760 = vmax.f32 %v1435, 0.0
        %v1761 = vmax.f32 %v1439, 0.0
        %v1762 = vmax.f32 %v1441, 0.0
        %v1763 = vmax.f32 %v1445, 0.0
        %v1764 = vmax.f32 %v1447, 0.0
        %v1765 = vmax.f32 %v1451, 0.0
        %v1766 = vmax.f32 %v1453, 0.0
        %v1767 = vmax.f32 %v1457, 0.0
        %v1768 = vmax.f32 %v1459, 0.0
        %v1769 = vmax.f32 %v1463, 0.0
        %v1770 = vmax.f32 %v1465, 0.0
        %v1771 = vmax.f32 %v1469, 0.0
        %v1772 = vmax.f32 %v1471, 0.0
        %v1773 = vmax.f32 %v1475, 0.0
        %v1774 = vmax.f32 %v1477, 0.0
        %v1775 = vmax.f32 %v1481, 0.0
        %v1776 = vmax.f32 %v1483, 0.0
        %v1777 = vmax.f32 %v1487, 0.0
        %v1778 = vmax.f32 %v1489, 0.0
        %v1779 = vmax.f32 %v1493, 0.0
        %v1780 = vmax.f32 %v1495, 0.0
        %v1781 = vmax.f32 %v1499, 0.0
        %v1782 = vmax.f32 %v1501, 0.0
        %v1783 = vmax.f32 %v1505, 0.0
        %v1784 = vmax.f32 %v1507, 0.0
        %v1785 = vmax.f32 %v1511, 0.0
        %v1786 = vmax.f32 %v1513, 0.0
        %v1787 = vmax.f32 %v1517, 0.0
        %v1788 = vmax.f32 %v1519, 0.0
        %v1789 = vmax.f32 %v1523, 0.0
        %v1790 = vmax.f32 %v1525, 0.0
        %v1791 = vmax.f32 %v1529, 0.0
        %v1792 = vmax.f32 %v1531, 0.0
        %v1793 = vmax.f32 %v1535, 0.0
        %v1794 = vmax.f32 %v1537, 0.0
        %v1795 = vmax.f32 %v1541, 0.0
        %v1796 = vmax.f32 %v1543, 0.0
        %v1797 = vmax.f32 %v1547, 0.0
        %v1798 = vmax.f32 %v1549, 0.0
        %v1799 = vmax.f32 %v1553, 0.0
        %v1800 = vmax.f32 %v1555, 0.0
        %v1801 = vmax.f32 %v1559, 0.0
        %v1802 = vmax.f32 %v1561, 0.0
        %v1803 = vmax.f32 %v1565, 0.0
        %v1804 = vmax.f32 %v1567, 0.0
        %v1805 = vmax.f32 %v1571, 0.0
        %v1806 = vmax.f32 %v1573, 0.0
        %v1807 = vmax.f32 %v1577, 0.0
        %v1808 = vmax.f32 %v1579, 0.0
        %v1809 = vmax.f32 %v1583, 0.0
        %v1810 = vmax.f32 %v1585, 0.0
        %v1811 = vmax.f32 %v1589, 0.0
        %v1812 = vmax.f32 %v1591, 0.0
        %v1813 = vmax.f32 %v1595, 0.0
        %v1814 = vmax.f32 %v1597, 0.0
        %v1815 = vmax.f32 %v1601, 0.0
        %v1816 = vmax.f32 %v1603, 0.0
        %v1817 = vmax.f32 %v1607, 0.0
        %v1818 = vmax.f32 %v1609, 0.0
        %v1819 = vmax.f32 %v1613, 0.0
        %v1820 = vmax.f32 %v1615, 0.0
        %v1821 = vmax.f32 %v1619, 0.0
        %v1822 = vmax.f32 %v1621, 0.0
        %v1823 = vmax.f32 %v1625, 0.0
        %v1824 = vmax.f32 %v1627, 0.0
        %v1825 = vmax.f32 %v1631, 0.0
        %v1826 = vmax.f32 %v1633, 0.0
        %v1827 = vmax.f32 %v1637, 0.0
        %v1828 = vmax.f32 %v1639, 0.0
        %v1829 = vmax.f32 %v1643, 0.0
        %v1830 = vmax.f32 %v1645, 0.0
        %v1831 = vmax.f32 %v1649, 0.0
        %v1832 = vmax.f32 %v1651, 0.0
        %v1833 = vmax.f32 %v1655, 0.0
        %v1834 = vmax.f32 %v1657, 0.0
        %v1835 = vmax.f32 %v1661, 0.0
        %v1836 = vmax.f32 %v1663, 0.0
        %v1837 = vmax.f32 %v1667, 0.0
        %v1838 = vmax.f32 %v1669, 0.0
        %v1839 = vmax.f32 %v1673, 0.0
        %v1840 = vmax.f32 %v1675, 0.0
        %v1841 = vmax.f32 %v1679, 0.0
        %v1842 = vmax.f32 %v1681, 0.0
        %v1843 = vmax.f32 %v1685, 0.0
        %v1844 = vmax.f32 %v1687, 0.0
        %v1845 = vmax.f32 %v1691, 0.0
        %v1846 = vmax.f32 %v1693, 0.0
        %v1847 = vmax.f32 %v1697, 0.0
        %v1848 = vmax.f32 %v1699, 0.0
        %v1849 = vmax.f32 %v1703, 0.0
        %v1850 = vmax.f32 %v1705, 0.0
        %v1851 = vmax.f32 %v1709, 0.0
        %v1852 = vmax.f32 %v1711, 0.0
        %v1853 = vmax.f32 %v1715, 0.0
        %v1854 = vmax.f32 %v1717, 0.0
        %v1855 = vmax.f32 %v1721, 0.0
        %v1856 = vmax.f32 %v1723, 0.0
        %v1857 = vmax.f32 %v1727, 0.0
        %v1858 = vmax.f32 %v1729, 0.0
        %v1859 = vld [vmem:[#allocation10] sm:$0xff]
        %v1860 = vld [vmem:[#allocation10 + $0x8] sm:$0xff]
        %v1861 = vld [vmem:[#allocation10 + $0x10] sm:$0xff]
        %v1862 = vld [vmem:[#allocation10 + $0x18] sm:$0xff]
        %v1863 = vld [vmem:[#allocation10 + $0x20] sm:$0xff]
        %v1864 = vld [vmem:[#allocation10 + $0x28] sm:$0xff]
        %v1865 = vld [vmem:[#allocation10 + $0x30] sm:$0xff]
        %v1866 = vld [vmem:[#allocation10 + $0x38] sm:$0xff]
        %v1867 = vld [vmem:[#allocation10 + $0x40] sm:$0xff]
        %v1868 = vld [vmem:[#allocation10 + $0x48] sm:$0xff]
        %v1869 = vld [vmem:[#allocation10 + $0x50] sm:$0xff]
        %v1870 = vld [vmem:[#allocation10 + $0x58] sm:$0xff]
        %v1871 = vld [vmem:[#allocation10 + $0x60] sm:$0xff]
        %v1872 = vld [vmem:[#allocation10 + $0x68] sm:$0xff]
        %v1873 = vld [vmem:[#allocation10 + $0x70] sm:$0xff]
        %v1874 = vld [vmem:[#allocation10 + $0x78] sm:$0xff]
        %v1875 = vld [vmem:[#allocation10 + $0x80] sm:$0xff]
        %v1876 = vld [vmem:[#allocation10 + $0x88] sm:$0xff]
        %v1877 = vld [vmem:[#allocation10 + $0x90] sm:$0xff]
        %v1878 = vld [vmem:[#allocation10 + $0x98] sm:$0xff]
        %v1879 = vld [vmem:[#allocation10 + $0xa0] sm:$0xff]
        %v1880 = vld [vmem:[#allocation10 + $0xa8] sm:$0xff]
        %v1881 = vld [vmem:[#allocation10 + $0xb0] sm:$0xff]
        %v1882 = vld [vmem:[#allocation10 + $0xb8] sm:$0xff]
        %v1883 = vld [vmem:[#allocation10 + $0xc0] sm:$0xff]
        %v1884 = vld [vmem:[#allocation10 + $0xc8] sm:$0xff]
        %v1885 = vld [vmem:[#allocation10 + $0xd0] sm:$0xff]
        %v1886 = vld [vmem:[#allocation10 + $0xd8] sm:$0xff]
        %v1887 = vld [vmem:[#allocation10 + $0xe0] sm:$0xff]
        %v1888 = vld [vmem:[#allocation10 + $0xe8] sm:$0xff]
        %v1889 = vld [vmem:[#allocation10 + $0xf0] sm:$0xff]
        %v1890 = vld [vmem:[#allocation10 + $0xf8] sm:$0xff]
        %v1891 = vld [vmem:[%s7] sm:$0x3]
        %v1893 = vlaneseq
        %v1894 = vshrl.u32 %v1893, 7
        %v1895 = vsub.s32 0, %v1894
        %v1896 = vrot.slane %v1891, %v1895
        %v1897 = vlaneseq
        %v1898 = vshrl.u32 %v1897, 7
        %v1899 = vsub.s32 1, %v1898
        %v1900 = vrot.slane %v1891, %v1899
        %1903 = vmatprep.subr.mxu0 %v1860
        %1904 = vmatpush1.msra.mxu0 %v1859
        %1905 = vmatprep.subr.mxu0 %v1862
        %1906 = vmatpush1.msra.mxu0 %v1861
        %1907 = vmatprep.subr.mxu0 %v1864
        %1908 = vmatpush1.msra.mxu0 %v1863
        %1909 = vmatprep.subr.mxu0 %v1866
        %1910 = vmatpush1.msra.mxu0 %v1865
        %1911 = vmatprep.subr.mxu0 %v1868
        %1912 = vmatpush1.msra.mxu0 %v1867
        %1913 = vmatprep.subr.mxu0 %v1870
        %1914 = vmatpush1.msra.mxu0 %v1869
        %1915 = vmatprep.subr.mxu0 %v1872
        %1916 = vmatpush1.msra.mxu0 %v1871
        %1917 = vmatprep.subr.mxu0 %v1874
        %1918 = vmatpush1.msra.mxu0 %v1873
        %1919 = vmatprep.subr.mxu0 %v1876
        %1920 = vmatpush1.msra.mxu0 %v1875
        %1921 = vmatprep.subr.mxu0 %v1878
        %1922 = vmatpush1.msra.mxu0 %v1877
        %1923 = vmatprep.subr.mxu0 %v1880
        %1924 = vmatpush1.msra.mxu0 %v1879
        %1925 = vmatprep.subr.mxu0 %v1882
        %1926 = vmatpush1.msra.mxu0 %v1881
        %1927 = vmatprep.subr.mxu0 %v1884
        %1928 = vmatpush1.msra.mxu0 %v1883
        %1929 = vmatprep.subr.mxu0 %v1886
        %1930 = vmatpush1.msra.mxu0 %v1885
        %1931 = vmatprep.subr.mxu0 %v1888
        %1932 = vmatpush1.msra.mxu0 %v1887
        %1933 = vmatprep.subr.mxu0 %v1890
        %1934 = vmatpush1.msra.mxu0 %v1889
        %1935 = vmatprep.subr.mxu0 0.0
        %1936 = vmatpush1.msra.mxu0 0.0
        %1937 = vmatprep.subr.mxu0 0.0
        %1938 = vmatpush1.msra.mxu0 0.0
        %1939 = vmatprep.subr.mxu0 0.0
        %1940 = vmatpush1.msra.mxu0 0.0
        %1941 = vmatprep.subr.mxu0 0.0
        %1942 = vmatpush1.msra.mxu0 0.0
        %1943 = vmatprep.subr.mxu0 0.0
        %1944 = vmatpush1.msra.mxu0 0.0
        %1945 = vmatprep.subr.mxu0 0.0
        %1946 = vmatpush1.msra.mxu0 0.0
        %1947 = vmatprep.subr.mxu0 0.0
        %1948 = vmatpush1.msra.mxu0 0.0
        %1949 = vmatprep.subr.mxu0 0.0
        %1950 = vmatpush1.msra.mxu0 0.0
        %1951 = vmatprep.subr.mxu0 0.0
        %1952 = vmatpush1.msra.mxu0 0.0
        %1953 = vmatprep.subr.mxu0 0.0
        %1954 = vmatpush1.msra.mxu0 0.0
        %1955 = vmatprep.subr.mxu0 0.0
        %1956 = vmatpush1.msra.mxu0 0.0
        %1957 = vmatprep.subr.mxu0 0.0
        %1958 = vmatpush1.msra.mxu0 0.0
        %1959 = vmatprep.subr.mxu0 0.0
        %1960 = vmatpush1.msra.mxu0 0.0
        %1961 = vmatprep.subr.mxu0 0.0
        %1962 = vmatpush1.msra.mxu0 0.0
        %1963 = vmatprep.subr.mxu0 0.0
        %1964 = vmatpush1.msra.mxu0 0.0
        %1965 = vmatprep.subr.mxu0 0.0
        %1966 = vmatpush1.msra.mxu0 0.0
        %1967 = vmatprep.mubr.f32.mxu0 0.0
        %1968 = vmatmul.mubr.f32.gmra.mrb[0].mxu0 %v521
        %v1969 = vpop.f32.mrb[0].mxu0
        %v1970 = vadd.f32 %v1896, %v1969
        %v1971 = vpop.f32.mrb[0].mxu0
        %v1972 = vadd.f32 %v1900, %v1971
        %1973 = vmatprep.mubr.f32.mxu0 0.0
        %1974 = vmatmul.mubr.f32.gmra.mrb[0].mxu0 %v522
        %v1975 = vpop.f32.mrb[0].mxu0
        %v1976 = vadd.f32 %v1896, %v1975
        %v1977 = vpop.f32.mrb[0].mxu0
        %v1978 = vadd.f32 %v1900, %v1977
        %1979 = vmatprep.mubr.f32.mxu0 0.0
        %1980 = vmatmul.mubr.f32.gmra.mrb[0].mxu0 %v523
        %v1981 = vpop.f32.mrb[0].mxu0
        %v1982 = vadd.f32 %v1896, %v1981
        %v1983 = vpop.f32.mrb[0].mxu0
        %v1984 = vadd.f32 %v1900, %v1983
        %1985 = vmatprep.mubr.f32.mxu0 0.0
        %1986 = vmatmul.mubr.f32.gmra.mrb[0].mxu0 %v524
        %v1987 = vpop.f32.mrb[0].mxu0
        %v1988 = vadd.f32 %v1896, %v1987
        %v1989 = vpop.f32.mrb[0].mxu0
        %v1990 = vadd.f32 %v1900, %v1989
        %1991 = vmatprep.mubr.f32.mxu0 0.0
        %1992 = vmatmul.mubr.f32.gmra.mrb[0].mxu0 %v525
        %v1993 = vpop.f32.mrb[0].mxu0
        %v1994 = vadd.f32 %v1896, %v1993
        %v1995 = vpop.f32.mrb[0].mxu0
        %v1996 = vadd.f32 %v1900, %v1995
        %1997 = vmatprep.mubr.f32.mxu0 0.0
        %1998 = vmatmul.mubr.f32.gmra.mrb[0].mxu0 %v526
        %v1999 = vpop.f32.mrb[0].mxu0
        %v2000 = vadd.f32 %v1896, %v1999
        %v2001 = vpop.f32.mrb[0].mxu0
        %v2002 = vadd.f32 %v1900, %v2001
        %2003 = vmatprep.mubr.f32.mxu0 0.0
        %2004 = vmatmul.mubr.f32.gmra.mrb[0].mxu0 %v527
        %v2005 = vpop.f32.mrb[0].mxu0
        %v2006 = vadd.f32 %v1896, %v2005
        %v2007 = vpop.f32.mrb[0].mxu0
        %v2008 = vadd.f32 %v1900, %v2007
        %2009 = vmatprep.mubr.f32.mxu0 0.0
        %2010 = vmatmul.mubr.f32.gmra.mrb[0].mxu0 %v528
        %v2011 = vpop.f32.mrb[0].mxu0
        %v2012 = vadd.f32 %v1896, %v2011
        %v2013 = vpop.f32.mrb[0].mxu0
        %v2014 = vadd.f32 %v1900, %v2013
        %2015 = vmatprep.mubr.f32.mxu0 0.0
        %2016 = vmatmul.mubr.f32.gmra.mrb[0].mxu0 %v529
        %v2017 = vpop.f32.mrb[0].mxu0
        %v2018 = vadd.f32 %v1896, %v2017
        %v2019 = vpop.f32.mrb[0].mxu0
        %v2020 = vadd.f32 %v1900, %v2019
        %2021 = vmatprep.mubr.f32.mxu0 0.0
        %2022 = vmatmul.mubr.f32.gmra.mrb[0].mxu0 %v530
        %v2023 = vpop.f32.mrb[0].mxu0
        %v2024 = vadd.f32 %v1896, %v2023
        %v2025 = vpop.f32.mrb[0].mxu0
        %v2026 = vadd.f32 %v1900, %v2025
        %2027 = vmatprep.mubr.f32.mxu0 0.0
        %2028 = vmatmul.mubr.f32.gmra.mrb[0].mxu0 %v531
        %v2029 = vpop.f32.mrb[0].mxu0
        %v2030 = vadd.f32 %v1896, %v2029
        %v2031 = vpop.f32.mrb[0].mxu0
        %v2032 = vadd.f32 %v1900, %v2031
        %2033 = vmatprep.mubr.f32.mxu0 0.0
        %2034 = vmatmul.mubr.f32.gmra.mrb[0].mxu0 %v532
        %v2035 = vpop.f32.mrb[0].mxu0
        %v2036 = vadd.f32 %v1896, %v2035
        %v2037 = vpop.f32.mrb[0].mxu0
        %v2038 = vadd.f32 %v1900, %v2037
        %2039 = vmatprep.mubr.f32.mxu0 0.0
        %2040 = vmatmul.mubr.f32.gmra.mrb[0].mxu0 %v533
        %v2041 = vpop.f32.mrb[0].mxu0
        %v2042 = vadd.f32 %v1896, %v2041
        %v2043 = vpop.f32.mrb[0].mxu0
        %v2044 = vadd.f32 %v1900, %v2043
        %2045 = vmatprep.mubr.f32.mxu0 0.0
        %2046 = vmatmul.mubr.f32.gmra.mrb[0].mxu0 %v534
        %v2047 = vpop.f32.mrb[0].mxu0
        %v2048 = vadd.f32 %v1896, %v2047
        %v2049 = vpop.f32.mrb[0].mxu0
        %v2050 = vadd.f32 %v1900, %v2049
        %2051 = vmatprep.mubr.f32.mxu0 0.0
        %2052 = vmatmul.mubr.f32.gmra.mrb[0].mxu0 %v535
        %v2053 = vpop.f32.mrb[0].mxu0
        %v2054 = vadd.f32 %v1896, %v2053
        %v2055 = vpop.f32.mrb[0].mxu0
        %v2056 = vadd.f32 %v1900, %v2055
        %2057 = vmatprep.mubr.f32.mxu0 0.0
        %2058 = vmatmul.mubr.f32.gmra.mrb[0].mxu0 %v536
        %v2059 = vpop.f32.mrb[0].mxu0
        %v2060 = vadd.f32 %v1896, %v2059
        %v2061 = vpop.f32.mrb[0].mxu0
        %v2062 = vadd.f32 %v1900, %v2061
        %2063 = vmatprep.mubr.f32.mxu0 0.0
        %2064 = vmatmul.mubr.f32.gmra.mrb[0].mxu0 %v537
        %v2065 = vpop.f32.mrb[0].mxu0
        %v2066 = vadd.f32 %v1896, %v2065
        %v2067 = vpop.f32.mrb[0].mxu0
        %v2068 = vadd.f32 %v1900, %v2067
        %2069 = vmatprep.mubr.f32.mxu0 0.0
        %2070 = vmatmul.mubr.f32.gmra.mrb[0].mxu0 %v538
        %v2071 = vpop.f32.mrb[0].mxu0
        %v2072 = vadd.f32 %v1896, %v2071
        %v2073 = vpop.f32.mrb[0].mxu0
        %v2074 = vadd.f32 %v1900, %v2073
        %2075 = vmatprep.mubr.f32.mxu0 0.0
        %2076 = vmatmul.mubr.f32.gmra.mrb[0].mxu0 %v539
        %v2077 = vpop.f32.mrb[0].mxu0
        %v2078 = vadd.f32 %v1896, %v2077
        %v2079 = vpop.f32.mrb[0].mxu0
        %v2080 = vadd.f32 %v1900, %v2079
        %2081 = vmatprep.mubr.f32.mxu0 0.0
        %2082 = vmatmul.mubr.f32.gmra.mrb[0].mxu0 %v540
        %v2083 = vpop.f32.mrb[0].mxu0
        %v2084 = vadd.f32 %v1896, %v2083
        %v2085 = vpop.f32.mrb[0].mxu0
        %v2086 = vadd.f32 %v1900, %v2085
        %2087 = vmatprep.mubr.f32.mxu0 0.0
        %2088 = vmatmul.mubr.f32.gmra.mrb[0].mxu0 %v541
        %v2089 = vpop.f32.mrb[0].mxu0
        %v2090 = vadd.f32 %v1896, %v2089
        %v2091 = vpop.f32.mrb[0].mxu0
        %v2092 = vadd.f32 %v1900, %v2091
        %2093 = vmatprep.mubr.f32.mxu0 0.0
        %2094 = vmatmul.mubr.f32.gmra.mrb[0].mxu0 %v542
        %v2095 = vpop.f32.mrb[0].mxu0
        %v2096 = vadd.f32 %v1896, %v2095
        %v2097 = vpop.f32.mrb[0].mxu0
        %v2098 = vadd.f32 %v1900, %v2097
        %2099 = vmatprep.mubr.f32.mxu0 0.0
        %2100 = vmatmul.mubr.f32.gmra.mrb[0].mxu0 %v543
        %v2101 = vpop.f32.mrb[0].mxu0
        %v2102 = vadd.f32 %v1896, %v2101
        %v2103 = vpop.f32.mrb[0].mxu0
        %v2104 = vadd.f32 %v1900, %v2103
        %2105 = vmatprep.mubr.f32.mxu0 0.0
        %2106 = vmatmul.mubr.f32.gmra.mrb[0].mxu0 %v544
        %v2107 = vpop.f32.mrb[0].mxu0
        %v2108 = vadd.f32 %v1896, %v2107
        %v2109 = vpop.f32.mrb[0].mxu0
        %v2110 = vadd.f32 %v1900, %v2109
        %2111 = vmatprep.mubr.f32.mxu0 0.0
        %2112 = vmatmul.mubr.f32.gmra.mrb[0].mxu0 %v545
        %v2113 = vpop.f32.mrb[0].mxu0
        %v2114 = vadd.f32 %v1896, %v2113
        %v2115 = vpop.f32.mrb[0].mxu0
        %v2116 = vadd.f32 %v1900, %v2115
        %2117 = vmatprep.mubr.f32.mxu0 0.0
        %2118 = vmatmul.mubr.f32.gmra.mrb[0].mxu0 %v546
        %v2119 = vpop.f32.mrb[0].mxu0
        %v2120 = vadd.f32 %v1896, %v2119
        %v2121 = vpop.f32.mrb[0].mxu0
        %v2122 = vadd.f32 %v1900, %v2121
        %2123 = vmatprep.mubr.f32.mxu0 0.0
        %2124 = vmatmul.mubr.f32.gmra.mrb[0].mxu0 %v547
        %v2125 = vpop.f32.mrb[0].mxu0
        %v2126 = vadd.f32 %v1896, %v2125
        %v2127 = vpop.f32.mrb[0].mxu0
        %v2128 = vadd.f32 %v1900, %v2127
        %2129 = vmatprep.mubr.f32.mxu0 0.0
        %2130 = vmatmul.mubr.f32.gmra.mrb[0].mxu0 %v548
        %v2131 = vpop.f32.mrb[0].mxu0
        %v2132 = vadd.f32 %v1896, %v2131
        %v2133 = vpop.f32.mrb[0].mxu0
        %v2134 = vadd.f32 %v1900, %v2133
        %2135 = vmatprep.mubr.f32.mxu0 0.0
        %2136 = vmatmul.mubr.f32.gmra.mrb[0].mxu0 %v549
        %v2137 = vpop.f32.mrb[0].mxu0
        %v2138 = vadd.f32 %v1896, %v2137
        %v2139 = vpop.f32.mrb[0].mxu0
        %v2140 = vadd.f32 %v1900, %v2139
        %2141 = vmatprep.mubr.f32.mxu0 0.0
        %2142 = vmatmul.mubr.f32.gmra.mrb[0].mxu0 %v550
        %v2143 = vpop.f32.mrb[0].mxu0
        %v2144 = vadd.f32 %v1896, %v2143
        %v2145 = vpop.f32.mrb[0].mxu0
        %v2146 = vadd.f32 %v1900, %v2145
        %2147 = vmatprep.mubr.f32.mxu0 0.0
        %2148 = vmatmul.mubr.f32.gmra.mrb[0].mxu0 %v551
        %v2149 = vpop.f32.mrb[0].mxu0
        %v2150 = vadd.f32 %v1896, %v2149
        %v2151 = vpop.f32.mrb[0].mxu0
        %v2152 = vadd.f32 %v1900, %v2151
        %2153 = vmatprep.mubr.f32.mxu0 0.0
        %2154 = vmatmul.mubr.f32.gmra.mrb[0].mxu0 %v552
        %v2155 = vpop.f32.mrb[0].mxu0
        %v2156 = vadd.f32 %v1896, %v2155
        %v2157 = vpop.f32.mrb[0].mxu0
        %v2158 = vadd.f32 %v1900, %v2157
        %2159 = vmatprep.mubr.f32.mxu0 0.0
        %2160 = vmatmul.mubr.f32.gmra.mrb[0].mxu0 %v553
        %v2161 = vpop.f32.mrb[0].mxu0
        %v2162 = vadd.f32 %v1896, %v2161
        %v2163 = vpop.f32.mrb[0].mxu0
        %v2164 = vadd.f32 %v1900, %v2163
        %2165 = vmatprep.mubr.f32.mxu0 0.0
        %2166 = vmatmul.mubr.f32.gmra.mrb[0].mxu0 %v554
        %v2167 = vpop.f32.mrb[0].mxu0
        %v2168 = vadd.f32 %v1896, %v2167
        %v2169 = vpop.f32.mrb[0].mxu0
        %v2170 = vadd.f32 %v1900, %v2169
        %2171 = vmatprep.mubr.f32.mxu0 0.0
        %2172 = vmatmul.mubr.f32.gmra.mrb[0].mxu0 %v555
        %v2173 = vpop.f32.mrb[0].mxu0
        %v2174 = vadd.f32 %v1896, %v2173
        %v2175 = vpop.f32.mrb[0].mxu0
        %v2176 = vadd.f32 %v1900, %v2175
        %2177 = vmatprep.mubr.f32.mxu0 0.0
        %2178 = vmatmul.mubr.f32.gmra.mrb[0].mxu0 %v556
        %v2179 = vpop.f32.mrb[0].mxu0
        %v2180 = vadd.f32 %v1896, %v2179
        %v2181 = vpop.f32.mrb[0].mxu0
        %v2182 = vadd.f32 %v1900, %v2181
        %2183 = vmatprep.mubr.f32.mxu0 0.0
        %2184 = vmatmul.mubr.f32.gmra.mrb[0].mxu0 %v557
        %v2185 = vpop.f32.mrb[0].mxu0
        %v2186 = vadd.f32 %v1896, %v2185
        %v2187 = vpop.f32.mrb[0].mxu0
        %v2188 = vadd.f32 %v1900, %v2187
        %2189 = vmatprep.mubr.f32.mxu0 0.0
        %2190 = vmatmul.mubr.f32.gmra.mrb[0].mxu0 %v558
        %v2191 = vpop.f32.mrb[0].mxu0
        %v2192 = vadd.f32 %v1896, %v2191
        %v2193 = vpop.f32.mrb[0].mxu0
        %v2194 = vadd.f32 %v1900, %v2193
        %2195 = vmatprep.mubr.f32.mxu0 0.0
        %2196 = vmatmul.mubr.f32.gmra.mrb[0].mxu0 %v559
        %v2197 = vpop.f32.mrb[0].mxu0
        %v2198 = vadd.f32 %v1896, %v2197
        %v2199 = vpop.f32.mrb[0].mxu0
        %v2200 = vadd.f32 %v1900, %v2199
        %2201 = vmatprep.mubr.f32.mxu0 0.0
        %2202 = vmatmul.mubr.f32.gmra.mrb[0].mxu0 %v560
        %v2203 = vpop.f32.mrb[0].mxu0
        %v2204 = vadd.f32 %v1896, %v2203
        %v2205 = vpop.f32.mrb[0].mxu0
        %v2206 = vadd.f32 %v1900, %v2205
        %2207 = vmatprep.mubr.f32.mxu0 0.0
        %2208 = vmatmul.mubr.f32.gmra.mrb[0].mxu0 %v561
        %v2209 = vpop.f32.mrb[0].mxu0
        %v2210 = vadd.f32 %v1896, %v2209
        %v2211 = vpop.f32.mrb[0].mxu0
        %v2212 = vadd.f32 %v1900, %v2211
        %2213 = vmatprep.mubr.f32.mxu0 0.0
        %2214 = vmatmul.mubr.f32.gmra.mrb[0].mxu0 %v562
        %v2215 = vpop.f32.mrb[0].mxu0
        %v2216 = vadd.f32 %v1896, %v2215
        %v2217 = vpop.f32.mrb[0].mxu0
        %v2218 = vadd.f32 %v1900, %v2217
        %2219 = vmatprep.mubr.f32.mxu0 0.0
        %2220 = vmatmul.mubr.f32.gmra.mrb[0].mxu0 %v563
        %v2221 = vpop.f32.mrb[0].mxu0
        %v2222 = vadd.f32 %v1896, %v2221
        %v2223 = vpop.f32.mrb[0].mxu0
        %v2224 = vadd.f32 %v1900, %v2223
        %2225 = vmatprep.mubr.f32.mxu0 0.0
        %2226 = vmatmul.mubr.f32.gmra.mrb[0].mxu0 %v564
        %v2227 = vpop.f32.mrb[0].mxu0
        %v2228 = vadd.f32 %v1896, %v2227
        %v2229 = vpop.f32.mrb[0].mxu0
        %v2230 = vadd.f32 %v1900, %v2229
        %2231 = vmatprep.mubr.f32.mxu0 0.0
        %2232 = vmatmul.mubr.f32.gmra.mrb[0].mxu0 %v565
        %v2233 = vpop.f32.mrb[0].mxu0
        %v2234 = vadd.f32 %v1896, %v2233
        %v2235 = vpop.f32.mrb[0].mxu0
        %v2236 = vadd.f32 %v1900, %v2235
        %2237 = vmatprep.mubr.f32.mxu0 0.0
        %2238 = vmatmul.mubr.f32.gmra.mrb[0].mxu0 %v566
        %v2239 = vpop.f32.mrb[0].mxu0
        %v2240 = vadd.f32 %v1896, %v2239
        %v2241 = vpop.f32.mrb[0].mxu0
        %v2242 = vadd.f32 %v1900, %v2241
        %2243 = vmatprep.mubr.f32.mxu0 0.0
        %2244 = vmatmul.mubr.f32.gmra.mrb[0].mxu0 %v567
        %v2245 = vpop.f32.mrb[0].mxu0
        %v2246 = vadd.f32 %v1896, %v2245
        %v2247 = vpop.f32.mrb[0].mxu0
        %v2248 = vadd.f32 %v1900, %v2247
        %2249 = vmatprep.mubr.f32.mxu0 0.0
        %2250 = vmatmul.mubr.f32.gmra.mrb[0].mxu0 %v568
        %v2251 = vpop.f32.mrb[0].mxu0
        %v2252 = vadd.f32 %v1896, %v2251
        %v2253 = vpop.f32.mrb[0].mxu0
        %v2254 = vadd.f32 %v1900, %v2253
        %2255 = vmatprep.mubr.f32.mxu0 0.0
        %2256 = vmatmul.mubr.f32.gmra.mrb[0].mxu0 %v569
        %v2257 = vpop.f32.mrb[0].mxu0
        %v2258 = vadd.f32 %v1896, %v2257
        %v2259 = vpop.f32.mrb[0].mxu0
        %v2260 = vadd.f32 %v1900, %v2259
        %2261 = vmatprep.mubr.f32.mxu0 0.0
        %2262 = vmatmul.mubr.f32.gmra.mrb[0].mxu0 %v570
        %v2263 = vpop.f32.mrb[0].mxu0
        %v2264 = vadd.f32 %v1896, %v2263
        %v2265 = vpop.f32.mrb[0].mxu0
        %v2266 = vadd.f32 %v1900, %v2265
        %2267 = vmatprep.mubr.f32.mxu0 0.0
        %2268 = vmatmul.mubr.f32.gmra.mrb[0].mxu0 %v571
        %v2269 = vpop.f32.mrb[0].mxu0
        %v2270 = vadd.f32 %v1896, %v2269
        %v2271 = vpop.f32.mrb[0].mxu0
        %v2272 = vadd.f32 %v1900, %v2271
        %2273 = vmatprep.mubr.f32.mxu0 0.0
        %2274 = vmatmul.mubr.f32.gmra.mrb[0].mxu0 %v572
        %v2275 = vpop.f32.mrb[0].mxu0
        %v2276 = vadd.f32 %v1896, %v2275
        %v2277 = vpop.f32.mrb[0].mxu0
        %v2278 = vadd.f32 %v1900, %v2277
        %2279 = vmatprep.mubr.f32.mxu0 0.0
        %2280 = vmatmul.mubr.f32.gmra.mrb[0].mxu0 %v573
        %v2281 = vpop.f32.mrb[0].mxu0
        %v2282 = vadd.f32 %v1896, %v2281
        %v2283 = vpop.f32.mrb[0].mxu0
        %v2284 = vadd.f32 %v1900, %v2283
        %2285 = vmatprep.mubr.f32.mxu0 0.0
        %2286 = vmatmul.mubr.f32.gmra.mrb[0].mxu0 %v574
        %v2287 = vpop.f32.mrb[0].mxu0
        %v2288 = vadd.f32 %v1896, %v2287
        %v2289 = vpop.f32.mrb[0].mxu0
        %v2290 = vadd.f32 %v1900, %v2289
        %2291 = vmatprep.mubr.f32.mxu0 0.0
        %2292 = vmatmul.mubr.f32.gmra.mrb[0].mxu0 %v575
        %v2293 = vpop.f32.mrb[0].mxu0
        %v2294 = vadd.f32 %v1896, %v2293
        %v2295 = vpop.f32.mrb[0].mxu0
        %v2296 = vadd.f32 %v1900, %v2295
        %2297 = vmatprep.mubr.f32.mxu0 0.0
        %2298 = vmatmul.mubr.f32.gmra.mrb[0].mxu0 %v576
        %v2299 = vpop.f32.mrb[0].mxu0
        %v2300 = vadd.f32 %v1896, %v2299
        %v2301 = vpop.f32.mrb[0].mxu0
        %v2302 = vadd.f32 %v1900, %v2301
        %2303 = vmatprep.mubr.f32.mxu0 0.0
        %2304 = vmatmul.mubr.f32.gmra.mrb[0].mxu0 %v577
        %v2305 = vpop.f32.mrb[0].mxu0
        %v2306 = vadd.f32 %v1896, %v2305
        %v2307 = vpop.f32.mrb[0].mxu0
        %v2308 = vadd.f32 %v1900, %v2307
        %2309 = vmatprep.mubr.f32.mxu0 0.0
        %2310 = vmatmul.mubr.f32.gmra.mrb[0].mxu0 %v578
        %v2311 = vpop.f32.mrb[0].mxu0
        %v2312 = vadd.f32 %v1896, %v2311
        %v2313 = vpop.f32.mrb[0].mxu0
        %v2314 = vadd.f32 %v1900, %v2313
        %2315 = vmatprep.mubr.f32.mxu0 0.0
        %2316 = vmatmul.mubr.f32.gmra.mrb[0].mxu0 %v579
        %v2317 = vpop.f32.mrb[0].mxu0
        %v2318 = vadd.f32 %v1896, %v2317
        %v2319 = vpop.f32.mrb[0].mxu0
        %v2320 = vadd.f32 %v1900, %v2319
        %2321 = vmatprep.mubr.f32.mxu0 0.0
        %2322 = vmatmul.mubr.f32.gmra.mrb[0].mxu0 %v580
        %v2323 = vpop.f32.mrb[0].mxu0
        %v2324 = vadd.f32 %v1896, %v2323
        %v2325 = vpop.f32.mrb[0].mxu0
        %v2326 = vadd.f32 %v1900, %v2325
        %2327 = vmatprep.mubr.f32.mxu0 0.0
        %2328 = vmatmul.mubr.f32.gmra.mrb[0].mxu0 %v581
        %v2329 = vpop.f32.mrb[0].mxu0
        %v2330 = vadd.f32 %v1896, %v2329
        %v2331 = vpop.f32.mrb[0].mxu0
        %v2332 = vadd.f32 %v1900, %v2331
        %2333 = vmatprep.mubr.f32.mxu0 0.0
        %2334 = vmatmul.mubr.f32.gmra.mrb[0].mxu0 %v582
        %v2335 = vpop.f32.mrb[0].mxu0
        %v2336 = vadd.f32 %v1896, %v2335
        %v2337 = vpop.f32.mrb[0].mxu0
        %v2338 = vadd.f32 %v1900, %v2337
        %2339 = vmatprep.mubr.f32.mxu0 0.0
        %2340 = vmatmul.mubr.f32.gmra.mrb[0].mxu0 %v583
        %v2341 = vpop.f32.mrb[0].mxu0
        %v2342 = vadd.f32 %v1896, %v2341
        %v2343 = vpop.f32.mrb[0].mxu0
        %v2344 = vadd.f32 %v1900, %v2343
        %2345 = vmatprep.mubr.f32.mxu0 0.0
        %2346 = vmatmul.mubr.f32.gmra.mrb[0].mxu0 %v584
        %v2347 = vpop.f32.mrb[0].mxu0
        %v2348 = vadd.f32 %v1896, %v2347
        %v2349 = vpop.f32.mrb[0].mxu0
        %v2350 = vadd.f32 %v1900, %v2349
        %2351 = vdwg.mxu0
        %v2352 = vmax.f32 %v1970, 0.0
        %v2353 = vmax.f32 %v1972, 0.0
        %v2354 = vmax.f32 %v1976, 0.0
        %v2355 = vmax.f32 %v1978, 0.0
        %v2356 = vmax.f32 %v1982, 0.0
        %v2357 = vmax.f32 %v1984, 0.0
        %v2358 = vmax.f32 %v1988, 0.0
        %v2359 = vmax.f32 %v1990, 0.0
        %v2360 = vmax.f32 %v1994, 0.0
        %v2361 = vmax.f32 %v1996, 0.0
        %v2362 = vmax.f32 %v2000, 0.0
        %v2363 = vmax.f32 %v2002, 0.0
        %v2364 = vmax.f32 %v2006, 0.0
        %v2365 = vmax.f32 %v2008, 0.0
        %v2366 = vmax.f32 %v2012, 0.0
        %v2367 = vmax.f32 %v2014, 0.0
        %v2368 = vmax.f32 %v2018, 0.0
        %v2369 = vmax.f32 %v2020, 0.0
        %v2370 = vmax.f32 %v2024, 0.0
        %v2371 = vmax.f32 %v2026, 0.0
        %v2372 = vmax.f32 %v2030, 0.0
        %v2373 = vmax.f32 %v2032, 0.0
        %v2374 = vmax.f32 %v2036, 0.0
        %v2375 = vmax.f32 %v2038, 0.0
        %v2376 = vmax.f32 %v2042, 0.0
        %v2377 = vmax.f32 %v2044, 0.0
        %v2378 = vmax.f32 %v2048, 0.0
        %v2379 = vmax.f32 %v2050, 0.0
        %v2380 = vmax.f32 %v2054, 0.0
        %v2381 = vmax.f32 %v2056, 0.0
        %v2382 = vmax.f32 %v2060, 0.0
        %v2383 = vmax.f32 %v2062, 0.0
        %v2384 = vmax.f32 %v2066, 0.0
        %v2385 = vmax.f32 %v2068, 0.0
        %v2386 = vmax.f32 %v2072, 0.0
        %v2387 = vmax.f32 %v2074, 0.0
        %v2388 = vmax.f32 %v2078, 0.0
        %v2389 = vmax.f32 %v2080, 0.0
        %v2390 = vmax.f32 %v2084, 0.0
        %v2391 = vmax.f32 %v2086, 0.0
        %v2392 = vmax.f32 %v2090, 0.0
        %v2393 = vmax.f32 %v2092, 0.0
        %v2394 = vmax.f32 %v2096, 0.0
        %v2395 = vmax.f32 %v2098, 0.0
        %v2396 = vmax.f32 %v2102, 0.0
        %v2397 = vmax.f32 %v2104, 0.0
        %v2398 = vmax.f32 %v2108, 0.0
        %v2399 = vmax.f32 %v2110, 0.0
        %v2400 = vmax.f32 %v2114, 0.0
        %v2401 = vmax.f32 %v2116, 0.0
        %v2402 = vmax.f32 %v2120, 0.0
        %v2403 = vmax.f32 %v2122, 0.0
        %v2404 = vmax.f32 %v2126, 0.0
        %v2405 = vmax.f32 %v2128, 0.0
        %v2406 = vmax.f32 %v2132, 0.0
        %v2407 = vmax.f32 %v2134, 0.0
        %v2408 = vmax.f32 %v2138, 0.0
        %v2409 = vmax.f32 %v2140, 0.0
        %v2410 = vmax.f32 %v2144, 0.0
        %v2411 = vmax.f32 %v2146, 0.0
        %v2412 = vmax.f32 %v2150, 0.0
        %v2413 = vmax.f32 %v2152, 0.0
        %v2414 = vmax.f32 %v2156, 0.0
        %v2415 = vmax.f32 %v2158, 0.0
        %v2416 = vmax.f32 %v2162, 0.0
        %v2417 = vmax.f32 %v2164, 0.0
        %v2418 = vmax.f32 %v2168, 0.0
        %v2419 = vmax.f32 %v2170, 0.0
        %v2420 = vmax.f32 %v2174, 0.0
        %v2421 = vmax.f32 %v2176, 0.0
        %v2422 = vmax.f32 %v2180, 0.0
        %v2423 = vmax.f32 %v2182, 0.0
        %v2424 = vmax.f32 %v2186, 0.0
        %v2425 = vmax.f32 %v2188, 0.0
        %v2426 = vmax.f32 %v2192, 0.0
        %v2427 = vmax.f32 %v2194, 0.0
        %v2428 = vmax.f32 %v2198, 0.0
        %v2429 = vmax.f32 %v2200, 0.0
        %v2430 = vmax.f32 %v2204, 0.0
        %v2431 = vmax.f32 %v2206, 0.0
        %v2432 = vmax.f32 %v2210, 0.0
        %v2433 = vmax.f32 %v2212, 0.0
        %v2434 = vmax.f32 %v2216, 0.0
        %v2435 = vmax.f32 %v2218, 0.0
        %v2436 = vmax.f32 %v2222, 0.0
        %v2437 = vmax.f32 %v2224, 0.0
        %v2438 = vmax.f32 %v2228, 0.0
        %v2439 = vmax.f32 %v2230, 0.0
        %v2440 = vmax.f32 %v2234, 0.0
        %v2441 = vmax.f32 %v2236, 0.0
        %v2442 = vmax.f32 %v2240, 0.0
        %v2443 = vmax.f32 %v2242, 0.0
        %v2444 = vmax.f32 %v2246, 0.0
        %v2445 = vmax.f32 %v2248, 0.0
        %v2446 = vmax.f32 %v2252, 0.0
        %v2447 = vmax.f32 %v2254, 0.0
        %v2448 = vmax.f32 %v2258, 0.0
        %v2449 = vmax.f32 %v2260, 0.0
        %v2450 = vmax.f32 %v2264, 0.0
        %v2451 = vmax.f32 %v2266, 0.0
        %v2452 = vmax.f32 %v2270, 0.0
        %v2453 = vmax.f32 %v2272, 0.0
        %v2454 = vmax.f32 %v2276, 0.0
        %v2455 = vmax.f32 %v2278, 0.0
        %v2456 = vmax.f32 %v2282, 0.0
        %v2457 = vmax.f32 %v2284, 0.0
        %v2458 = vmax.f32 %v2288, 0.0
        %v2459 = vmax.f32 %v2290, 0.0
        %v2460 = vmax.f32 %v2294, 0.0
        %v2461 = vmax.f32 %v2296, 0.0
        %v2462 = vmax.f32 %v2300, 0.0
        %v2463 = vmax.f32 %v2302, 0.0
        %v2464 = vmax.f32 %v2306, 0.0
        %v2465 = vmax.f32 %v2308, 0.0
        %v2466 = vmax.f32 %v2312, 0.0
        %v2467 = vmax.f32 %v2314, 0.0
        %v2468 = vmax.f32 %v2318, 0.0
        %v2469 = vmax.f32 %v2320, 0.0
        %v2470 = vmax.f32 %v2324, 0.0
        %v2471 = vmax.f32 %v2326, 0.0
        %v2472 = vmax.f32 %v2330, 0.0
        %v2473 = vmax.f32 %v2332, 0.0
        %v2474 = vmax.f32 %v2336, 0.0
        %v2475 = vmax.f32 %v2338, 0.0
        %v2476 = vmax.f32 %v2342, 0.0
        %v2477 = vmax.f32 %v2344, 0.0
        %v2478 = vmax.f32 %v2348, 0.0
        %v2479 = vmax.f32 %v2350, 0.0
        %v2480 = vld [vmem:[#allocation11] sm:$0xff]
        %v2481 = vld [vmem:[#allocation11 + $0x8] sm:$0xff]
        %v2482 = vld [vmem:[#allocation11 + $0x10] sm:$0xff]
        %v2483 = vld [vmem:[#allocation11 + $0x18] sm:$0xff]
        %v2484 = vld [vmem:[#allocation11 + $0x20] sm:$0xff]
        %v2485 = vld [vmem:[#allocation11 + $0x28] sm:$0xff]
        %v2486 = vld [vmem:[#allocation11 + $0x30] sm:$0xff]
        %v2487 = vld [vmem:[#allocation11 + $0x38] sm:$0xff]
        %v2488 = vld [vmem:[#allocation11 + $0x40] sm:$0xff]
        %v2489 = vld [vmem:[#allocation11 + $0x48] sm:$0xff]
        %v2490 = vld [vmem:[#allocation11 + $0x50] sm:$0xff]
        %v2491 = vld [vmem:[#allocation11 + $0x58] sm:$0xff]
        %v2492 = vld [vmem:[#allocation11 + $0x60] sm:$0xff]
        %v2493 = vld [vmem:[#allocation11 + $0x68] sm:$0xff]
        %v2494 = vld [vmem:[#allocation11 + $0x70] sm:$0xff]
        %v2495 = vld [vmem:[#allocation11 + $0x78] sm:$0xff]
        %v2496 = vld [vmem:[#allocation11 + $0x80] sm:$0xff]
        %v2497 = vld [vmem:[#allocation11 + $0x88] sm:$0xff]
        %v2498 = vld [vmem:[#allocation11 + $0x90] sm:$0xff]
        %v2499 = vld [vmem:[#allocation11 + $0x98] sm:$0xff]
        %v2500 = vld [vmem:[#allocation11 + $0xa0] sm:$0xff]
        %v2501 = vld [vmem:[#allocation11 + $0xa8] sm:$0xff]
        %v2502 = vld [vmem:[#allocation11 + $0xb0] sm:$0xff]
        %v2503 = vld [vmem:[#allocation11 + $0xb8] sm:$0xff]
        %v2504 = vld [vmem:[#allocation11 + $0xc0] sm:$0xff]
        %v2505 = vld [vmem:[#allocation11 + $0xc8] sm:$0xff]
        %v2506 = vld [vmem:[#allocation11 + $0xd0] sm:$0xff]
        %v2507 = vld [vmem:[#allocation11 + $0xd8] sm:$0xff]
        %v2508 = vld [vmem:[#allocation11 + $0xe0] sm:$0xff]
        %v2509 = vld [vmem:[#allocation11 + $0xe8] sm:$0xff]
        %v2510 = vld [vmem:[#allocation11 + $0xf0] sm:$0xff]
        %v2511 = vld [vmem:[#allocation11 + $0xf8] sm:$0xff]
        %v2512 = vld [vmem:[#allocation11 + $0x100] sm:$0xff]
        %v2513 = vld [vmem:[#allocation11 + $0x108] sm:$0xff]
        %v2514 = vld [vmem:[#allocation11 + $0x110] sm:$0xff]
        %v2515 = vld [vmem:[#allocation11 + $0x118] sm:$0xff]
        %v2516 = vld [vmem:[#allocation11 + $0x120] sm:$0xff]
        %v2517 = vld [vmem:[#allocation11 + $0x128] sm:$0xff]
        %v2518 = vld [vmem:[#allocation11 + $0x130] sm:$0xff]
        %v2519 = vld [vmem:[#allocation11 + $0x138] sm:$0xff]
        %v2520 = vld [vmem:[#allocation11 + $0x140] sm:$0xff]
        %v2521 = vld [vmem:[#allocation11 + $0x148] sm:$0xff]
        %v2522 = vld [vmem:[#allocation11 + $0x150] sm:$0xff]
        %v2523 = vld [vmem:[#allocation11 + $0x158] sm:$0xff]
        %v2524 = vld [vmem:[#allocation11 + $0x160] sm:$0xff]
        %v2525 = vld [vmem:[#allocation11 + $0x168] sm:$0xff]
        %v2526 = vld [vmem:[#allocation11 + $0x170] sm:$0xff]
        %v2527 = vld [vmem:[#allocation11 + $0x178] sm:$0xff]
        %v2528 = vld [vmem:[#allocation11 + $0x180] sm:$0xff]
        %v2529 = vld [vmem:[#allocation11 + $0x188] sm:$0xff]
        %v2530 = vld [vmem:[#allocation11 + $0x190] sm:$0xff]
        %v2531 = vld [vmem:[#allocation11 + $0x198] sm:$0xff]
        %v2532 = vld [vmem:[#allocation11 + $0x1a0] sm:$0xff]
        %v2533 = vld [vmem:[#allocation11 + $0x1a8] sm:$0xff]
        %v2534 = vld [vmem:[#allocation11 + $0x1b0] sm:$0xff]
        %v2535 = vld [vmem:[#allocation11 + $0x1b8] sm:$0xff]
        %v2536 = vld [vmem:[#allocation11 + $0x1c0] sm:$0xff]
        %v2537 = vld [vmem:[#allocation11 + $0x1c8] sm:$0xff]
        %v2538 = vld [vmem:[#allocation11 + $0x1d0] sm:$0xff]
        %v2539 = vld [vmem:[#allocation11 + $0x1d8] sm:$0xff]
        %v2540 = vld [vmem:[#allocation11 + $0x1e0] sm:$0xff]
        %v2541 = vld [vmem:[#allocation11 + $0x1e8] sm:$0xff]
        %v2542 = vld [vmem:[#allocation11 + $0x1f0] sm:$0xff]
        %v2543 = vld [vmem:[#allocation11 + $0x1f8] sm:$0xff]
        %v2544 = vld [vmem:[%s9] sm:$0x3]
        %v2546 = vlaneseq
        %v2547 = vshrl.u32 %v2546, 7
        %v2548 = vsub.s32 0, %v2547
        %v2549 = vrot.slane %v2544, %v2548
        %v2550 = vlaneseq
        %v2551 = vshrl.u32 %v2550, 7
        %v2552 = vsub.s32 1, %v2551
        %v2553 = vrot.slane %v2544, %v2552
        %2556 = vmatprep.subr.mxu0 %v2481
        %2557 = vmatpush1.msra.mxu0 %v2480
        %2558 = vmatprep.subr.mxu0 %v2483
        %2559 = vmatpush1.msra.mxu0 %v2482
        %2560 = vmatprep.subr.mxu0 %v2485
        %2561 = vmatpush1.msra.mxu0 %v2484
        %2562 = vmatprep.subr.mxu0 %v2487
        %2563 = vmatpush1.msra.mxu0 %v2486
        %2564 = vmatprep.subr.mxu0 %v2489
        %2565 = vmatpush1.msra.mxu0 %v2488
        %2566 = vmatprep.subr.mxu0 %v2491
        %2567 = vmatpush1.msra.mxu0 %v2490
        %2568 = vmatprep.subr.mxu0 %v2493
        %2569 = vmatpush1.msra.mxu0 %v2492
        %2570 = vmatprep.subr.mxu0 %v2495
        %2571 = vmatpush1.msra.mxu0 %v2494
        %2572 = vmatprep.subr.mxu0 %v2497
        %2573 = vmatpush1.msra.mxu0 %v2496
        %2574 = vmatprep.subr.mxu0 %v2499
        %2575 = vmatpush1.msra.mxu0 %v2498
        %2576 = vmatprep.subr.mxu0 %v2501
        %2577 = vmatpush1.msra.mxu0 %v2500
        %2578 = vmatprep.subr.mxu0 %v2503
        %2579 = vmatpush1.msra.mxu0 %v2502
        %2580 = vmatprep.subr.mxu0 %v2505
        %2581 = vmatpush1.msra.mxu0 %v2504
        %2582 = vmatprep.subr.mxu0 %v2507
        %2583 = vmatpush1.msra.mxu0 %v2506
        %2584 = vmatprep.subr.mxu0 %v2509
        %2585 = vmatpush1.msra.mxu0 %v2508
        %2586 = vmatprep.subr.mxu0 %v2511
        %2587 = vmatpush1.msra.mxu0 %v2510
        %2588 = vmatprep.subr.mxu0 %v2513
        %2589 = vmatpush1.msra.mxu0 %v2512
        %2590 = vmatprep.subr.mxu0 %v2515
        %2591 = vmatpush1.msra.mxu0 %v2514
        %2592 = vmatprep.subr.mxu0 %v2517
        %2593 = vmatpush1.msra.mxu0 %v2516
        %2594 = vmatprep.subr.mxu0 %v2519
        %2595 = vmatpush1.msra.mxu0 %v2518
        %2596 = vmatprep.subr.mxu0 %v2521
        %2597 = vmatpush1.msra.mxu0 %v2520
        %2598 = vmatprep.subr.mxu0 %v2523
        %2599 = vmatpush1.msra.mxu0 %v2522
        %2600 = vmatprep.subr.mxu0 %v2525
        %2601 = vmatpush1.msra.mxu0 %v2524
        %2602 = vmatprep.subr.mxu0 %v2527
        %2603 = vmatpush1.msra.mxu0 %v2526
        %2604 = vmatprep.subr.mxu0 %v2529
        %2605 = vmatpush1.msra.mxu0 %v2528
        %2606 = vmatprep.subr.mxu0 %v2531
        %2607 = vmatpush1.msra.mxu0 %v2530
        %2608 = vmatprep.subr.mxu0 %v2533
        %2609 = vmatpush1.msra.mxu0 %v2532
        %2610 = vmatprep.subr.mxu0 %v2535
        %2611 = vmatpush1.msra.mxu0 %v2534
        %2612 = vmatprep.subr.mxu0 %v2537
        %2613 = vmatpush1.msra.mxu0 %v2536
        %2614 = vmatprep.subr.mxu0 %v2539
        %2615 = vmatpush1.msra.mxu0 %v2538
        %2616 = vmatprep.subr.mxu0 %v2541
        %2617 = vmatpush1.msra.mxu0 %v2540
        %2618 = vmatprep.subr.mxu0 %v2543
        %2619 = vmatpush1.msra.mxu0 %v2542
        %2620 = vmatprep.mubr.f32.mxu0 %v2353
        %2621 = vmatmul.mubr.f32.gmra.mrb[0].mxu0 %v2352
        %v2622 = vpop.f32.mrb[0].mxu0
        %v2623 = vadd.f32 %v2549, %v2622
        %v2624 = vpop.f32.mrb[0].mxu0
        %v2625 = vadd.f32 %v2553, %v2624
        %2626 = vmatprep.mubr.f32.mxu0 %v2355
        %2627 = vmatmul.mubr.f32.gmra.mrb[0].mxu0 %v2354
        %v2628 = vpop.f32.mrb[0].mxu0
        %v2629 = vadd.f32 %v2549, %v2628
        %v2630 = vpop.f32.mrb[0].mxu0
        %v2631 = vadd.f32 %v2553, %v2630
        %2632 = vmatprep.mubr.f32.mxu0 %v2357
        %2633 = vmatmul.mubr.f32.gmra.mrb[0].mxu0 %v2356
        %v2634 = vpop.f32.mrb[0].mxu0
        %v2635 = vadd.f32 %v2549, %v2634
        %v2636 = vpop.f32.mrb[0].mxu0
        %v2637 = vadd.f32 %v2553, %v2636
        %2638 = vmatprep.mubr.f32.mxu0 %v2359
        %2639 = vmatmul.mubr.f32.gmra.mrb[0].mxu0 %v2358
        %v2640 = vpop.f32.mrb[0].mxu0
        %v2641 = vadd.f32 %v2549, %v2640
        %v2642 = vpop.f32.mrb[0].mxu0
        %v2643 = vadd.f32 %v2553, %v2642
        %2644 = vmatprep.mubr.f32.mxu0 %v2361
        %2645 = vmatmul.mubr.f32.gmra.mrb[0].mxu0 %v2360
        %v2646 = vpop.f32.mrb[0].mxu0
        %v2647 = vadd.f32 %v2549, %v2646
        %v2648 = vpop.f32.mrb[0].mxu0
        %v2649 = vadd.f32 %v2553, %v2648
        %2650 = vmatprep.mubr.f32.mxu0 %v2363
        %2651 = vmatmul.mubr.f32.gmra.mrb[0].mxu0 %v2362
        %v2652 = vpop.f32.mrb[0].mxu0
        %v2653 = vadd.f32 %v2549, %v2652
        %v2654 = vpop.f32.mrb[0].mxu0
        %v2655 = vadd.f32 %v2553, %v2654
        %2656 = vmatprep.mubr.f32.mxu0 %v2365
        %2657 = vmatmul.mubr.f32.gmra.mrb[0].mxu0 %v2364
        %v2658 = vpop.f32.mrb[0].mxu0
        %v2659 = vadd.f32 %v2549, %v2658
        %v2660 = vpop.f32.mrb[0].mxu0
        %v2661 = vadd.f32 %v2553, %v2660
        %2662 = vmatprep.mubr.f32.mxu0 %v2367
        %2663 = vmatmul.mubr.f32.gmra.mrb[0].mxu0 %v2366
        %v2664 = vpop.f32.mrb[0].mxu0
        %v2665 = vadd.f32 %v2549, %v2664
        %v2666 = vpop.f32.mrb[0].mxu0
        %v2667 = vadd.f32 %v2553, %v2666
        %2668 = vmatprep.mubr.f32.mxu0 %v2369
        %2669 = vmatmul.mubr.f32.gmra.mrb[0].mxu0 %v2368
        %v2670 = vpop.f32.mrb[0].mxu0
        %v2671 = vadd.f32 %v2549, %v2670
        %v2672 = vpop.f32.mrb[0].mxu0
        %v2673 = vadd.f32 %v2553, %v2672
        %2674 = vmatprep.mubr.f32.mxu0 %v2371
        %2675 = vmatmul.mubr.f32.gmra.mrb[0].mxu0 %v2370
        %v2676 = vpop.f32.mrb[0].mxu0
        %v2677 = vadd.f32 %v2549, %v2676
        %v2678 = vpop.f32.mrb[0].mxu0
        %v2679 = vadd.f32 %v2553, %v2678
        %2680 = vmatprep.mubr.f32.mxu0 %v2373
        %2681 = vmatmul.mubr.f32.gmra.mrb[0].mxu0 %v2372
        %v2682 = vpop.f32.mrb[0].mxu0
        %v2683 = vadd.f32 %v2549, %v2682
        %v2684 = vpop.f32.mrb[0].mxu0
        %v2685 = vadd.f32 %v2553, %v2684
        %2686 = vmatprep.mubr.f32.mxu0 %v2375
        %2687 = vmatmul.mubr.f32.gmra.mrb[0].mxu0 %v2374
        %v2688 = vpop.f32.mrb[0].mxu0
        %v2689 = vadd.f32 %v2549, %v2688
        %v2690 = vpop.f32.mrb[0].mxu0
        %v2691 = vadd.f32 %v2553, %v2690
        %2692 = vmatprep.mubr.f32.mxu0 %v2377
        %2693 = vmatmul.mubr.f32.gmra.mrb[0].mxu0 %v2376
        %v2694 = vpop.f32.mrb[0].mxu0
        %v2695 = vadd.f32 %v2549, %v2694
        %v2696 = vpop.f32.mrb[0].mxu0
        %v2697 = vadd.f32 %v2553, %v2696
        %2698 = vmatprep.mubr.f32.mxu0 %v2379
        %2699 = vmatmul.mubr.f32.gmra.mrb[0].mxu0 %v2378
        %v2700 = vpop.f32.mrb[0].mxu0
        %v2701 = vadd.f32 %v2549, %v2700
        %v2702 = vpop.f32.mrb[0].mxu0
        %v2703 = vadd.f32 %v2553, %v2702
        %2704 = vmatprep.mubr.f32.mxu0 %v2381
        %2705 = vmatmul.mubr.f32.gmra.mrb[0].mxu0 %v2380
        %v2706 = vpop.f32.mrb[0].mxu0
        %v2707 = vadd.f32 %v2549, %v2706
        %v2708 = vpop.f32.mrb[0].mxu0
        %v2709 = vadd.f32 %v2553, %v2708
        %2710 = vmatprep.mubr.f32.mxu0 %v2383
        %2711 = vmatmul.mubr.f32.gmra.mrb[0].mxu0 %v2382
        %v2712 = vpop.f32.mrb[0].mxu0
        %v2713 = vadd.f32 %v2549, %v2712
        %v2714 = vpop.f32.mrb[0].mxu0
        %v2715 = vadd.f32 %v2553, %v2714
        %2716 = vmatprep.mubr.f32.mxu0 %v2385
        %2717 = vmatmul.mubr.f32.gmra.mrb[0].mxu0 %v2384
        %v2718 = vpop.f32.mrb[0].mxu0
        %v2719 = vadd.f32 %v2549, %v2718
        %v2720 = vpop.f32.mrb[0].mxu0
        %v2721 = vadd.f32 %v2553, %v2720
        %2722 = vmatprep.mubr.f32.mxu0 %v2387
        %2723 = vmatmul.mubr.f32.gmra.mrb[0].mxu0 %v2386
        %v2724 = vpop.f32.mrb[0].mxu0
        %v2725 = vadd.f32 %v2549, %v2724
        %v2726 = vpop.f32.mrb[0].mxu0
        %v2727 = vadd.f32 %v2553, %v2726
        %2728 = vmatprep.mubr.f32.mxu0 %v2389
        %2729 = vmatmul.mubr.f32.gmra.mrb[0].mxu0 %v2388
        %v2730 = vpop.f32.mrb[0].mxu0
        %v2731 = vadd.f32 %v2549, %v2730
        %v2732 = vpop.f32.mrb[0].mxu0
        %v2733 = vadd.f32 %v2553, %v2732
        %2734 = vmatprep.mubr.f32.mxu0 %v2391
        %2735 = vmatmul.mubr.f32.gmra.mrb[0].mxu0 %v2390
        %v2736 = vpop.f32.mrb[0].mxu0
        %v2737 = vadd.f32 %v2549, %v2736
        %v2738 = vpop.f32.mrb[0].mxu0
        %v2739 = vadd.f32 %v2553, %v2738
        %2740 = vmatprep.mubr.f32.mxu0 %v2393
        %2741 = vmatmul.mubr.f32.gmra.mrb[0].mxu0 %v2392
        %v2742 = vpop.f32.mrb[0].mxu0
        %v2743 = vadd.f32 %v2549, %v2742
        %v2744 = vpop.f32.mrb[0].mxu0
        %v2745 = vadd.f32 %v2553, %v2744
        %2746 = vmatprep.mubr.f32.mxu0 %v2395
        %2747 = vmatmul.mubr.f32.gmra.mrb[0].mxu0 %v2394
        %v2748 = vpop.f32.mrb[0].mxu0
        %v2749 = vadd.f32 %v2549, %v2748
        %v2750 = vpop.f32.mrb[0].mxu0
        %v2751 = vadd.f32 %v2553, %v2750
        %2752 = vmatprep.mubr.f32.mxu0 %v2397
        %2753 = vmatmul.mubr.f32.gmra.mrb[0].mxu0 %v2396
        %v2754 = vpop.f32.mrb[0].mxu0
        %v2755 = vadd.f32 %v2549, %v2754
        %v2756 = vpop.f32.mrb[0].mxu0
        %v2757 = vadd.f32 %v2553, %v2756
        %2758 = vmatprep.mubr.f32.mxu0 %v2399
        %2759 = vmatmul.mubr.f32.gmra.mrb[0].mxu0 %v2398
        %v2760 = vpop.f32.mrb[0].mxu0
        %v2761 = vadd.f32 %v2549, %v2760
        %v2762 = vpop.f32.mrb[0].mxu0
        %v2763 = vadd.f32 %v2553, %v2762
        %2764 = vmatprep.mubr.f32.mxu0 %v2401
        %2765 = vmatmul.mubr.f32.gmra.mrb[0].mxu0 %v2400
        %v2766 = vpop.f32.mrb[0].mxu0
        %v2767 = vadd.f32 %v2549, %v2766
        %v2768 = vpop.f32.mrb[0].mxu0
        %v2769 = vadd.f32 %v2553, %v2768
        %2770 = vmatprep.mubr.f32.mxu0 %v2403
        %2771 = vmatmul.mubr.f32.gmra.mrb[0].mxu0 %v2402
        %v2772 = vpop.f32.mrb[0].mxu0
        %v2773 = vadd.f32 %v2549, %v2772
        %v2774 = vpop.f32.mrb[0].mxu0
        %v2775 = vadd.f32 %v2553, %v2774
        %2776 = vmatprep.mubr.f32.mxu0 %v2405
        %2777 = vmatmul.mubr.f32.gmra.mrb[0].mxu0 %v2404
        %v2778 = vpop.f32.mrb[0].mxu0
        %v2779 = vadd.f32 %v2549, %v2778
        %v2780 = vpop.f32.mrb[0].mxu0
        %v2781 = vadd.f32 %v2553, %v2780
        %2782 = vmatprep.mubr.f32.mxu0 %v2407
        %2783 = vmatmul.mubr.f32.gmra.mrb[0].mxu0 %v2406
        %v2784 = vpop.f32.mrb[0].mxu0
        %v2785 = vadd.f32 %v2549, %v2784
        %v2786 = vpop.f32.mrb[0].mxu0
        %v2787 = vadd.f32 %v2553, %v2786
        %2788 = vmatprep.mubr.f32.mxu0 %v2409
        %2789 = vmatmul.mubr.f32.gmra.mrb[0].mxu0 %v2408
        %v2790 = vpop.f32.mrb[0].mxu0
        %v2791 = vadd.f32 %v2549, %v2790
        %v2792 = vpop.f32.mrb[0].mxu0
        %v2793 = vadd.f32 %v2553, %v2792
        %2794 = vmatprep.mubr.f32.mxu0 %v2411
        %2795 = vmatmul.mubr.f32.gmra.mrb[0].mxu0 %v2410
        %v2796 = vpop.f32.mrb[0].mxu0
        %v2797 = vadd.f32 %v2549, %v2796
        %v2798 = vpop.f32.mrb[0].mxu0
        %v2799 = vadd.f32 %v2553, %v2798
        %2800 = vmatprep.mubr.f32.mxu0 %v2413
        %2801 = vmatmul.mubr.f32.gmra.mrb[0].mxu0 %v2412
        %v2802 = vpop.f32.mrb[0].mxu0
        %v2803 = vadd.f32 %v2549, %v2802
        %v2804 = vpop.f32.mrb[0].mxu0
        %v2805 = vadd.f32 %v2553, %v2804
        %2806 = vmatprep.mubr.f32.mxu0 %v2415
        %2807 = vmatmul.mubr.f32.gmra.mrb[0].mxu0 %v2414
        %v2808 = vpop.f32.mrb[0].mxu0
        %v2809 = vadd.f32 %v2549, %v2808
        %v2810 = vpop.f32.mrb[0].mxu0
        %v2811 = vadd.f32 %v2553, %v2810
        %2812 = vmatprep.mubr.f32.mxu0 %v2417
        %2813 = vmatmul.mubr.f32.gmra.mrb[0].mxu0 %v2416
        %v2814 = vpop.f32.mrb[0].mxu0
        %v2815 = vadd.f32 %v2549, %v2814
        %v2816 = vpop.f32.mrb[0].mxu0
        %v2817 = vadd.f32 %v2553, %v2816
        %2818 = vmatprep.mubr.f32.mxu0 %v2419
        %2819 = vmatmul.mubr.f32.gmra.mrb[0].mxu0 %v2418
        %v2820 = vpop.f32.mrb[0].mxu0
        %v2821 = vadd.f32 %v2549, %v2820
        %v2822 = vpop.f32.mrb[0].mxu0
        %v2823 = vadd.f32 %v2553, %v2822
        %2824 = vmatprep.mubr.f32.mxu0 %v2421
        %2825 = vmatmul.mubr.f32.gmra.mrb[0].mxu0 %v2420
        %v2826 = vpop.f32.mrb[0].mxu0
        %v2827 = vadd.f32 %v2549, %v2826
        %v2828 = vpop.f32.mrb[0].mxu0
        %v2829 = vadd.f32 %v2553, %v2828
        %2830 = vmatprep.mubr.f32.mxu0 %v2423
        %2831 = vmatmul.mubr.f32.gmra.mrb[0].mxu0 %v2422
        %v2832 = vpop.f32.mrb[0].mxu0
        %v2833 = vadd.f32 %v2549, %v2832
        %v2834 = vpop.f32.mrb[0].mxu0
        %v2835 = vadd.f32 %v2553, %v2834
        %2836 = vmatprep.mubr.f32.mxu0 %v2425
        %2837 = vmatmul.mubr.f32.gmra.mrb[0].mxu0 %v2424
        %v2838 = vpop.f32.mrb[0].mxu0
        %v2839 = vadd.f32 %v2549, %v2838
        %v2840 = vpop.f32.mrb[0].mxu0
        %v2841 = vadd.f32 %v2553, %v2840
        %2842 = vmatprep.mubr.f32.mxu0 %v2427
        %2843 = vmatmul.mubr.f32.gmra.mrb[0].mxu0 %v2426
        %v2844 = vpop.f32.mrb[0].mxu0
        %v2845 = vadd.f32 %v2549, %v2844
        %v2846 = vpop.f32.mrb[0].mxu0
        %v2847 = vadd.f32 %v2553, %v2846
        %2848 = vmatprep.mubr.f32.mxu0 %v2429
        %2849 = vmatmul.mubr.f32.gmra.mrb[0].mxu0 %v2428
        %v2850 = vpop.f32.mrb[0].mxu0
        %v2851 = vadd.f32 %v2549, %v2850
        %v2852 = vpop.f32.mrb[0].mxu0
        %v2853 = vadd.f32 %v2553, %v2852
        %2854 = vmatprep.mubr.f32.mxu0 %v2431
        %2855 = vmatmul.mubr.f32.gmra.mrb[0].mxu0 %v2430
        %v2856 = vpop.f32.mrb[0].mxu0
        %v2857 = vadd.f32 %v2549, %v2856
        %v2858 = vpop.f32.mrb[0].mxu0
        %v2859 = vadd.f32 %v2553, %v2858
        %2860 = vmatprep.mubr.f32.mxu0 %v2433
        %2861 = vmatmul.mubr.f32.gmra.mrb[0].mxu0 %v2432
        %v2862 = vpop.f32.mrb[0].mxu0
        %v2863 = vadd.f32 %v2549, %v2862
        %v2864 = vpop.f32.mrb[0].mxu0
        %v2865 = vadd.f32 %v2553, %v2864
        %2866 = vmatprep.mubr.f32.mxu0 %v2435
        %2867 = vmatmul.mubr.f32.gmra.mrb[0].mxu0 %v2434
        %v2868 = vpop.f32.mrb[0].mxu0
        %v2869 = vadd.f32 %v2549, %v2868
        %v2870 = vpop.f32.mrb[0].mxu0
        %v2871 = vadd.f32 %v2553, %v2870
        %2872 = vmatprep.mubr.f32.mxu0 %v2437
        %2873 = vmatmul.mubr.f32.gmra.mrb[0].mxu0 %v2436
        %v2874 = vpop.f32.mrb[0].mxu0
        %v2875 = vadd.f32 %v2549, %v2874
        %v2876 = vpop.f32.mrb[0].mxu0
        %v2877 = vadd.f32 %v2553, %v2876
        %2878 = vmatprep.mubr.f32.mxu0 %v2439
        %2879 = vmatmul.mubr.f32.gmra.mrb[0].mxu0 %v2438
        %v2880 = vpop.f32.mrb[0].mxu0
        %v2881 = vadd.f32 %v2549, %v2880
        %v2882 = vpop.f32.mrb[0].mxu0
        %v2883 = vadd.f32 %v2553, %v2882
        %2884 = vmatprep.mubr.f32.mxu0 %v2441
        %2885 = vmatmul.mubr.f32.gmra.mrb[0].mxu0 %v2440
        %v2886 = vpop.f32.mrb[0].mxu0
        %v2887 = vadd.f32 %v2549, %v2886
        %v2888 = vpop.f32.mrb[0].mxu0
        %v2889 = vadd.f32 %v2553, %v2888
        %2890 = vmatprep.mubr.f32.mxu0 %v2443
        %2891 = vmatmul.mubr.f32.gmra.mrb[0].mxu0 %v2442
        %v2892 = vpop.f32.mrb[0].mxu0
        %v2893 = vadd.f32 %v2549, %v2892
        %v2894 = vpop.f32.mrb[0].mxu0
        %v2895 = vadd.f32 %v2553, %v2894
        %2896 = vmatprep.mubr.f32.mxu0 %v2445
        %2897 = vmatmul.mubr.f32.gmra.mrb[0].mxu0 %v2444
        %v2898 = vpop.f32.mrb[0].mxu0
        %v2899 = vadd.f32 %v2549, %v2898
        %v2900 = vpop.f32.mrb[0].mxu0
        %v2901 = vadd.f32 %v2553, %v2900
        %2902 = vmatprep.mubr.f32.mxu0 %v2447
        %2903 = vmatmul.mubr.f32.gmra.mrb[0].mxu0 %v2446
        %v2904 = vpop.f32.mrb[0].mxu0
        %v2905 = vadd.f32 %v2549, %v2904
        %v2906 = vpop.f32.mrb[0].mxu0
        %v2907 = vadd.f32 %v2553, %v2906
        %2908 = vmatprep.mubr.f32.mxu0 %v2449
        %2909 = vmatmul.mubr.f32.gmra.mrb[0].mxu0 %v2448
        %v2910 = vpop.f32.mrb[0].mxu0
        %v2911 = vadd.f32 %v2549, %v2910
        %v2912 = vpop.f32.mrb[0].mxu0
        %v2913 = vadd.f32 %v2553, %v2912
        %2914 = vmatprep.mubr.f32.mxu0 %v2451
        %2915 = vmatmul.mubr.f32.gmra.mrb[0].mxu0 %v2450
        %v2916 = vpop.f32.mrb[0].mxu0
        %v2917 = vadd.f32 %v2549, %v2916
        %v2918 = vpop.f32.mrb[0].mxu0
        %v2919 = vadd.f32 %v2553, %v2918
        %2920 = vmatprep.mubr.f32.mxu0 %v2453
        %2921 = vmatmul.mubr.f32.gmra.mrb[0].mxu0 %v2452
        %v2922 = vpop.f32.mrb[0].mxu0
        %v2923 = vadd.f32 %v2549, %v2922
        %v2924 = vpop.f32.mrb[0].mxu0
        %v2925 = vadd.f32 %v2553, %v2924
        %2926 = vmatprep.mubr.f32.mxu0 %v2455
        %2927 = vmatmul.mubr.f32.gmra.mrb[0].mxu0 %v2454
        %v2928 = vpop.f32.mrb[0].mxu0
        %v2929 = vadd.f32 %v2549, %v2928
        %v2930 = vpop.f32.mrb[0].mxu0
        %v2931 = vadd.f32 %v2553, %v2930
        %2932 = vmatprep.mubr.f32.mxu0 %v2457
        %2933 = vmatmul.mubr.f32.gmra.mrb[0].mxu0 %v2456
        %v2934 = vpop.f32.mrb[0].mxu0
        %v2935 = vadd.f32 %v2549, %v2934
        %v2936 = vpop.f32.mrb[0].mxu0
        %v2937 = vadd.f32 %v2553, %v2936
        %2938 = vmatprep.mubr.f32.mxu0 %v2459
        %2939 = vmatmul.mubr.f32.gmra.mrb[0].mxu0 %v2458
        %v2940 = vpop.f32.mrb[0].mxu0
        %v2941 = vadd.f32 %v2549, %v2940
        %v2942 = vpop.f32.mrb[0].mxu0
        %v2943 = vadd.f32 %v2553, %v2942
        %2944 = vmatprep.mubr.f32.mxu0 %v2461
        %2945 = vmatmul.mubr.f32.gmra.mrb[0].mxu0 %v2460
        %v2946 = vpop.f32.mrb[0].mxu0
        %v2947 = vadd.f32 %v2549, %v2946
        %v2948 = vpop.f32.mrb[0].mxu0
        %v2949 = vadd.f32 %v2553, %v2948
        %2950 = vmatprep.mubr.f32.mxu0 %v2463
        %2951 = vmatmul.mubr.f32.gmra.mrb[0].mxu0 %v2462
        %v2952 = vpop.f32.mrb[0].mxu0
        %v2953 = vadd.f32 %v2549, %v2952
        %v2954 = vpop.f32.mrb[0].mxu0
        %v2955 = vadd.f32 %v2553, %v2954
        %2956 = vmatprep.mubr.f32.mxu0 %v2465
        %2957 = vmatmul.mubr.f32.gmra.mrb[0].mxu0 %v2464
        %v2958 = vpop.f32.mrb[0].mxu0
        %v2959 = vadd.f32 %v2549, %v2958
        %v2960 = vpop.f32.mrb[0].mxu0
        %v2961 = vadd.f32 %v2553, %v2960
        %2962 = vmatprep.mubr.f32.mxu0 %v2467
        %2963 = vmatmul.mubr.f32.gmra.mrb[0].mxu0 %v2466
        %v2964 = vpop.f32.mrb[0].mxu0
        %v2965 = vadd.f32 %v2549, %v2964
        %v2966 = vpop.f32.mrb[0].mxu0
        %v2967 = vadd.f32 %v2553, %v2966
        %2968 = vmatprep.mubr.f32.mxu0 %v2469
        %2969 = vmatmul.mubr.f32.gmra.mrb[0].mxu0 %v2468
        %v2970 = vpop.f32.mrb[0].mxu0
        %v2971 = vadd.f32 %v2549, %v2970
        %v2972 = vpop.f32.mrb[0].mxu0
        %v2973 = vadd.f32 %v2553, %v2972
        %2974 = vmatprep.mubr.f32.mxu0 %v2471
        %2975 = vmatmul.mubr.f32.gmra.mrb[0].mxu0 %v2470
        %v2976 = vpop.f32.mrb[0].mxu0
        %v2977 = vadd.f32 %v2549, %v2976
        %v2978 = vpop.f32.mrb[0].mxu0
        %v2979 = vadd.f32 %v2553, %v2978
        %2980 = vmatprep.mubr.f32.mxu0 %v2473
        %2981 = vmatmul.mubr.f32.gmra.mrb[0].mxu0 %v2472
        %v2982 = vpop.f32.mrb[0].mxu0
        %v2983 = vadd.f32 %v2549, %v2982
        %v2984 = vpop.f32.mrb[0].mxu0
        %v2985 = vadd.f32 %v2553, %v2984
        %2986 = vmatprep.mubr.f32.mxu0 %v2475
        %2987 = vmatmul.mubr.f32.gmra.mrb[0].mxu0 %v2474
        %v2988 = vpop.f32.mrb[0].mxu0
        %v2989 = vadd.f32 %v2549, %v2988
        %v2990 = vpop.f32.mrb[0].mxu0
        %v2991 = vadd.f32 %v2553, %v2990
        %2992 = vmatprep.mubr.f32.mxu0 %v2477
        %2993 = vmatmul.mubr.f32.gmra.mrb[0].mxu0 %v2476
        %v2994 = vpop.f32.mrb[0].mxu0
        %v2995 = vadd.f32 %v2549, %v2994
        %v2996 = vpop.f32.mrb[0].mxu0
        %v2997 = vadd.f32 %v2553, %v2996
        %2998 = vmatprep.mubr.f32.mxu0 %v2479
        %2999 = vmatmul.mubr.f32.gmra.mrb[0].mxu0 %v2478
        %v3000 = vpop.f32.mrb[0].mxu0
        %v3001 = vadd.f32 %v2549, %v3000
        %v3002 = vpop.f32.mrb[0].mxu0
        %v3003 = vadd.f32 %v2553, %v3002
        %3004 = vdwg.mxu0
        %v3005 = vmax.f32 %v2623, 0.0
        %v3006 = vmax.f32 %v2625, 0.0
        %v3007 = vmax.f32 %v2629, 0.0
        %v3008 = vmax.f32 %v2631, 0.0
        %v3009 = vmax.f32 %v2635, 0.0
        %v3010 = vmax.f32 %v2637, 0.0
        %v3011 = vmax.f32 %v2641, 0.0
        %v3012 = vmax.f32 %v2643, 0.0
        %v3013 = vmax.f32 %v2647, 0.0
        %v3014 = vmax.f32 %v2649, 0.0
        %v3015 = vmax.f32 %v2653, 0.0
        %v3016 = vmax.f32 %v2655, 0.0
        %v3017 = vmax.f32 %v2659, 0.0
        %v3018 = vmax.f32 %v2661, 0.0
        %v3019 = vmax.f32 %v2665, 0.0
        %v3020 = vmax.f32 %v2667, 0.0
        %v3021 = vmax.f32 %v2671, 0.0
        %v3022 = vmax.f32 %v2673, 0.0
        %v3023 = vmax.f32 %v2677, 0.0
        %v3024 = vmax.f32 %v2679, 0.0
        %v3025 = vmax.f32 %v2683, 0.0
        %v3026 = vmax.f32 %v2685, 0.0
        %v3027 = vmax.f32 %v2689, 0.0
        %v3028 = vmax.f32 %v2691, 0.0
        %v3029 = vmax.f32 %v2695, 0.0
        %v3030 = vmax.f32 %v2697, 0.0
        %v3031 = vmax.f32 %v2701, 0.0
        %v3032 = vmax.f32 %v2703, 0.0
        %v3033 = vmax.f32 %v2707, 0.0
        %v3034 = vmax.f32 %v2709, 0.0
        %v3035 = vmax.f32 %v2713, 0.0
        %v3036 = vmax.f32 %v2715, 0.0
        %v3037 = vmax.f32 %v2719, 0.0
        %v3038 = vmax.f32 %v2721, 0.0
        %v3039 = vmax.f32 %v2725, 0.0
        %v3040 = vmax.f32 %v2727, 0.0
        %v3041 = vmax.f32 %v2731, 0.0
        %v3042 = vmax.f32 %v2733, 0.0
        %v3043 = vmax.f32 %v2737, 0.0
        %v3044 = vmax.f32 %v2739, 0.0
        %v3045 = vmax.f32 %v2743, 0.0
        %v3046 = vmax.f32 %v2745, 0.0
        %v3047 = vmax.f32 %v2749, 0.0
        %v3048 = vmax.f32 %v2751, 0.0
        %v3049 = vmax.f32 %v2755, 0.0
        %v3050 = vmax.f32 %v2757, 0.0
        %v3051 = vmax.f32 %v2761, 0.0
        %v3052 = vmax.f32 %v2763, 0.0
        %v3053 = vmax.f32 %v2767, 0.0
        %v3054 = vmax.f32 %v2769, 0.0
        %v3055 = vmax.f32 %v2773, 0.0
        %v3056 = vmax.f32 %v2775, 0.0
        %v3057 = vmax.f32 %v2779, 0.0
        %v3058 = vmax.f32 %v2781, 0.0
        %v3059 = vmax.f32 %v2785, 0.0
        %v3060 = vmax.f32 %v2787, 0.0
        %v3061 = vmax.f32 %v2791, 0.0
        %v3062 = vmax.f32 %v2793, 0.0
        %v3063 = vmax.f32 %v2797, 0.0
        %v3064 = vmax.f32 %v2799, 0.0
        %v3065 = vmax.f32 %v2803, 0.0
        %v3066 = vmax.f32 %v2805, 0.0
        %v3067 = vmax.f32 %v2809, 0.0
        %v3068 = vmax.f32 %v2811, 0.0
        %v3069 = vmax.f32 %v2815, 0.0
        %v3070 = vmax.f32 %v2817, 0.0
        %v3071 = vmax.f32 %v2821, 0.0
        %v3072 = vmax.f32 %v2823, 0.0
        %v3073 = vmax.f32 %v2827, 0.0
        %v3074 = vmax.f32 %v2829, 0.0
        %v3075 = vmax.f32 %v2833, 0.0
        %v3076 = vmax.f32 %v2835, 0.0
        %v3077 = vmax.f32 %v2839, 0.0
        %v3078 = vmax.f32 %v2841, 0.0
        %v3079 = vmax.f32 %v2845, 0.0
        %v3080 = vmax.f32 %v2847, 0.0
        %v3081 = vmax.f32 %v2851, 0.0
        %v3082 = vmax.f32 %v2853, 0.0
        %v3083 = vmax.f32 %v2857, 0.0
        %v3084 = vmax.f32 %v2859, 0.0
        %v3085 = vmax.f32 %v2863, 0.0
        %v3086 = vmax.f32 %v2865, 0.0
        %v3087 = vmax.f32 %v2869, 0.0
        %v3088 = vmax.f32 %v2871, 0.0
        %v3089 = vmax.f32 %v2875, 0.0
        %v3090 = vmax.f32 %v2877, 0.0
        %v3091 = vmax.f32 %v2881, 0.0
        %v3092 = vmax.f32 %v2883, 0.0
        %v3093 = vmax.f32 %v2887, 0.0
        %v3094 = vmax.f32 %v2889, 0.0
        %v3095 = vmax.f32 %v2893, 0.0
        %v3096 = vmax.f32 %v2895, 0.0
        %v3097 = vmax.f32 %v2899, 0.0
        %v3098 = vmax.f32 %v2901, 0.0
        %v3099 = vmax.f32 %v2905, 0.0
        %v3100 = vmax.f32 %v2907, 0.0
        %v3101 = vmax.f32 %v2911, 0.0
        %v3102 = vmax.f32 %v2913, 0.0
        %v3103 = vmax.f32 %v2917, 0.0
        %v3104 = vmax.f32 %v2919, 0.0
        %v3105 = vmax.f32 %v2923, 0.0
        %v3106 = vmax.f32 %v2925, 0.0
        %v3107 = vmax.f32 %v2929, 0.0
        %v3108 = vmax.f32 %v2931, 0.0
        %v3109 = vmax.f32 %v2935, 0.0
        %v3110 = vmax.f32 %v2937, 0.0
        %v3111 = vmax.f32 %v2941, 0.0
        %v3112 = vmax.f32 %v2943, 0.0
        %v3113 = vmax.f32 %v2947, 0.0
        %v3114 = vmax.f32 %v2949, 0.0
        %v3115 = vmax.f32 %v2953, 0.0
        %v3116 = vmax.f32 %v2955, 0.0
        %v3117 = vmax.f32 %v2959, 0.0
        %v3118 = vmax.f32 %v2961, 0.0
        %v3119 = vmax.f32 %v2965, 0.0
        %v3120 = vmax.f32 %v2967, 0.0
        %v3121 = vmax.f32 %v2971, 0.0
        %v3122 = vmax.f32 %v2973, 0.0
        %v3123 = vmax.f32 %v2977, 0.0
        %v3124 = vmax.f32 %v2979, 0.0
        %v3125 = vmax.f32 %v2983, 0.0
        %v3126 = vmax.f32 %v2985, 0.0
        %v3127 = vmax.f32 %v2989, 0.0
        %v3128 = vmax.f32 %v2991, 0.0
        %v3129 = vmax.f32 %v2995, 0.0
        %v3130 = vmax.f32 %v2997, 0.0
        %v3131 = vmax.f32 %v3001, 0.0
        %v3132 = vmax.f32 %v3003, 0.0
        %v3133 = vld [vmem:[#allocation8] sm:$0xff]
        %v3134 = vld [vmem:[#allocation8 + $0x8] sm:$0xff]
        %v3135 = vld [vmem:[#allocation8 + $0x10] sm:$0xff]
        %v3136 = vld [vmem:[#allocation8 + $0x18] sm:$0xff]
        %v3137 = vld [vmem:[#allocation8 + $0x20] sm:$0xff]
        %v3138 = vld [vmem:[#allocation8 + $0x28] sm:$0xff]
        %v3139 = vld [vmem:[#allocation8 + $0x30] sm:$0xff]
        %v3140 = vld [vmem:[#allocation8 + $0x38] sm:$0xff]
        %v3141 = vld [vmem:[#allocation8 + $0x40] sm:$0xff]
        %v3142 = vld [vmem:[#allocation8 + $0x48] sm:$0xff]
        %v3143 = vld [vmem:[#allocation8 + $0x50] sm:$0xff]
        %v3144 = vld [vmem:[#allocation8 + $0x58] sm:$0xff]
        %v3145 = vld [vmem:[#allocation8 + $0x60] sm:$0xff]
        %v3146 = vld [vmem:[#allocation8 + $0x68] sm:$0xff]
        %v3147 = vld [vmem:[#allocation8 + $0x70] sm:$0xff]
        %v3148 = vld [vmem:[#allocation8 + $0x78] sm:$0xff]
        %v3149 = vld [vmem:[#allocation8 + $0x80] sm:$0xff]
        %v3150 = vld [vmem:[#allocation8 + $0x88] sm:$0xff]
        %v3151 = vld [vmem:[#allocation8 + $0x90] sm:$0xff]
        %v3152 = vld [vmem:[#allocation8 + $0x98] sm:$0xff]
        %v3153 = vld [vmem:[#allocation8 + $0xa0] sm:$0xff]
        %v3154 = vld [vmem:[#allocation8 + $0xa8] sm:$0xff]
        %v3155 = vld [vmem:[#allocation8 + $0xb0] sm:$0xff]
        %v3156 = vld [vmem:[#allocation8 + $0xb8] sm:$0xff]
        %v3157 = vld [vmem:[#allocation8 + $0xc0] sm:$0xff]
        %v3158 = vld [vmem:[#allocation8 + $0xc8] sm:$0xff]
        %v3159 = vld [vmem:[#allocation8 + $0xd0] sm:$0xff]
        %v3160 = vld [vmem:[#allocation8 + $0xd8] sm:$0xff]
        %v3161 = vld [vmem:[#allocation8 + $0xe0] sm:$0xff]
        %v3162 = vld [vmem:[#allocation8 + $0xe8] sm:$0xff]
        %v3163 = vld [vmem:[#allocation8 + $0xf0] sm:$0xff]
        %v3164 = vld [vmem:[#allocation8 + $0xf8] sm:$0xff]
        %v3165 = vld [vmem:[#allocation13] sm:$0xff]
        %v3166 = vld [vmem:[#allocation13 + $0x8] sm:$0xff]
        %v3167 = vld [vmem:[#allocation13 + $0x10] sm:$0xff]
        %v3168 = vld [vmem:[#allocation13 + $0x18] sm:$0xff]
        %v3169 = vld [vmem:[#allocation13 + $0x20] sm:$0xff]
        %v3170 = vld [vmem:[#allocation13 + $0x28] sm:$0xff]
        %v3171 = vld [vmem:[#allocation13 + $0x30] sm:$0xff]
        %v3172 = vld [vmem:[#allocation13 + $0x38] sm:$0xff]
        %v3173 = vld [vmem:[#allocation13 + $0x40] sm:$0xff]
        %v3174 = vld [vmem:[#allocation13 + $0x48] sm:$0xff]
        %v3175 = vld [vmem:[#allocation13 + $0x50] sm:$0xff]
        %v3176 = vld [vmem:[#allocation13 + $0x58] sm:$0xff]
        %v3177 = vld [vmem:[#allocation13 + $0x60] sm:$0xff]
        %v3178 = vld [vmem:[#allocation13 + $0x68] sm:$0xff]
        %v3179 = vld [vmem:[#allocation13 + $0x70] sm:$0xff]
        %v3180 = vld [vmem:[#allocation13 + $0x78] sm:$0xff]
        %v3181 = vld [vmem:[#allocation13 + $0x80] sm:$0xff]
        %v3182 = vld [vmem:[#allocation13 + $0x88] sm:$0xff]
        %v3183 = vld [vmem:[#allocation13 + $0x90] sm:$0xff]
        %v3184 = vld [vmem:[#allocation13 + $0x98] sm:$0xff]
        %v3185 = vld [vmem:[#allocation13 + $0xa0] sm:$0xff]
        %v3186 = vld [vmem:[#allocation13 + $0xa8] sm:$0xff]
        %v3187 = vld [vmem:[#allocation13 + $0xb0] sm:$0xff]
        %v3188 = vld [vmem:[#allocation13 + $0xb8] sm:$0xff]
        %v3189 = vld [vmem:[#allocation13 + $0xc0] sm:$0xff]
        %v3190 = vld [vmem:[#allocation13 + $0xc8] sm:$0xff]
        %v3191 = vld [vmem:[#allocation13 + $0xd0] sm:$0xff]
        %v3192 = vld [vmem:[#allocation13 + $0xd8] sm:$0xff]
        %v3193 = vld [vmem:[#allocation13 + $0xe0] sm:$0xff]
        %v3194 = vld [vmem:[#allocation13 + $0xe8] sm:$0xff]
        %v3195 = vld [vmem:[#allocation13 + $0xf0] sm:$0xff]
        %v3196 = vld [vmem:[#allocation13 + $0xf8] sm:$0xff]
        %3197 = vmatprep.subr.mxu0 0.0
        %3198 = vmatpush1.msra.mxu0 %v3165
        %3199 = vmatprep.subr.mxu0 0.0
        %3200 = vmatpush1.msra.mxu0 %v3166
        %3201 = vmatprep.subr.mxu0 0.0
        %3202 = vmatpush1.msra.mxu0 %v3167
        %3203 = vmatprep.subr.mxu0 0.0
        %3204 = vmatpush1.msra.mxu0 %v3168
        %3205 = vmatprep.subr.mxu0 0.0
        %3206 = vmatpush1.msra.mxu0 %v3169
        %3207 = vmatprep.subr.mxu0 0.0
        %3208 = vmatpush1.msra.mxu0 %v3170
        %3209 = vmatprep.subr.mxu0 0.0
        %3210 = vmatpush1.msra.mxu0 %v3171
        %3211 = vmatprep.subr.mxu0 0.0
        %3212 = vmatpush1.msra.mxu0 %v3172
        %3213 = vmatprep.subr.mxu0 0.0
        %3214 = vmatpush1.msra.mxu0 %v3173
        %3215 = vmatprep.subr.mxu0 0.0
        %3216 = vmatpush1.msra.mxu0 %v3174
        %3217 = vmatprep.subr.mxu0 0.0
        %3218 = vmatpush1.msra.mxu0 %v3175
        %3219 = vmatprep.subr.mxu0 0.0
        %3220 = vmatpush1.msra.mxu0 %v3176
        %3221 = vmatprep.subr.mxu0 0.0
        %3222 = vmatpush1.msra.mxu0 %v3177
        %3223 = vmatprep.subr.mxu0 0.0
        %3224 = vmatpush1.msra.mxu0 %v3178
        %3225 = vmatprep.subr.mxu0 0.0
        %3226 = vmatpush1.msra.mxu0 %v3179
        %3227 = vmatprep.subr.mxu0 0.0
        %3228 = vmatpush1.msra.mxu0 %v3180
        %3229 = vmatprep.subr.mxu0 0.0
        %3230 = vmatpush1.msra.mxu0 %v3181
        %3231 = vmatprep.subr.mxu0 0.0
        %3232 = vmatpush1.msra.mxu0 %v3182
        %3233 = vmatprep.subr.mxu0 0.0
        %3234 = vmatpush1.msra.mxu0 %v3183
        %3235 = vmatprep.subr.mxu0 0.0
        %3236 = vmatpush1.msra.mxu0 %v3184
        %3237 = vmatprep.subr.mxu0 0.0
        %3238 = vmatpush1.msra.mxu0 %v3185
        %3239 = vmatprep.subr.mxu0 0.0
        %3240 = vmatpush1.msra.mxu0 %v3186
        %3241 = vmatprep.subr.mxu0 0.0
        %3242 = vmatpush1.msra.mxu0 %v3187
        %3243 = vmatprep.subr.mxu0 0.0
        %3244 = vmatpush1.msra.mxu0 %v3188
        %3245 = vmatprep.subr.mxu0 0.0
        %3246 = vmatpush1.msra.mxu0 %v3189
        %3247 = vmatprep.subr.mxu0 0.0
        %3248 = vmatpush1.msra.mxu0 %v3190
        %3249 = vmatprep.subr.mxu0 0.0
        %3250 = vmatpush1.msra.mxu0 %v3191
        %3251 = vmatprep.subr.mxu0 0.0
        %3252 = vmatpush1.msra.mxu0 %v3192
        %3253 = vmatprep.subr.mxu0 0.0
        %3254 = vmatpush1.msra.mxu0 %v3193
        %3255 = vmatprep.subr.mxu0 0.0
        %3256 = vmatpush1.msra.mxu0 %v3194
        %3257 = vmatprep.subr.mxu0 0.0
        %3258 = vmatpush1.msra.mxu0 %v3195
        %3259 = vmatprep.subr.mxu0 0.0
        %3260 = vmatpush1.msra.mxu0 %v3196
        %3261 = vmatprep.mubr.f32.mxu0 %v3006
        %3262 = vmatmul.mubr.f32.gmra.mrb[0].mxu0 %v3005
        %v3263 = vpop.f32.mrb[0].mxu0
        %v3264 = vadd.f32 0.0, %v3263
        %v3265 = vpop.f32.mrb[0].mxu0
        %3266 = vmatprep.mubr.f32.mxu0 %v3008
        %3267 = vmatmul.mubr.f32.gmra.mrb[0].mxu0 %v3007
        %v3268 = vpop.f32.mrb[0].mxu0
        %v3269 = vadd.f32 0.0, %v3268
        %v3270 = vpop.f32.mrb[0].mxu0
        %3271 = vmatprep.mubr.f32.mxu0 %v3010
        %3272 = vmatmul.mubr.f32.gmra.mrb[0].mxu0 %v3009
        %v3273 = vpop.f32.mrb[0].mxu0
        %v3274 = vadd.f32 0.0, %v3273
        %v3275 = vpop.f32.mrb[0].mxu0
        %3276 = vmatprep.mubr.f32.mxu0 %v3012
        %3277 = vmatmul.mubr.f32.gmra.mrb[0].mxu0 %v3011
        %v3278 = vpop.f32.mrb[0].mxu0
        %v3279 = vadd.f32 0.0, %v3278
        %v3280 = vpop.f32.mrb[0].mxu0
        %3281 = vmatprep.mubr.f32.mxu0 %v3014
        %3282 = vmatmul.mubr.f32.gmra.mrb[0].mxu0 %v3013
        %v3283 = vpop.f32.mrb[0].mxu0
        %v3284 = vadd.f32 0.0, %v3283
        %v3285 = vpop.f32.mrb[0].mxu0
        %3286 = vmatprep.mubr.f32.mxu0 %v3016
        %3287 = vmatmul.mubr.f32.gmra.mrb[0].mxu0 %v3015
        %v3288 = vpop.f32.mrb[0].mxu0
        %v3289 = vadd.f32 0.0, %v3288
        %v3290 = vpop.f32.mrb[0].mxu0
        %3291 = vmatprep.mubr.f32.mxu0 %v3018
        %3292 = vmatmul.mubr.f32.gmra.mrb[0].mxu0 %v3017
        %v3293 = vpop.f32.mrb[0].mxu0
        %v3294 = vadd.f32 0.0, %v3293
        %v3295 = vpop.f32.mrb[0].mxu0
        %3296 = vmatprep.mubr.f32.mxu0 %v3020
        %3297 = vmatmul.mubr.f32.gmra.mrb[0].mxu0 %v3019
        %v3298 = vpop.f32.mrb[0].mxu0
        %v3299 = vadd.f32 0.0, %v3298
        %v3300 = vpop.f32.mrb[0].mxu0
        %3301 = vmatprep.mubr.f32.mxu0 %v3022
        %3302 = vmatmul.mubr.f32.gmra.mrb[0].mxu0 %v3021
        %v3303 = vpop.f32.mrb[0].mxu0
        %v3304 = vadd.f32 0.0, %v3303
        %v3305 = vpop.f32.mrb[0].mxu0
        %3306 = vmatprep.mubr.f32.mxu0 %v3024
        %3307 = vmatmul.mubr.f32.gmra.mrb[0].mxu0 %v3023
        %v3308 = vpop.f32.mrb[0].mxu0
        %v3309 = vadd.f32 0.0, %v3308
        %v3310 = vpop.f32.mrb[0].mxu0
        %3311 = vmatprep.mubr.f32.mxu0 %v3026
        %3312 = vmatmul.mubr.f32.gmra.mrb[0].mxu0 %v3025
        %v3313 = vpop.f32.mrb[0].mxu0
        %v3314 = vadd.f32 0.0, %v3313
        %v3315 = vpop.f32.mrb[0].mxu0
        %3316 = vmatprep.mubr.f32.mxu0 %v3028
        %3317 = vmatmul.mubr.f32.gmra.mrb[0].mxu0 %v3027
        %v3318 = vpop.f32.mrb[0].mxu0
        %v3319 = vadd.f32 0.0, %v3318
        %v3320 = vpop.f32.mrb[0].mxu0
        %3321 = vmatprep.mubr.f32.mxu0 %v3030
        %3322 = vmatmul.mubr.f32.gmra.mrb[0].mxu0 %v3029
        %v3323 = vpop.f32.mrb[0].mxu0
        %v3324 = vadd.f32 0.0, %v3323
        %v3325 = vpop.f32.mrb[0].mxu0
        %3326 = vmatprep.mubr.f32.mxu0 %v3032
        %3327 = vmatmul.mubr.f32.gmra.mrb[0].mxu0 %v3031
        %v3328 = vpop.f32.mrb[0].mxu0
        %v3329 = vadd.f32 0.0, %v3328
        %v3330 = vpop.f32.mrb[0].mxu0
        %3331 = vmatprep.mubr.f32.mxu0 %v3034
        %3332 = vmatmul.mubr.f32.gmra.mrb[0].mxu0 %v3033
        %v3333 = vpop.f32.mrb[0].mxu0
        %v3334 = vadd.f32 0.0, %v3333
        %v3335 = vpop.f32.mrb[0].mxu0
        %3336 = vmatprep.mubr.f32.mxu0 %v3036
        %3337 = vmatmul.mubr.f32.gmra.mrb[0].mxu0 %v3035
        %v3338 = vpop.f32.mrb[0].mxu0
        %v3339 = vadd.f32 0.0, %v3338
        %v3340 = vpop.f32.mrb[0].mxu0
        %3341 = vmatprep.mubr.f32.mxu0 %v3038
        %3342 = vmatmul.mubr.f32.gmra.mrb[0].mxu0 %v3037
        %v3343 = vpop.f32.mrb[0].mxu0
        %v3344 = vadd.f32 0.0, %v3343
        %v3345 = vpop.f32.mrb[0].mxu0
        %3346 = vmatprep.mubr.f32.mxu0 %v3040
        %3347 = vmatmul.mubr.f32.gmra.mrb[0].mxu0 %v3039
        %v3348 = vpop.f32.mrb[0].mxu0
        %v3349 = vadd.f32 0.0, %v3348
        %v3350 = vpop.f32.mrb[0].mxu0
        %3351 = vmatprep.mubr.f32.mxu0 %v3042
        %3352 = vmatmul.mubr.f32.gmra.mrb[0].mxu0 %v3041
        %v3353 = vpop.f32.mrb[0].mxu0
        %v3354 = vadd.f32 0.0, %v3353
        %v3355 = vpop.f32.mrb[0].mxu0
        %3356 = vmatprep.mubr.f32.mxu0 %v3044
        %3357 = vmatmul.mubr.f32.gmra.mrb[0].mxu0 %v3043
        %v3358 = vpop.f32.mrb[0].mxu0
        %v3359 = vadd.f32 0.0, %v3358
        %v3360 = vpop.f32.mrb[0].mxu0
        %3361 = vmatprep.mubr.f32.mxu0 %v3046
        %3362 = vmatmul.mubr.f32.gmra.mrb[0].mxu0 %v3045
        %v3363 = vpop.f32.mrb[0].mxu0
        %v3364 = vadd.f32 0.0, %v3363
        %v3365 = vpop.f32.mrb[0].mxu0
        %3366 = vmatprep.mubr.f32.mxu0 %v3048
        %3367 = vmatmul.mubr.f32.gmra.mrb[0].mxu0 %v3047
        %v3368 = vpop.f32.mrb[0].mxu0
        %v3369 = vadd.f32 0.0, %v3368
        %v3370 = vpop.f32.mrb[0].mxu0
        %3371 = vmatprep.mubr.f32.mxu0 %v3050
        %3372 = vmatmul.mubr.f32.gmra.mrb[0].mxu0 %v3049
        %v3373 = vpop.f32.mrb[0].mxu0
        %v3374 = vadd.f32 0.0, %v3373
        %v3375 = vpop.f32.mrb[0].mxu0
        %3376 = vmatprep.mubr.f32.mxu0 %v3052
        %3377 = vmatmul.mubr.f32.gmra.mrb[0].mxu0 %v3051
        %v3378 = vpop.f32.mrb[0].mxu0
        %v3379 = vadd.f32 0.0, %v3378
        %v3380 = vpop.f32.mrb[0].mxu0
        %3381 = vmatprep.mubr.f32.mxu0 %v3054
        %3382 = vmatmul.mubr.f32.gmra.mrb[0].mxu0 %v3053
        %v3383 = vpop.f32.mrb[0].mxu0
        %v3384 = vadd.f32 0.0, %v3383
        %v3385 = vpop.f32.mrb[0].mxu0
        %3386 = vmatprep.mubr.f32.mxu0 %v3056
        %3387 = vmatmul.mubr.f32.gmra.mrb[0].mxu0 %v3055
        %v3388 = vpop.f32.mrb[0].mxu0
        %v3389 = vadd.f32 0.0, %v3388
        %v3390 = vpop.f32.mrb[0].mxu0
        %3391 = vmatprep.mubr.f32.mxu0 %v3058
        %3392 = vmatmul.mubr.f32.gmra.mrb[0].mxu0 %v3057
        %v3393 = vpop.f32.mrb[0].mxu0
        %v3394 = vadd.f32 0.0, %v3393
        %v3395 = vpop.f32.mrb[0].mxu0
        %3396 = vmatprep.mubr.f32.mxu0 %v3060
        %3397 = vmatmul.mubr.f32.gmra.mrb[0].mxu0 %v3059
        %v3398 = vpop.f32.mrb[0].mxu0
        %v3399 = vadd.f32 0.0, %v3398
        %v3400 = vpop.f32.mrb[0].mxu0
        %3401 = vmatprep.mubr.f32.mxu0 %v3062
        %3402 = vmatmul.mubr.f32.gmra.mrb[0].mxu0 %v3061
        %v3403 = vpop.f32.mrb[0].mxu0
        %v3404 = vadd.f32 0.0, %v3403
        %v3405 = vpop.f32.mrb[0].mxu0
        %3406 = vmatprep.mubr.f32.mxu0 %v3064
        %3407 = vmatmul.mubr.f32.gmra.mrb[0].mxu0 %v3063
        %v3408 = vpop.f32.mrb[0].mxu0
        %v3409 = vadd.f32 0.0, %v3408
        %v3410 = vpop.f32.mrb[0].mxu0
        %3411 = vmatprep.mubr.f32.mxu0 %v3066
        %3412 = vmatmul.mubr.f32.gmra.mrb[0].mxu0 %v3065
        %v3413 = vpop.f32.mrb[0].mxu0
        %v3414 = vadd.f32 0.0, %v3413
        %v3415 = vpop.f32.mrb[0].mxu0
        %3416 = vmatprep.mubr.f32.mxu0 %v3068
        %3417 = vmatmul.mubr.f32.gmra.mrb[0].mxu0 %v3067
        %v3418 = vpop.f32.mrb[0].mxu0
        %v3419 = vadd.f32 0.0, %v3418
        %v3420 = vpop.f32.mrb[0].mxu0
        %3421 = vmatprep.mubr.f32.mxu0 %v3070
        %3422 = vmatmul.mubr.f32.gmra.mrb[0].mxu0 %v3069
        %v3423 = vpop.f32.mrb[0].mxu0
        %v3424 = vadd.f32 0.0, %v3423
        %v3425 = vpop.f32.mrb[0].mxu0
        %3426 = vmatprep.mubr.f32.mxu0 %v3072
        %3427 = vmatmul.mubr.f32.gmra.mrb[0].mxu0 %v3071
        %v3428 = vpop.f32.mrb[0].mxu0
        %v3429 = vadd.f32 0.0, %v3428
        %v3430 = vpop.f32.mrb[0].mxu0
        %3431 = vmatprep.mubr.f32.mxu0 %v3074
        %3432 = vmatmul.mubr.f32.gmra.mrb[0].mxu0 %v3073
        %v3433 = vpop.f32.mrb[0].mxu0
        %v3434 = vadd.f32 0.0, %v3433
        %v3435 = vpop.f32.mrb[0].mxu0
        %3436 = vmatprep.mubr.f32.mxu0 %v3076
        %3437 = vmatmul.mubr.f32.gmra.mrb[0].mxu0 %v3075
        %v3438 = vpop.f32.mrb[0].mxu0
        %v3439 = vadd.f32 0.0, %v3438
        %v3440 = vpop.f32.mrb[0].mxu0
        %3441 = vmatprep.mubr.f32.mxu0 %v3078
        %3442 = vmatmul.mubr.f32.gmra.mrb[0].mxu0 %v3077
        %v3443 = vpop.f32.mrb[0].mxu0
        %v3444 = vadd.f32 0.0, %v3443
        %v3445 = vpop.f32.mrb[0].mxu0
        %3446 = vmatprep.mubr.f32.mxu0 %v3080
        %3447 = vmatmul.mubr.f32.gmra.mrb[0].mxu0 %v3079
        %v3448 = vpop.f32.mrb[0].mxu0
        %v3449 = vadd.f32 0.0, %v3448
        %v3450 = vpop.f32.mrb[0].mxu0
        %3451 = vmatprep.mubr.f32.mxu0 %v3082
        %3452 = vmatmul.mubr.f32.gmra.mrb[0].mxu0 %v3081
        %v3453 = vpop.f32.mrb[0].mxu0
        %v3454 = vadd.f32 0.0, %v3453
        %v3455 = vpop.f32.mrb[0].mxu0
        %3456 = vmatprep.mubr.f32.mxu0 %v3084
        %3457 = vmatmul.mubr.f32.gmra.mrb[0].mxu0 %v3083
        %v3458 = vpop.f32.mrb[0].mxu0
        %v3459 = vadd.f32 0.0, %v3458
        %v3460 = vpop.f32.mrb[0].mxu0
        %3461 = vmatprep.mubr.f32.mxu0 %v3086
        %3462 = vmatmul.mubr.f32.gmra.mrb[0].mxu0 %v3085
        %v3463 = vpop.f32.mrb[0].mxu0
        %v3464 = vadd.f32 0.0, %v3463
        %v3465 = vpop.f32.mrb[0].mxu0
        %3466 = vmatprep.mubr.f32.mxu0 %v3088
        %3467 = vmatmul.mubr.f32.gmra.mrb[0].mxu0 %v3087
        %v3468 = vpop.f32.mrb[0].mxu0
        %v3469 = vadd.f32 0.0, %v3468
        %v3470 = vpop.f32.mrb[0].mxu0
        %3471 = vmatprep.mubr.f32.mxu0 %v3090
        %3472 = vmatmul.mubr.f32.gmra.mrb[0].mxu0 %v3089
        %v3473 = vpop.f32.mrb[0].mxu0
        %v3474 = vadd.f32 0.0, %v3473
        %v3475 = vpop.f32.mrb[0].mxu0
        %3476 = vmatprep.mubr.f32.mxu0 %v3092
        %3477 = vmatmul.mubr.f32.gmra.mrb[0].mxu0 %v3091
        %v3478 = vpop.f32.mrb[0].mxu0
        %v3479 = vadd.f32 0.0, %v3478
        %v3480 = vpop.f32.mrb[0].mxu0
        %3481 = vmatprep.mubr.f32.mxu0 %v3094
        %3482 = vmatmul.mubr.f32.gmra.mrb[0].mxu0 %v3093
        %v3483 = vpop.f32.mrb[0].mxu0
        %v3484 = vadd.f32 0.0, %v3483
        %v3485 = vpop.f32.mrb[0].mxu0
        %3486 = vmatprep.mubr.f32.mxu0 %v3096
        %3487 = vmatmul.mubr.f32.gmra.mrb[0].mxu0 %v3095
        %v3488 = vpop.f32.mrb[0].mxu0
        %v3489 = vadd.f32 0.0, %v3488
        %v3490 = vpop.f32.mrb[0].mxu0
        %3491 = vmatprep.mubr.f32.mxu0 %v3098
        %3492 = vmatmul.mubr.f32.gmra.mrb[0].mxu0 %v3097
        %v3493 = vpop.f32.mrb[0].mxu0
        %v3494 = vadd.f32 0.0, %v3493
        %v3495 = vpop.f32.mrb[0].mxu0
        %3496 = vmatprep.mubr.f32.mxu0 %v3100
        %3497 = vmatmul.mubr.f32.gmra.mrb[0].mxu0 %v3099
        %v3498 = vpop.f32.mrb[0].mxu0
        %v3499 = vadd.f32 0.0, %v3498
        %v3500 = vpop.f32.mrb[0].mxu0
        %3501 = vmatprep.mubr.f32.mxu0 %v3102
        %3502 = vmatmul.mubr.f32.gmra.mrb[0].mxu0 %v3101
        %v3503 = vpop.f32.mrb[0].mxu0
        %v3504 = vadd.f32 0.0, %v3503
        %v3505 = vpop.f32.mrb[0].mxu0
        %3506 = vmatprep.mubr.f32.mxu0 %v3104
        %3507 = vmatmul.mubr.f32.gmra.mrb[0].mxu0 %v3103
        %v3508 = vpop.f32.mrb[0].mxu0
        %v3509 = vadd.f32 0.0, %v3508
        %v3510 = vpop.f32.mrb[0].mxu0
        %3511 = vmatprep.mubr.f32.mxu0 %v3106
        %3512 = vmatmul.mubr.f32.gmra.mrb[0].mxu0 %v3105
        %v3513 = vpop.f32.mrb[0].mxu0
        %v3514 = vadd.f32 0.0, %v3513
        %v3515 = vpop.f32.mrb[0].mxu0
        %3516 = vmatprep.mubr.f32.mxu0 %v3108
        %3517 = vmatmul.mubr.f32.gmra.mrb[0].mxu0 %v3107
        %v3518 = vpop.f32.mrb[0].mxu0
        %v3519 = vadd.f32 0.0, %v3518
        %v3520 = vpop.f32.mrb[0].mxu0
        %3521 = vmatprep.mubr.f32.mxu0 %v3110
        %3522 = vmatmul.mubr.f32.gmra.mrb[0].mxu0 %v3109
        %v3523 = vpop.f32.mrb[0].mxu0
        %v3524 = vadd.f32 0.0, %v3523
        %v3525 = vpop.f32.mrb[0].mxu0
        %3526 = vmatprep.mubr.f32.mxu0 %v3112
        %3527 = vmatmul.mubr.f32.gmra.mrb[0].mxu0 %v3111
        %v3528 = vpop.f32.mrb[0].mxu0
        %v3529 = vadd.f32 0.0, %v3528
        %v3530 = vpop.f32.mrb[0].mxu0
        %3531 = vmatprep.mubr.f32.mxu0 %v3114
        %3532 = vmatmul.mubr.f32.gmra.mrb[0].mxu0 %v3113
        %v3533 = vpop.f32.mrb[0].mxu0
        %v3534 = vadd.f32 0.0, %v3533
        %v3535 = vpop.f32.mrb[0].mxu0
        %3536 = vmatprep.mubr.f32.mxu0 %v3116
        %3537 = vmatmul.mubr.f32.gmra.mrb[0].mxu0 %v3115
        %v3538 = vpop.f32.mrb[0].mxu0
        %v3539 = vadd.f32 0.0, %v3538
        %v3540 = vpop.f32.mrb[0].mxu0
        %3541 = vmatprep.mubr.f32.mxu0 %v3118
        %3542 = vmatmul.mubr.f32.gmra.mrb[0].mxu0 %v3117
        %v3543 = vpop.f32.mrb[0].mxu0
        %v3544 = vadd.f32 0.0, %v3543
        %v3545 = vpop.f32.mrb[0].mxu0
        %3546 = vmatprep.mubr.f32.mxu0 %v3120
        %3547 = vmatmul.mubr.f32.gmra.mrb[0].mxu0 %v3119
        %v3548 = vpop.f32.mrb[0].mxu0
        %v3549 = vadd.f32 0.0, %v3548
        %v3550 = vpop.f32.mrb[0].mxu0
        %3551 = vmatprep.mubr.f32.mxu0 %v3122
        %3552 = vmatmul.mubr.f32.gmra.mrb[0].mxu0 %v3121
        %v3553 = vpop.f32.mrb[0].mxu0
        %v3554 = vadd.f32 0.0, %v3553
        %v3555 = vpop.f32.mrb[0].mxu0
        %3556 = vmatprep.mubr.f32.mxu0 %v3124
        %3557 = vmatmul.mubr.f32.gmra.mrb[0].mxu0 %v3123
        %v3558 = vpop.f32.mrb[0].mxu0
        %v3559 = vadd.f32 0.0, %v3558
        %v3560 = vpop.f32.mrb[0].mxu0
        %3561 = vmatprep.mubr.f32.mxu0 %v3126
        %3562 = vmatmul.mubr.f32.gmra.mrb[0].mxu0 %v3125
        %v3563 = vpop.f32.mrb[0].mxu0
        %v3564 = vadd.f32 0.0, %v3563
        %v3565 = vpop.f32.mrb[0].mxu0
        %3566 = vmatprep.mubr.f32.mxu0 %v3128
        %3567 = vmatmul.mubr.f32.gmra.mrb[0].mxu0 %v3127
        %v3568 = vpop.f32.mrb[0].mxu0
        %v3569 = vadd.f32 0.0, %v3568
        %v3570 = vpop.f32.mrb[0].mxu0
        %3571 = vmatprep.mubr.f32.mxu0 %v3130
        %3572 = vmatmul.mubr.f32.gmra.mrb[0].mxu0 %v3129
        %v3573 = vpop.f32.mrb[0].mxu0
        %v3574 = vadd.f32 0.0, %v3573
        %v3575 = vpop.f32.mrb[0].mxu0
        %3576 = vmatprep.mubr.f32.mxu0 %v3132
        %3577 = vmatmul.mubr.f32.gmra.mrb[0].mxu0 %v3131
        %v3578 = vpop.f32.mrb[0].mxu0
        %v3579 = vadd.f32 0.0, %v3578
        %v3580 = vpop.f32.mrb[0].mxu0
        %3581 = vdwg.mxu0
        %3582 = vmatprep.subr.mxu0 0.0
        %3583 = vmatpush1.msra.mxu0 %v3133
        %3584 = vmatprep.subr.mxu0 0.0
        %3585 = vmatpush1.msra.mxu0 %v3134
        %3586 = vmatprep.subr.mxu0 0.0
        %3587 = vmatpush1.msra.mxu0 %v3135
        %3588 = vmatprep.subr.mxu0 0.0
        %3589 = vmatpush1.msra.mxu0 %v3136
        %3590 = vmatprep.subr.mxu0 0.0
        %3591 = vmatpush1.msra.mxu0 %v3137
        %3592 = vmatprep.subr.mxu0 0.0
        %3593 = vmatpush1.msra.mxu0 %v3138
        %3594 = vmatprep.subr.mxu0 0.0
        %3595 = vmatpush1.msra.mxu0 %v3139
        %3596 = vmatprep.subr.mxu0 0.0
        %3597 = vmatpush1.msra.mxu0 %v3140
        %3598 = vmatprep.subr.mxu0 0.0
        %3599 = vmatpush1.msra.mxu0 %v3141
        %3600 = vmatprep.subr.mxu0 0.0
        %3601 = vmatpush1.msra.mxu0 %v3142
        %3602 = vmatprep.subr.mxu0 0.0
        %3603 = vmatpush1.msra.mxu0 %v3143
        %3604 = vmatprep.subr.mxu0 0.0
        %3605 = vmatpush1.msra.mxu0 %v3144
        %3606 = vmatprep.subr.mxu0 0.0
        %3607 = vmatpush1.msra.mxu0 %v3145
        %3608 = vmatprep.subr.mxu0 0.0
        %3609 = vmatpush1.msra.mxu0 %v3146
        %3610 = vmatprep.subr.mxu0 0.0
        %3611 = vmatpush1.msra.mxu0 %v3147
        %3612 = vmatprep.subr.mxu0 0.0
        %3613 = vmatpush1.msra.mxu0 %v3148
        %3614 = vmatprep.subr.mxu0 0.0
        %3615 = vmatpush1.msra.mxu0 %v3149
        %3616 = vmatprep.subr.mxu0 0.0
        %3617 = vmatpush1.msra.mxu0 %v3150
        %3618 = vmatprep.subr.mxu0 0.0
        %3619 = vmatpush1.msra.mxu0 %v3151
        %3620 = vmatprep.subr.mxu0 0.0
        %3621 = vmatpush1.msra.mxu0 %v3152
        %3622 = vmatprep.subr.mxu0 0.0
        %3623 = vmatpush1.msra.mxu0 %v3153
        %3624 = vmatprep.subr.mxu0 0.0
        %3625 = vmatpush1.msra.mxu0 %v3154
        %3626 = vmatprep.subr.mxu0 0.0
        %3627 = vmatpush1.msra.mxu0 %v3155
        %3628 = vmatprep.subr.mxu0 0.0
        %3629 = vmatpush1.msra.mxu0 %v3156
        %3630 = vmatprep.subr.mxu0 0.0
        %3631 = vmatpush1.msra.mxu0 %v3157
        %3632 = vmatprep.subr.mxu0 0.0
        %3633 = vmatpush1.msra.mxu0 %v3158
        %3634 = vmatprep.subr.mxu0 0.0
        %3635 = vmatpush1.msra.mxu0 %v3159
        %3636 = vmatprep.subr.mxu0 0.0
        %3637 = vmatpush1.msra.mxu0 %v3160
        %3638 = vmatprep.subr.mxu0 0.0
        %3639 = vmatpush1.msra.mxu0 %v3161
        %3640 = vmatprep.subr.mxu0 0.0
        %3641 = vmatpush1.msra.mxu0 %v3162
        %3642 = vmatprep.subr.mxu0 0.0
        %3643 = vmatpush1.msra.mxu0 %v3163
        %3644 = vmatprep.subr.mxu0 0.0
        %3645 = vmatpush1.msra.mxu0 %v3164
        %3646 = vmatprep.mubr.f32.mxu0 %v1732
        %3647 = vmatmul.mubr.f32.gmra.mrb[0].mxu0 %v1731
        %v3648 = vpop.f32.mrb[0].mxu0
        %v3649 = vadd.f32 %v3264, %v3648
        %v3650 = vpop.f32.mrb[0].mxu0
        %3651 = vmatprep.mubr.f32.mxu0 %v1734
        %3652 = vmatmul.mubr.f32.gmra.mrb[0].mxu0 %v1733
        %v3653 = vpop.f32.mrb[0].mxu0
        %v3654 = vadd.f32 %v3269, %v3653
        %v3655 = vpop.f32.mrb[0].mxu0
        %3656 = vmatprep.mubr.f32.mxu0 %v1736
        %3657 = vmatmul.mubr.f32.gmra.mrb[0].mxu0 %v1735
        %v3658 = vpop.f32.mrb[0].mxu0
        %v3659 = vadd.f32 %v3274, %v3658
        %v3660 = vpop.f32.mrb[0].mxu0
        %3661 = vmatprep.mubr.f32.mxu0 %v1738
        %3662 = vmatmul.mubr.f32.gmra.mrb[0].mxu0 %v1737
        %v3663 = vpop.f32.mrb[0].mxu0
        %v3664 = vadd.f32 %v3279, %v3663
        %v3665 = vpop.f32.mrb[0].mxu0
        %3666 = vmatprep.mubr.f32.mxu0 %v1740
        %3667 = vmatmul.mubr.f32.gmra.mrb[0].mxu0 %v1739
        %v3668 = vpop.f32.mrb[0].mxu0
        %v3669 = vadd.f32 %v3284, %v3668
        %v3670 = vpop.f32.mrb[0].mxu0
        %3671 = vmatprep.mubr.f32.mxu0 %v1742
        %3672 = vmatmul.mubr.f32.gmra.mrb[0].mxu0 %v1741
        %v3673 = vpop.f32.mrb[0].mxu0
        %v3674 = vadd.f32 %v3289, %v3673
        %v3675 = vpop.f32.mrb[0].mxu0
        %3676 = vmatprep.mubr.f32.mxu0 %v1744
        %3677 = vmatmul.mubr.f32.gmra.mrb[0].mxu0 %v1743
        %v3678 = vpop.f32.mrb[0].mxu0
        %v3679 = vadd.f32 %v3294, %v3678
        %v3680 = vpop.f32.mrb[0].mxu0
        %3681 = vmatprep.mubr.f32.mxu0 %v1746
        %3682 = vmatmul.mubr.f32.gmra.mrb[0].mxu0 %v1745
        %v3683 = vpop.f32.mrb[0].mxu0
        %v3684 = vadd.f32 %v3299, %v3683
        %v3685 = vpop.f32.mrb[0].mxu0
        %3686 = vmatprep.mubr.f32.mxu0 %v1748
        %3687 = vmatmul.mubr.f32.gmra.mrb[0].mxu0 %v1747
        %v3688 = vpop.f32.mrb[0].mxu0
        %v3689 = vadd.f32 %v3304, %v3688
        %v3690 = vpop.f32.mrb[0].mxu0
        %3691 = vmatprep.mubr.f32.mxu0 %v1750
        %3692 = vmatmul.mubr.f32.gmra.mrb[0].mxu0 %v1749
        %v3693 = vpop.f32.mrb[0].mxu0
        %v3694 = vadd.f32 %v3309, %v3693
        %v3695 = vpop.f32.mrb[0].mxu0
        %3696 = vmatprep.mubr.f32.mxu0 %v1752
        %3697 = vmatmul.mubr.f32.gmra.mrb[0].mxu0 %v1751
        %v3698 = vpop.f32.mrb[0].mxu0
        %v3699 = vadd.f32 %v3314, %v3698
        %v3700 = vpop.f32.mrb[0].mxu0
        %3701 = vmatprep.mubr.f32.mxu0 %v1754
        %3702 = vmatmul.mubr.f32.gmra.mrb[0].mxu0 %v1753
        %v3703 = vpop.f32.mrb[0].mxu0
        %v3704 = vadd.f32 %v3319, %v3703
        %v3705 = vpop.f32.mrb[0].mxu0
        %3706 = vmatprep.mubr.f32.mxu0 %v1756
        %3707 = vmatmul.mubr.f32.gmra.mrb[0].mxu0 %v1755
        %v3708 = vpop.f32.mrb[0].mxu0
        %v3709 = vadd.f32 %v3324, %v3708
        %v3710 = vpop.f32.mrb[0].mxu0
        %3711 = vmatprep.mubr.f32.mxu0 %v1758
        %3712 = vmatmul.mubr.f32.gmra.mrb[0].mxu0 %v1757
        %v3713 = vpop.f32.mrb[0].mxu0
        %v3714 = vadd.f32 %v3329, %v3713
        %v3715 = vpop.f32.mrb[0].mxu0
        %3716 = vmatprep.mubr.f32.mxu0 %v1760
        %3717 = vmatmul.mubr.f32.gmra.mrb[0].mxu0 %v1759
        %v3718 = vpop.f32.mrb[0].mxu0
        %v3719 = vadd.f32 %v3334, %v3718
        %v3720 = vpop.f32.mrb[0].mxu0
        %3721 = vmatprep.mubr.f32.mxu0 %v1762
        %3722 = vmatmul.mubr.f32.gmra.mrb[0].mxu0 %v1761
        %v3723 = vpop.f32.mrb[0].mxu0
        %v3724 = vadd.f32 %v3339, %v3723
        %v3725 = vpop.f32.mrb[0].mxu0
        %3726 = vmatprep.mubr.f32.mxu0 %v1764
        %3727 = vmatmul.mubr.f32.gmra.mrb[0].mxu0 %v1763
        %v3728 = vpop.f32.mrb[0].mxu0
        %v3729 = vadd.f32 %v3344, %v3728
        %v3730 = vpop.f32.mrb[0].mxu0
        %3731 = vmatprep.mubr.f32.mxu0 %v1766
        %3732 = vmatmul.mubr.f32.gmra.mrb[0].mxu0 %v1765
        %v3733 = vpop.f32.mrb[0].mxu0
        %v3734 = vadd.f32 %v3349, %v3733
        %v3735 = vpop.f32.mrb[0].mxu0
        %3736 = vmatprep.mubr.f32.mxu0 %v1768
        %3737 = vmatmul.mubr.f32.gmra.mrb[0].mxu0 %v1767
        %v3738 = vpop.f32.mrb[0].mxu0
        %v3739 = vadd.f32 %v3354, %v3738
        %v3740 = vpop.f32.mrb[0].mxu0
        %3741 = vmatprep.mubr.f32.mxu0 %v1770
        %3742 = vmatmul.mubr.f32.gmra.mrb[0].mxu0 %v1769
        %v3743 = vpop.f32.mrb[0].mxu0
        %v3744 = vadd.f32 %v3359, %v3743
        %v3745 = vpop.f32.mrb[0].mxu0
        %3746 = vmatprep.mubr.f32.mxu0 %v1772
        %3747 = vmatmul.mubr.f32.gmra.mrb[0].mxu0 %v1771
        %v3748 = vpop.f32.mrb[0].mxu0
        %v3749 = vadd.f32 %v3364, %v3748
        %v3750 = vpop.f32.mrb[0].mxu0
        %3751 = vmatprep.mubr.f32.mxu0 %v1774
        %3752 = vmatmul.mubr.f32.gmra.mrb[0].mxu0 %v1773
        %v3753 = vpop.f32.mrb[0].mxu0
        %v3754 = vadd.f32 %v3369, %v3753
        %v3755 = vpop.f32.mrb[0].mxu0
        %3756 = vmatprep.mubr.f32.mxu0 %v1776
        %3757 = vmatmul.mubr.f32.gmra.mrb[0].mxu0 %v1775
        %v3758 = vpop.f32.mrb[0].mxu0
        %v3759 = vadd.f32 %v3374, %v3758
        %v3760 = vpop.f32.mrb[0].mxu0
        %3761 = vmatprep.mubr.f32.mxu0 %v1778
        %3762 = vmatmul.mubr.f32.gmra.mrb[0].mxu0 %v1777
        %v3763 = vpop.f32.mrb[0].mxu0
        %v3764 = vadd.f32 %v3379, %v3763
        %v3765 = vpop.f32.mrb[0].mxu0
        %3766 = vmatprep.mubr.f32.mxu0 %v1780
        %3767 = vmatmul.mubr.f32.gmra.mrb[0].mxu0 %v1779
        %v3768 = vpop.f32.mrb[0].mxu0
        %v3769 = vadd.f32 %v3384, %v3768
        %v3770 = vpop.f32.mrb[0].mxu0
        %3771 = vmatprep.mubr.f32.mxu0 %v1782
        %3772 = vmatmul.mubr.f32.gmra.mrb[0].mxu0 %v1781
        %v3773 = vpop.f32.mrb[0].mxu0
        %v3774 = vadd.f32 %v3389, %v3773
        %v3775 = vpop.f32.mrb[0].mxu0
        %3776 = vmatprep.mubr.f32.mxu0 %v1784
        %3777 = vmatmul.mubr.f32.gmra.mrb[0].mxu0 %v1783
        %v3778 = vpop.f32.mrb[0].mxu0
        %v3779 = vadd.f32 %v3394, %v3778
        %v3780 = vpop.f32.mrb[0].mxu0
        %3781 = vmatprep.mubr.f32.mxu0 %v1786
        %3782 = vmatmul.mubr.f32.gmra.mrb[0].mxu0 %v1785
        %v3783 = vpop.f32.mrb[0].mxu0
        %v3784 = vadd.f32 %v3399, %v3783
        %v3785 = vpop.f32.mrb[0].mxu0
        %3786 = vmatprep.mubr.f32.mxu0 %v1788
        %3787 = vmatmul.mubr.f32.gmra.mrb[0].mxu0 %v1787
        %v3788 = vpop.f32.mrb[0].mxu0
        %v3789 = vadd.f32 %v3404, %v3788
        %v3790 = vpop.f32.mrb[0].mxu0
        %3791 = vmatprep.mubr.f32.mxu0 %v1790
        %3792 = vmatmul.mubr.f32.gmra.mrb[0].mxu0 %v1789
        %v3793 = vpop.f32.mrb[0].mxu0
        %v3794 = vadd.f32 %v3409, %v3793
        %v3795 = vpop.f32.mrb[0].mxu0
        %3796 = vmatprep.mubr.f32.mxu0 %v1792
        %3797 = vmatmul.mubr.f32.gmra.mrb[0].mxu0 %v1791
        %v3798 = vpop.f32.mrb[0].mxu0
        %v3799 = vadd.f32 %v3414, %v3798
        %v3800 = vpop.f32.mrb[0].mxu0
        %3801 = vmatprep.mubr.f32.mxu0 %v1794
        %3802 = vmatmul.mubr.f32.gmra.mrb[0].mxu0 %v1793
        %v3803 = vpop.f32.mrb[0].mxu0
        %v3804 = vadd.f32 %v3419, %v3803
        %v3805 = vpop.f32.mrb[0].mxu0
        %3806 = vmatprep.mubr.f32.mxu0 %v1796
        %3807 = vmatmul.mubr.f32.gmra.mrb[0].mxu0 %v1795
        %v3808 = vpop.f32.mrb[0].mxu0
        %v3809 = vadd.f32 %v3424, %v3808
        %v3810 = vpop.f32.mrb[0].mxu0
        %3811 = vmatprep.mubr.f32.mxu0 %v1798
        %3812 = vmatmul.mubr.f32.gmra.mrb[0].mxu0 %v1797
        %v3813 = vpop.f32.mrb[0].mxu0
        %v3814 = vadd.f32 %v3429, %v3813
        %v3815 = vpop.f32.mrb[0].mxu0
        %3816 = vmatprep.mubr.f32.mxu0 %v1800
        %3817 = vmatmul.mubr.f32.gmra.mrb[0].mxu0 %v1799
        %v3818 = vpop.f32.mrb[0].mxu0
        %v3819 = vadd.f32 %v3434, %v3818
        %v3820 = vpop.f32.mrb[0].mxu0
        %3821 = vmatprep.mubr.f32.mxu0 %v1802
        %3822 = vmatmul.mubr.f32.gmra.mrb[0].mxu0 %v1801
        %v3823 = vpop.f32.mrb[0].mxu0
        %v3824 = vadd.f32 %v3439, %v3823
        %v3825 = vpop.f32.mrb[0].mxu0
        %3826 = vmatprep.mubr.f32.mxu0 %v1804
        %3827 = vmatmul.mubr.f32.gmra.mrb[0].mxu0 %v1803
        %v3828 = vpop.f32.mrb[0].mxu0
        %v3829 = vadd.f32 %v3444, %v3828
        %v3830 = vpop.f32.mrb[0].mxu0
        %3831 = vmatprep.mubr.f32.mxu0 %v1806
        %3832 = vmatmul.mubr.f32.gmra.mrb[0].mxu0 %v1805
        %v3833 = vpop.f32.mrb[0].mxu0
        %v3834 = vadd.f32 %v3449, %v3833
        %v3835 = vpop.f32.mrb[0].mxu0
        %3836 = vmatprep.mubr.f32.mxu0 %v1808
        %3837 = vmatmul.mubr.f32.gmra.mrb[0].mxu0 %v1807
        %v3838 = vpop.f32.mrb[0].mxu0
        %v3839 = vadd.f32 %v3454, %v3838
        %v3840 = vpop.f32.mrb[0].mxu0
        %3841 = vmatprep.mubr.f32.mxu0 %v1810
        %3842 = vmatmul.mubr.f32.gmra.mrb[0].mxu0 %v1809
        %v3843 = vpop.f32.mrb[0].mxu0
        %v3844 = vadd.f32 %v3459, %v3843
        %v3845 = vpop.f32.mrb[0].mxu0
        %3846 = vmatprep.mubr.f32.mxu0 %v1812
        %3847 = vmatmul.mubr.f32.gmra.mrb[0].mxu0 %v1811
        %v3848 = vpop.f32.mrb[0].mxu0
        %v3849 = vadd.f32 %v3464, %v3848
        %v3850 = vpop.f32.mrb[0].mxu0
        %3851 = vmatprep.mubr.f32.mxu0 %v1814
        %3852 = vmatmul.mubr.f32.gmra.mrb[0].mxu0 %v1813
        %v3853 = vpop.f32.mrb[0].mxu0
        %v3854 = vadd.f32 %v3469, %v3853
        %v3855 = vpop.f32.mrb[0].mxu0
        %3856 = vmatprep.mubr.f32.mxu0 %v1816
        %3857 = vmatmul.mubr.f32.gmra.mrb[0].mxu0 %v1815
        %v3858 = vpop.f32.mrb[0].mxu0
        %v3859 = vadd.f32 %v3474, %v3858
        %v3860 = vpop.f32.mrb[0].mxu0
        %3861 = vmatprep.mubr.f32.mxu0 %v1818
        %3862 = vmatmul.mubr.f32.gmra.mrb[0].mxu0 %v1817
        %v3863 = vpop.f32.mrb[0].mxu0
        %v3864 = vadd.f32 %v3479, %v3863
        %v3865 = vpop.f32.mrb[0].mxu0
        %3866 = vmatprep.mubr.f32.mxu0 %v1820
        %3867 = vmatmul.mubr.f32.gmra.mrb[0].mxu0 %v1819
        %v3868 = vpop.f32.mrb[0].mxu0
        %v3869 = vadd.f32 %v3484, %v3868
        %v3870 = vpop.f32.mrb[0].mxu0
        %3871 = vmatprep.mubr.f32.mxu0 %v1822
        %3872 = vmatmul.mubr.f32.gmra.mrb[0].mxu0 %v1821
        %v3873 = vpop.f32.mrb[0].mxu0
        %v3874 = vadd.f32 %v3489, %v3873
        %v3875 = vpop.f32.mrb[0].mxu0
        %3876 = vmatprep.mubr.f32.mxu0 %v1824
        %3877 = vmatmul.mubr.f32.gmra.mrb[0].mxu0 %v1823
        %v3878 = vpop.f32.mrb[0].mxu0
        %v3879 = vadd.f32 %v3494, %v3878
        %v3880 = vpop.f32.mrb[0].mxu0
        %3881 = vmatprep.mubr.f32.mxu0 %v1826
        %3882 = vmatmul.mubr.f32.gmra.mrb[0].mxu0 %v1825
        %v3883 = vpop.f32.mrb[0].mxu0
        %v3884 = vadd.f32 %v3499, %v3883
        %v3885 = vpop.f32.mrb[0].mxu0
        %3886 = vmatprep.mubr.f32.mxu0 %v1828
        %3887 = vmatmul.mubr.f32.gmra.mrb[0].mxu0 %v1827
        %v3888 = vpop.f32.mrb[0].mxu0
        %v3889 = vadd.f32 %v3504, %v3888
        %v3890 = vpop.f32.mrb[0].mxu0
        %3891 = vmatprep.mubr.f32.mxu0 %v1830
        %3892 = vmatmul.mubr.f32.gmra.mrb[0].mxu0 %v1829
        %v3893 = vpop.f32.mrb[0].mxu0
        %v3894 = vadd.f32 %v3509, %v3893
        %v3895 = vpop.f32.mrb[0].mxu0
        %3896 = vmatprep.mubr.f32.mxu0 %v1832
        %3897 = vmatmul.mubr.f32.gmra.mrb[0].mxu0 %v1831
        %v3898 = vpop.f32.mrb[0].mxu0
        %v3899 = vadd.f32 %v3514, %v3898
        %v3900 = vpop.f32.mrb[0].mxu0
        %3901 = vmatprep.mubr.f32.mxu0 %v1834
        %3902 = vmatmul.mubr.f32.gmra.mrb[0].mxu0 %v1833
        %v3903 = vpop.f32.mrb[0].mxu0
        %v3904 = vadd.f32 %v3519, %v3903
        %v3905 = vpop.f32.mrb[0].mxu0
        %3906 = vmatprep.mubr.f32.mxu0 %v1836
        %3907 = vmatmul.mubr.f32.gmra.mrb[0].mxu0 %v1835
        %v3908 = vpop.f32.mrb[0].mxu0
        %v3909 = vadd.f32 %v3524, %v3908
        %v3910 = vpop.f32.mrb[0].mxu0
        %3911 = vmatprep.mubr.f32.mxu0 %v1838
        %3912 = vmatmul.mubr.f32.gmra.mrb[0].mxu0 %v1837
        %v3913 = vpop.f32.mrb[0].mxu0
        %v3914 = vadd.f32 %v3529, %v3913
        %v3915 = vpop.f32.mrb[0].mxu0
        %3916 = vmatprep.mubr.f32.mxu0 %v1840
        %3917 = vmatmul.mubr.f32.gmra.mrb[0].mxu0 %v1839
        %v3918 = vpop.f32.mrb[0].mxu0
        %v3919 = vadd.f32 %v3534, %v3918
        %v3920 = vpop.f32.mrb[0].mxu0
        %3921 = vmatprep.mubr.f32.mxu0 %v1842
        %3922 = vmatmul.mubr.f32.gmra.mrb[0].mxu0 %v1841
        %v3923 = vpop.f32.mrb[0].mxu0
        %v3924 = vadd.f32 %v3539, %v3923
        %v3925 = vpop.f32.mrb[0].mxu0
        %3926 = vmatprep.mubr.f32.mxu0 %v1844
        %3927 = vmatmul.mubr.f32.gmra.mrb[0].mxu0 %v1843
        %v3928 = vpop.f32.mrb[0].mxu0
        %v3929 = vadd.f32 %v3544, %v3928
        %v3930 = vpop.f32.mrb[0].mxu0
        %3931 = vmatprep.mubr.f32.mxu0 %v1846
        %3932 = vmatmul.mubr.f32.gmra.mrb[0].mxu0 %v1845
        %v3933 = vpop.f32.mrb[0].mxu0
        %v3934 = vadd.f32 %v3549, %v3933
        %v3935 = vpop.f32.mrb[0].mxu0
        %3936 = vmatprep.mubr.f32.mxu0 %v1848
        %3937 = vmatmul.mubr.f32.gmra.mrb[0].mxu0 %v1847
        %v3938 = vpop.f32.mrb[0].mxu0
        %v3939 = vadd.f32 %v3554, %v3938
        %v3940 = vpop.f32.mrb[0].mxu0
        %3941 = vmatprep.mubr.f32.mxu0 %v1850
        %3942 = vmatmul.mubr.f32.gmra.mrb[0].mxu0 %v1849
        %v3943 = vpop.f32.mrb[0].mxu0
        %v3944 = vadd.f32 %v3559, %v3943
        %v3945 = vpop.f32.mrb[0].mxu0
        %3946 = vmatprep.mubr.f32.mxu0 %v1852
        %3947 = vmatmul.mubr.f32.gmra.mrb[0].mxu0 %v1851
        %v3948 = vpop.f32.mrb[0].mxu0
        %v3949 = vadd.f32 %v3564, %v3948
        %v3950 = vpop.f32.mrb[0].mxu0
        %3951 = vmatprep.mubr.f32.mxu0 %v1854
        %3952 = vmatmul.mubr.f32.gmra.mrb[0].mxu0 %v1853
        %v3953 = vpop.f32.mrb[0].mxu0
        %v3954 = vadd.f32 %v3569, %v3953
        %v3955 = vpop.f32.mrb[0].mxu0
        %3956 = vmatprep.mubr.f32.mxu0 %v1856
        %3957 = vmatmul.mubr.f32.gmra.mrb[0].mxu0 %v1855
        %v3958 = vpop.f32.mrb[0].mxu0
        %v3959 = vadd.f32 %v3574, %v3958
        %v3960 = vpop.f32.mrb[0].mxu0
        %3961 = vmatprep.mubr.f32.mxu0 %v1858
        %3962 = vmatmul.mubr.f32.gmra.mrb[0].mxu0 %v1857
        %v3963 = vpop.f32.mrb[0].mxu0
        %v3964 = vadd.f32 %v3579, %v3963
        %v3965 = vpop.f32.mrb[0].mxu0
        %3966 = vdwg.mxu0
        %v3967 = vld [vmem:[%s11] sm:$0x1]
        %v3969 = vlaneseq
        %v3970 = vshrl.u32 %v3969, 7
        %v3971 = vsub.s32 0, %v3970
        %v3972 = vrot.slane %v3967, %v3971
        %v3974 = vadd.f32 %v3649, %v3972
        %v3975 = vadd.f32 %v3654, %v3972
        %v3976 = vadd.f32 %v3659, %v3972
        %v3977 = vadd.f32 %v3664, %v3972
        %v3978 = vadd.f32 %v3669, %v3972
        %v3979 = vadd.f32 %v3674, %v3972
        %v3980 = vadd.f32 %v3679, %v3972
        %v3981 = vadd.f32 %v3684, %v3972
        %v3982 = vadd.f32 %v3689, %v3972
        %v3983 = vadd.f32 %v3694, %v3972
        %v3984 = vadd.f32 %v3699, %v3972
        %v3985 = vadd.f32 %v3704, %v3972
        %v3986 = vadd.f32 %v3709, %v3972
        %v3987 = vadd.f32 %v3714, %v3972
        %v3988 = vadd.f32 %v3719, %v3972
        %v3989 = vadd.f32 %v3724, %v3972
        %v3990 = vadd.f32 %v3729, %v3972
        %v3991 = vadd.f32 %v3734, %v3972
        %v3992 = vadd.f32 %v3739, %v3972
        %v3993 = vadd.f32 %v3744, %v3972
        %v3994 = vadd.f32 %v3749, %v3972
        %v3995 = vadd.f32 %v3754, %v3972
        %v3996 = vadd.f32 %v3759, %v3972
        %v3997 = vadd.f32 %v3764, %v3972
        %v3998 = vadd.f32 %v3769, %v3972
        %v3999 = vadd.f32 %v3774, %v3972
        %v4000 = vadd.f32 %v3779, %v3972
        %v4001 = vadd.f32 %v3784, %v3972
        %v4002 = vadd.f32 %v3789, %v3972
        %v4003 = vadd.f32 %v3794, %v3972
        %v4004 = vadd.f32 %v3799, %v3972
        %v4005 = vadd.f32 %v3804, %v3972
        %v4006 = vadd.f32 %v3809, %v3972
        %v4007 = vadd.f32 %v3814, %v3972
        %v4008 = vadd.f32 %v3819, %v3972
        %v4009 = vadd.f32 %v3824, %v3972
        %v4010 = vadd.f32 %v3829, %v3972
        %v4011 = vadd.f32 %v3834, %v3972
        %v4012 = vadd.f32 %v3839, %v3972
        %v4013 = vadd.f32 %v3844, %v3972
        %v4014 = vadd.f32 %v3849, %v3972
        %v4015 = vadd.f32 %v3854, %v3972
        %v4016 = vadd.f32 %v3859, %v3972
        %v4017 = vadd.f32 %v3864, %v3972
        %v4018 = vadd.f32 %v3869, %v3972
        %v4019 = vadd.f32 %v3874, %v3972
        %v4020 = vadd.f32 %v3879, %v3972
        %v4021 = vadd.f32 %v3884, %v3972
        %v4022 = vadd.f32 %v3889, %v3972
        %v4023 = vadd.f32 %v3894, %v3972
        %v4024 = vadd.f32 %v3899, %v3972
        %v4025 = vadd.f32 %v3904, %v3972
        %v4026 = vadd.f32 %v3909, %v3972
        %v4027 = vadd.f32 %v3914, %v3972
        %v4028 = vadd.f32 %v3919, %v3972
        %v4029 = vadd.f32 %v3924, %v3972
        %v4030 = vadd.f32 %v3929, %v3972
        %v4031 = vadd.f32 %v3934, %v3972
        %v4032 = vadd.f32 %v3939, %v3972
        %v4033 = vadd.f32 %v3944, %v3972
        %v4034 = vadd.f32 %v3949, %v3972
        %v4035 = vadd.f32 %v3954, %v3972
        %v4036 = vadd.f32 %v3959, %v3972
        %v4037 = vadd.f32 %v3964, %v3972
        %4038 = vst [vmem:[%s518] sm:$0xff] %v3974
        %4039 = vst [vmem:[%s518 + $0x8] sm:$0xff] %v3975
        %4040 = vst [vmem:[%s518 + $0x10] sm:$0xff] %v3976
        %4041 = vst [vmem:[%s518 + $0x18] sm:$0xff] %v3977
        %4042 = vst [vmem:[%s518 + $0x20] sm:$0xff] %v3978
        %4043 = vst [vmem:[%s518 + $0x28] sm:$0xff] %v3979
        %4044 = vst [vmem:[%s518 + $0x30] sm:$0xff] %v3980
        %4045 = vst [vmem:[%s518 + $0x38] sm:$0xff] %v3981
        %4046 = vst [vmem:[%s518 + $0x40] sm:$0xff] %v3982
        %4047 = vst [vmem:[%s518 + $0x48] sm:$0xff] %v3983
        %4048 = vst [vmem:[%s518 + $0x50] sm:$0xff] %v3984
        %4049 = vst [vmem:[%s518 + $0x58] sm:$0xff] %v3985
        %4050 = vst [vmem:[%s518 + $0x60] sm:$0xff] %v3986
        %4051 = vst [vmem:[%s518 + $0x68] sm:$0xff] %v3987
        %4052 = vst [vmem:[%s518 + $0x70] sm:$0xff] %v3988
        %4053 = vst [vmem:[%s518 + $0x78] sm:$0xff] %v3989
        %4054 = vst [vmem:[%s518 + $0x80] sm:$0xff] %v3990
        %4055 = vst [vmem:[%s518 + $0x88] sm:$0xff] %v3991
        %4056 = vst [vmem:[%s518 + $0x90] sm:$0xff] %v3992
        %4057 = vst [vmem:[%s518 + $0x98] sm:$0xff] %v3993
        %4058 = vst [vmem:[%s518 + $0xa0] sm:$0xff] %v3994
        %4059 = vst [vmem:[%s518 + $0xa8] sm:$0xff] %v3995
        %4060 = vst [vmem:[%s518 + $0xb0] sm:$0xff] %v3996
        %4061 = vst [vmem:[%s518 + $0xb8] sm:$0xff] %v3997
        %4062 = vst [vmem:[%s518 + $0xc0] sm:$0xff] %v3998
        %4063 = vst [vmem:[%s518 + $0xc8] sm:$0xff] %v3999
        %4064 = vst [vmem:[%s518 + $0xd0] sm:$0xff] %v4000
        %4065 = vst [vmem:[%s518 + $0xd8] sm:$0xff] %v4001
        %4066 = vst [vmem:[%s518 + $0xe0] sm:$0xff] %v4002
        %4067 = vst [vmem:[%s518 + $0xe8] sm:$0xff] %v4003
        %4068 = vst [vmem:[%s518 + $0xf0] sm:$0xff] %v4004
        %4069 = vst [vmem:[%s518 + $0xf8] sm:$0xff] %v4005
        %4070 = vst [vmem:[%s518 + $0x100] sm:$0xff] %v4006
        %4071 = vst [vmem:[%s518 + $0x108] sm:$0xff] %v4007
        %4072 = vst [vmem:[%s518 + $0x110] sm:$0xff] %v4008
        %4073 = vst [vmem:[%s518 + $0x118] sm:$0xff] %v4009
        %4074 = vst [vmem:[%s518 + $0x120] sm:$0xff] %v4010
        %4075 = vst [vmem:[%s518 + $0x128] sm:$0xff] %v4011
        %4076 = vst [vmem:[%s518 + $0x130] sm:$0xff] %v4012
        %4077 = vst [vmem:[%s518 + $0x138] sm:$0xff] %v4013
        %4078 = vst [vmem:[%s518 + $0x140] sm:$0xff] %v4014
        %4079 = vst [vmem:[%s518 + $0x148] sm:$0xff] %v4015
        %4080 = vst [vmem:[%s518 + $0x150] sm:$0xff] %v4016
        %4081 = vst [vmem:[%s518 + $0x158] sm:$0xff] %v4017
        %4082 = vst [vmem:[%s518 + $0x160] sm:$0xff] %v4018
        %4083 = vst [vmem:[%s518 + $0x168] sm:$0xff] %v4019
        %4084 = vst [vmem:[%s518 + $0x170] sm:$0xff] %v4020
        %4085 = vst [vmem:[%s518 + $0x178] sm:$0xff] %v4021
        %4086 = vst [vmem:[%s518 + $0x180] sm:$0xff] %v4022
        %4087 = vst [vmem:[%s518 + $0x188] sm:$0xff] %v4023
        %4088 = vst [vmem:[%s518 + $0x190] sm:$0xff] %v4024
        %4089 = vst [vmem:[%s518 + $0x198] sm:$0xff] %v4025
        %4090 = vst [vmem:[%s518 + $0x1a0] sm:$0xff] %v4026
        %4091 = vst [vmem:[%s518 + $0x1a8] sm:$0xff] %v4027
        %4092 = vst [vmem:[%s518 + $0x1b0] sm:$0xff] %v4028
        %4093 = vst [vmem:[%s518 + $0x1b8] sm:$0xff] %v4029
        %4094 = vst [vmem:[%s518 + $0x1c0] sm:$0xff] %v4030
        %4095 = vst [vmem:[%s518 + $0x1c8] sm:$0xff] %v4031
        %4096 = vst [vmem:[%s518 + $0x1d0] sm:$0xff] %v4032
        %4097 = vst [vmem:[%s518 + $0x1d8] sm:$0xff] %v4033
        %4098 = vst [vmem:[%s518 + $0x1e0] sm:$0xff] %v4034
        %4099 = vst [vmem:[%s518 + $0x1e8] sm:$0xff] %v4035
        %4100 = vst [vmem:[%s518 + $0x1f0] sm:$0xff] %v4036
        %4101 = vst [vmem:[%s518 + $0x1f8] sm:$0xff] %v4037
        %s4102 = sand.u32 %s297, 1
        %s4103 = scalar_lea.sflag [#allocation4], %s4102
        %s4104 = sand.u32 %s297, 1
        %s4105 = smul.addr %s4104, 512
        %s4106 = scalar_lea.vmem [#allocation14], %s4105
        // Predicated region
        $region97: #{tpu_custom_call.1} parent=67 // pred_check
          %p4107 = pneg %p307
        $region98: #{tpu_custom_call.1} parent=67 // pred_check_branch
          %4109 = sbr.rel (%p4107) target = $region100
        $region99: #{tpu_custom_call.1} parent=67 // pred_region
          %s4110 = smul.u32 64, %s32
          %s4112 = ssub.s32 8192, 8192
          %4113 = vsyncadd %s4103, %s4112
          %s4114 = smul.addr %s4110, 128
          %s4115 = scalar_lea.hbm %s12, %s4114
          %s4116 = sshll.u32 %s4106, 4
          %s4117 = int_to_ptr.vmem [resolvable:$true] %s4116
          %4122 = dma.vmem_to_hbm [thread:$0]  %s4117, 8192, %s4115, %s4103, 128, 128, 8
        $region100: #{tpu_custom_call.1} parent=67 // pred_fallthru
          _
      $region68: #{tpu_custom_call.1} parent=5 // pred_fallthru
        _
      %p4123 = scmp.le.s32.totalorder 2, %s27
      // Predicated region
      $region101: #{tpu_custom_call.1} parent=5 // pred_check
        %p4124 = pneg %p4123
      $region102: #{tpu_custom_call.1} parent=5 // pred_check_branch
        %4126 = sbr.rel (%p4124) target = $region104
      $region103: #{tpu_custom_call.1} parent=5 // pred_region
        %s4127 = ssub.s32 %s27, 2
        // Predicated region
        $region105: #{tpu_custom_call.1} parent=103 // pred_check
          %p4128 = pneg %p313
        $region106: #{tpu_custom_call.1} parent=103 // pred_check_branch
          %4130 = sbr.rel (%p4128) target = $region108
        $region107: #{tpu_custom_call.1} parent=103 // pred_region
          %s4131 = sand.u32 %s298, 1
          %s4132 = scalar_lea.sflag [#allocation4], %s4131
          %s4133 = sand.u32 %s298, 1
          %s4134 = smul.addr %s4133, 512
          %s4135 = scalar_lea.vmem [#allocation14], %s4134
          %4136 = dma.done %s4132, 8192
        $region108: #{tpu_custom_call.1} parent=103 // pred_fallthru
          _
      $region104: #{tpu_custom_call.1} parent=5 // pred_fallthru
        _
    $region6: #{tpu_custom_call.1} parent=1 // loop_footer
      %s31 = sadd.s32 1, %s27
    $region7: #{tpu_custom_call.1} parent=1 // loop_footer_branch
      %26 = sbr.rel target = $region3
    $region8: #{tpu_custom_call.1} parent=1 // loop_exit
      _
    %4137 = vsyncpa [#allocation3], 1
    %s4138 = scalar_lea.sflag [#allocation3], 1
    %4139 = vsyncpa %s4138, 1
    %4140 = vsyncpa [#allocation6], 1
    %4141 = vsyncpa [#allocation9], 1
    %4142 = vsyncpa [#allocation12], 1
    %4143 = vsyncpa [#allocation4], 1
    %s4144 = scalar_lea.sflag [#allocation4], 1
    %4145 = vsyncpa %s4144, 1

</llo_original>
